<compile_context>
chip_gen: v7x
topology: tpu7x:2x2x1
jax: 0.10.0
libtpu: 0.0.40
codegen_flags: <defaults>
</compile_context>

<pallas_src>
import functools

import jax
import jax.numpy as jnp
from jax.experimental import pallas as pl
from jax.experimental.pallas import tpu as pltpu


def _round_up(x, m):
    return ((x + m - 1) // m) * m


def _vmem_capacity_bytes():
    try:
        cap = int(pltpu.get_tpu_info().vmem_capacity_bytes)
        if cap > 0:
            return cap
    except Exception:
        pass
    return 64 * 1024 * 1024  # v7x per-TC capacity: safe lower bound


def _choose_strip_h(H, WP, *, cin, c_bb, c_nk, c_hd, use_neck, in_bytes,
                    resident_bytes, budget):
    """Largest strip height TH dividing H such that the output block is
    lane-dense (TH*WP % 128 == 0, or TH == H: block == full array) and the
    estimated per-strip VMEM footprint fits the budget."""
    def cost(th):
        n = th * WP
        t = 4 * n * (2 * c_bb + (c_nk if use_neck else 0) + c_hd)  # f32 acts
        t += in_bytes * n * max(cin, 8)                            # input slab
        t += 2 * 4 * n * max(c_hd, 8)                              # 2x out blk
        return resident_bytes + t + (1 << 20)                      # weights+slack

    legal = [d for d in range(1, H + 1)
             if H % d == 0 and (d == H or (d * WP) % 128 == 0)]
    fits = [d for d in legal if cost(d) <= budget]
    if fits:
        return max(fits)
    return min(legal)


def _fused_kernel(*refs, tile_h, w_pad, n_strips, use_neck, cdtype):
    if use_neck:
        (x_ref, w_bb_ref, b_bb_ref, w_nk_ref, b_nk_ref,
         w_hd_ref, b_hd_ref, o_ref) = refs
    else:
        x_ref, w_bb_ref, b_bb_ref, w_hd_ref, b_hd_ref, o_ref = refs

    TH, WP = tile_h, w_pad
    n = TH * WP

    if n_strips == 1:
        base = 0                                          # fully static slices
    else:
        base = pl.multiple_of(pl.program_id(1) * n, 128)  # TH*WP % 128 == 0

    # 3x3 "same" conv as 9 accumulated (C_bb, Cin) x (Cin, n) matmuls.  Each
    # tap reads ONE contiguous slice of the channel-major flattened padded
    # image (kx shift folded into the slice start) -> no transposes, reshapes
    # or concats in-kernel.  Row-wrap garbage only lands in the 2 horizontal
    # pad columns, which the wrapper crops.
    acc = None
    for ky in range(3):
        for kx in range(3):
            slab = x_ref[0, :, pl.ds(base + ky * WP + kx, n)]      # (Cin, n)
            p = jax.lax.dot_general(
                w_bb_ref[ky * 3 + kx], slab,
                dimension_numbers=(((1,), (0,)), ((), ())),
                preferred_element_type=jnp.float32)                # (C_bb, n)
            acc = p if acc is None else acc + p

    h = jnp.maximum(acc + b_bb_ref[...], 0.0).astype(cdtype)

    if use_neck:                                          # 1x1 conv + ReLU
        h = jnp.dot(w_nk_ref[...], h, preferred_element_type=jnp.float32)
        h = jnp.maximum(h + b_nk_ref[...], 0.0).astype(cdtype)

    # Head 1x1 conv (no activation): lane-dense (C_head, n) store, already in
    # NCHW(-padded) layout.
    out = jnp.dot(w_hd_ref[...], h, preferred_element_type=jnp.float32)
    o_ref[...] = (out + b_hd_ref[...])[None].astype(o_ref.dtype)


class BaseModelPallas:
    def __init__(self, config, key, compute_dtype=jnp.bfloat16):
        in_ch = config.get("in_channels", 3)
        bb_ch = config["Backbone"]["out_channels"]
        self.use_neck = ("Neck" in config) and (config["Neck"] is not None)
        neck_ch = config["Neck"]["out_channels"] if self.use_neck else bb_ch
        head_ch = config["Head"]["out_channels"]
        self.in_ch, self.bb_ch, self.neck_ch, self.head_ch = (
            in_ch, bb_ch, neck_ch, head_ch)
        self.compute_dtype = compute_dtype
        self._vmem_cap = _vmem_capacity_bytes()
        self._buffered_ok = None  # pl.Buffered(1) support probed on first call

        k = jax.random.split(key, 6)
        s = 0.1
        # torch Conv2d weight (Cout, Cin, 3, 3) packed tap-major (9, Cout, Cin)
        # with tap index t = ky*3 + kx, i.e. w_bb[t, co, ci] == w[co, ci, ky, kx].
        w_bb = jax.random.normal(k[0], (bb_ch, in_ch, 3, 3), jnp.float32) * s
        self.w_bb = jnp.transpose(w_bb, (2, 3, 0, 1)).reshape(
            9, bb_ch, in_ch).astype(compute_dtype)
        self.b_bb = (jax.random.normal(k[1], (bb_ch,), jnp.float32) * s
                     ).reshape(bb_ch, 1)
        if self.use_neck:
            self.w_nk = (jax.random.normal(k[2], (neck_ch, bb_ch), jnp.float32)
                         * s).astype(compute_dtype)
            self.b_nk = (jax.random.normal(k[3], (neck_ch,), jnp.float32) * s
                         ).reshape(neck_ch, 1)
        self.w_hd = (jax.random.normal(k[4], (head_ch, neck_ch), jnp.float32)
                     * s).astype(compute_dtype)
        self.b_hd = (jax.random.normal(k[5], (head_ch,), jnp.float32) * s
                     ).reshape(head_ch, 1)

    def _forward(self, xflat, B, C, H, WP, Npad, TH, S, buffered):
        n_tile = TH * WP

        def spec(shape, imap):
            if buffered:
                # Blocks whose index never changes along the strip axis:
                # single buffering halves their VMEM footprint.
                return pl.BlockSpec(shape, imap, pipeline_mode=pl.Buffered(1))
            return pl.BlockSpec(shape, imap)

        in_specs = [spec((1, C, Npad), lambda b, s: (b, 0, 0)),
                    spec((9, self.bb_ch, C), lambda b, s: (0, 0, 0)),
                    spec((self.bb_ch, 1), lambda b, s: (0, 0))]
        args = [xflat, self.w_bb, self.b_bb]
        if self.use_neck:
            in_specs += [spec((self.neck_ch, self.bb_ch), lambda b, s: (0, 0)),
                         spec((self.neck_ch, 1), lambda b, s: (0, 0))]
            args += [self.w_nk, self.b_nk]
        in_specs += [spec((self.head_ch, self.neck_ch), lambda b, s: (0, 0)),
                     spec((self.head_ch, 1), lambda b, s: (0, 0))]
        args += [self.w_hd, self.b_hd]

        kernel = functools.partial(
            _fused_kernel, tile_h=TH, w_pad=WP, n_strips=S,
            use_neck=self.use_neck, cdtype=self.compute_dtype)

        # Megacore: shard batch when possible so both TensorCores never fetch
        # the same resident image; with B == 1 shard strips instead.
        dims = ("parallel", "arbitrary") if B > 1 else ("arbitrary", "parallel")

        return pl.pallas_call(
            kernel,
            out_shape=jax.ShapeDtypeStruct((B, self.head_ch, H * WP),
                                           jnp.float32),
            grid=(B, S),
            in_specs=in_specs,
            out_specs=pl.BlockSpec((1, self.head_ch, n_tile),
                                   lambda b, s: (b, 0, s)),
            compiler_params=pltpu.CompilerParams(
                dimension_semantics=dims,
                vmem_limit_bytes=(self._vmem_cap * 7) // 8),
        )(*args)

    def __call__(self, x_nchw):
        B, C, H, W = x_nchw.shape
        assert C == self.in_ch, (C, self.in_ch)
        WP, Hp = W + 2, H + 2
        # Flat spatial length: +2 so kx-shifted slices of the last strip stay
        # in bounds, rounded up to a lane multiple.
        Npad = _round_up(Hp * WP + 2, 128)

        in_bytes = jnp.dtype(self.compute_dtype).itemsize
        budget = (((self._vmem_cap * 7) // 8) * 3) // 4
        resident = 2 * max(C, 8) * Npad * in_bytes  # conservatively 2 buffers
        TH = _choose_strip_h(H, WP, cin=C, c_bb=self.bb_ch, c_nk=self.neck_ch,
                             c_hd=self.head_ch, use_neck=self.use_neck,
                             in_bytes=in_bytes, resident_bytes=resident,
                             budget=budget)
        S = H // TH

        # Input-side layout glue (smallest tensor only): channel-major, 1px
        # zero-padded, flattened over (H+2, W+2) -> lane-dense resident block,
        # every conv tap is a contiguous slice.  Cast to bf16 for the DMA.
        xp = jnp.pad(x_nchw, ((0, 0), (0, 0), (1, 1), (1, 1)))
        xflat = xp.reshape(B, C, Hp * WP)
        xflat = jnp.pad(xflat, ((0, 0), (0, 0), (0, Npad - Hp * WP)))
        xflat = xflat.astype(self.compute_dtype)

        run = functools.partial(self._forward, xflat, B, C, H, WP, Npad, TH, S)
        if self._buffered_ok is None:
            try:
                out = run(buffered=True)
                self._buffered_ok = True
            except Exception:
                self._buffered_ok = False
                out = run(buffered=False)
        else:
            out = run(buffered=self._buffered_ok)

        # Kernel writes lane-dense (C_head, TH*(W+2)) slabs; crop the 2
        # horizontal pad columns here (cheap: head-channel tensor only).
        return out.reshape(B, self.head_ch, H, WP)[:, :, :, :W]


def _reference(model, x_nchw):
    """Pure-JAX reference with the same bf16 quantization points."""
    f32 = jnp.float32
    cd = model.compute_dtype
    x = x_nchw.astype(cd).astype(f32)
    xp = jnp.pad(x, ((0, 0), (0, 0), (1, 1), (1, 1)))
    B, C, H, W = x_nchw.shape
    w_bb = model.w_bb.astype(f32)                     # (9, C_bb, Cin)
    acc = jnp.zeros((B, model.bb_ch, H, W), f32)
    for ky in range(3):
        for kx in range(3):
            tap = xp[:, :, ky:ky + H, kx:kx + W]
            acc = acc + jnp.einsum("oc,bchw->bohw", w_bb[ky * 3 + kx], tap)
    h = jnp.maximum(acc + model.b_bb[:, 0][None, :, None, None], 0.0)
    h = h.astype(cd).astype(f32)
    if model.use_neck:
        h = jnp.maximum(
            jnp.einsum("oc,bchw->bohw", model.w_nk.astype(f32), h)
            + model.b_nk[:, 0][None, :, None, None], 0.0)
        h = h.astype(cd).astype(f32)
    return (jnp.einsum("oc,bchw->bohw", model.w_hd.astype(f32), h)
            + model.b_hd[:, 0][None, :, None, None])


if __name__ == "__main__":
    config = {
        "model_type": "det",
        "in_channels": 4,
        "Backbone": {"out_channels": 16},
        "Neck": {"out_channels": 32},
        "Head": {"out_channels": 8},
    }
    root = jax.random.PRNGKey(0)
    wkey, xkey = jax.random.split(root)
    model = BaseModelPallas(config, wkey)

    x = jax.random.normal(xkey, (2, 4, 16, 16), jnp.float32)
    out = jax.block_until_ready(model(x))
    assert out.shape == (2, 8, 16, 16), out.shape

    ref = jax.block_until_ready(_reference(model, x))
    err = float(jnp.max(jnp.abs(out - ref)))
    assert err < 1e-2, err
    print("KERNEL_OK")
</pallas_src>

<mosaic_0001>
module attributes {stable_mosaic.version = 11 : i64} {
  func.func @_fused_kernel(%arg0: i32, %arg1: i32, %arg2: memref<1x4x384xbf16, #tpu.memory_space<vmem>>, %arg3: memref<9x16x4xbf16, #tpu.memory_space<vmem>>, %arg4: memref<16x1xf32, #tpu.memory_space<vmem>>, %arg5: memref<32x16xbf16, #tpu.memory_space<vmem>>, %arg6: memref<32x1xf32, #tpu.memory_space<vmem>>, %arg7: memref<8x32xbf16, #tpu.memory_space<vmem>>, %arg8: memref<8x1xf32, #tpu.memory_space<vmem>>, %arg9: memref<1x8x288xf32, #tpu.memory_space<vmem>>) attributes {dimension_semantics = [#tpu.dimension_semantics<parallel>, #tpu.dimension_semantics<arbitrary>], iteration_bounds = array<i64: 2, 1>, scalar_prefetch = 0 : i64, scratch_operands = 0 : i64, tpu.core_type = #tpu.core_type<tc>, window_params = [{pipeline_mode = #tpu.pipeline_mode<synchronous>, transform_indices = @transform_0, window_bounds = array<i64: 1, 4, 384>}, {pipeline_mode = #tpu.pipeline_mode<synchronous>, transform_indices = @transform_1, window_bounds = array<i64: 9, 16, 4>}, {pipeline_mode = #tpu.pipeline_mode<synchronous>, transform_indices = @transform_2, window_bounds = array<i64: 16, 1>}, {pipeline_mode = #tpu.pipeline_mode<synchronous>, transform_indices = @transform_3, window_bounds = array<i64: 32, 16>}, {pipeline_mode = #tpu.pipeline_mode<synchronous>, transform_indices = @transform_4, window_bounds = array<i64: 32, 1>}, {pipeline_mode = #tpu.pipeline_mode<synchronous>, transform_indices = @transform_5, window_bounds = array<i64: 8, 32>}, {pipeline_mode = #tpu.pipeline_mode<synchronous>, transform_indices = @transform_6, window_bounds = array<i64: 8, 1>}, {transform_indices = @transform_7, window_bounds = array<i64: 1, 8, 288>}]} {
    %c0 = arith.constant 0 : index
    %c0_0 = arith.constant 0 : index
    %c0_1 = arith.constant 0 : index
    %0 = vector.load %arg2[%c0, %c0_0, %c0_1] : memref<1x4x384xbf16, #tpu.memory_space<vmem>>, vector<1x4x288xbf16>
    %1 = vector.shape_cast %0 : vector<1x4x288xbf16> to vector<4x288xbf16>
    %c0_2 = arith.constant 0 : index
    %c0_3 = arith.constant 0 : index
    %c0_4 = arith.constant 0 : index
    %2 = vector.load %arg3[%c0_2, %c0_3, %c0_4] : memref<9x16x4xbf16, #tpu.memory_space<vmem>>, vector<1x16x4xbf16>
    %3 = vector.shape_cast %2 : vector<1x16x4xbf16> to vector<16x4xbf16>
    %cst = arith.constant dense<0.000000e+00> : vector<16x288xf32>
    %4 = tpu.matmul %3, %1, %cst {dimension_numbers = #tpu.dot_dimension_numbers<[1], [0], [0], [1], [0, 0, 1, 1], [], []>} : vector<16x4xbf16>, vector<4x288xbf16>, vector<16x288xf32> -> vector<16x288xf32>
    %c0_5 = arith.constant 0 : index
    %c0_6 = arith.constant 0 : index
    %c1 = arith.constant 1 : index
    %5 = vector.load %arg2[%c0_5, %c0_6, %c1] : memref<1x4x384xbf16, #tpu.memory_space<vmem>>, vector<1x4x288xbf16>
    %6 = vector.shape_cast %5 : vector<1x4x288xbf16> to vector<4x288xbf16>
    %c1_7 = arith.constant 1 : index
    %c0_8 = arith.constant 0 : index
    %c0_9 = arith.constant 0 : index
    %7 = vector.load %arg3[%c1_7, %c0_8, %c0_9] : memref<9x16x4xbf16, #tpu.memory_space<vmem>>, vector<1x16x4xbf16>
    %8 = vector.shape_cast %7 : vector<1x16x4xbf16> to vector<16x4xbf16>
    %cst_10 = arith.constant dense<0.000000e+00> : vector<16x288xf32>
    %9 = tpu.matmul %8, %6, %cst_10 {dimension_numbers = #tpu.dot_dimension_numbers<[1], [0], [0], [1], [0, 0, 1, 1], [], []>} : vector<16x4xbf16>, vector<4x288xbf16>, vector<16x288xf32> -> vector<16x288xf32>
    %10 = arith.addf %4, %9 : vector<16x288xf32>
    %c0_11 = arith.constant 0 : index
    %c0_12 = arith.constant 0 : index
    %c2 = arith.constant 2 : index
    %11 = vector.load %arg2[%c0_11, %c0_12, %c2] : memref<1x4x384xbf16, #tpu.memory_space<vmem>>, vector<1x4x288xbf16>
    %12 = vector.shape_cast %11 : vector<1x4x288xbf16> to vector<4x288xbf16>
    %c2_13 = arith.constant 2 : index
    %c0_14 = arith.constant 0 : index
    %c0_15 = arith.constant 0 : index
    %13 = vector.load %arg3[%c2_13, %c0_14, %c0_15] : memref<9x16x4xbf16, #tpu.memory_space<vmem>>, vector<1x16x4xbf16>
    %14 = vector.shape_cast %13 : vector<1x16x4xbf16> to vector<16x4xbf16>
    %cst_16 = arith.constant dense<0.000000e+00> : vector<16x288xf32>
    %15 = tpu.matmul %14, %12, %cst_16 {dimension_numbers = #tpu.dot_dimension_numbers<[1], [0], [0], [1], [0, 0, 1, 1], [], []>} : vector<16x4xbf16>, vector<4x288xbf16>, vector<16x288xf32> -> vector<16x288xf32>
    %16 = arith.addf %10, %15 : vector<16x288xf32>
    %c0_17 = arith.constant 0 : index
    %c0_18 = arith.constant 0 : index
    %c18 = arith.constant 18 : index
    %17 = vector.load %arg2[%c0_17, %c0_18, %c18] : memref<1x4x384xbf16, #tpu.memory_space<vmem>>, vector<1x4x288xbf16>
    %18 = vector.shape_cast %17 : vector<1x4x288xbf16> to vector<4x288xbf16>
    %c3 = arith.constant 3 : index
    %c0_19 = arith.constant 0 : index
    %c0_20 = arith.constant 0 : index
    %19 = vector.load %arg3[%c3, %c0_19, %c0_20] : memref<9x16x4xbf16, #tpu.memory_space<vmem>>, vector<1x16x4xbf16>
    %20 = vector.shape_cast %19 : vector<1x16x4xbf16> to vector<16x4xbf16>
    %cst_21 = arith.constant dense<0.000000e+00> : vector<16x288xf32>
    %21 = tpu.matmul %20, %18, %cst_21 {dimension_numbers = #tpu.dot_dimension_numbers<[1], [0], [0], [1], [0, 0, 1, 1], [], []>} : vector<16x4xbf16>, vector<4x288xbf16>, vector<16x288xf32> -> vector<16x288xf32>
    %22 = arith.addf %16, %21 : vector<16x288xf32>
    %c0_22 = arith.constant 0 : index
    %c0_23 = arith.constant 0 : index
    %c19 = arith.constant 19 : index
    %23 = vector.load %arg2[%c0_22, %c0_23, %c19] : memref<1x4x384xbf16, #tpu.memory_space<vmem>>, vector<1x4x288xbf16>
    %24 = vector.shape_cast %23 : vector<1x4x288xbf16> to vector<4x288xbf16>
    %c4 = arith.constant 4 : index
    %c0_24 = arith.constant 0 : index
    %c0_25 = arith.constant 0 : index
    %25 = vector.load %arg3[%c4, %c0_24, %c0_25] : memref<9x16x4xbf16, #tpu.memory_space<vmem>>, vector<1x16x4xbf16>
    %26 = vector.shape_cast %25 : vector<1x16x4xbf16> to vector<16x4xbf16>
    %cst_26 = arith.constant dense<0.000000e+00> : vector<16x288xf32>
    %27 = tpu.matmul %26, %24, %cst_26 {dimension_numbers = #tpu.dot_dimension_numbers<[1], [0], [0], [1], [0, 0, 1, 1], [], []>} : vector<16x4xbf16>, vector<4x288xbf16>, vector<16x288xf32> -> vector<16x288xf32>
    %28 = arith.addf %22, %27 : vector<16x288xf32>
    %c0_27 = arith.constant 0 : index
    %c0_28 = arith.constant 0 : index
    %c20 = arith.constant 20 : index
    %29 = vector.load %arg2[%c0_27, %c0_28, %c20] : memref<1x4x384xbf16, #tpu.memory_space<vmem>>, vector<1x4x288xbf16>
    %30 = vector.shape_cast %29 : vector<1x4x288xbf16> to vector<4x288xbf16>
    %c5 = arith.constant 5 : index
    %c0_29 = arith.constant 0 : index
    %c0_30 = arith.constant 0 : index
    %31 = vector.load %arg3[%c5, %c0_29, %c0_30] : memref<9x16x4xbf16, #tpu.memory_space<vmem>>, vector<1x16x4xbf16>
    %32 = vector.shape_cast %31 : vector<1x16x4xbf16> to vector<16x4xbf16>
    %cst_31 = arith.constant dense<0.000000e+00> : vector<16x288xf32>
    %33 = tpu.matmul %32, %30, %cst_31 {dimension_numbers = #tpu.dot_dimension_numbers<[1], [0], [0], [1], [0, 0, 1, 1], [], []>} : vector<16x4xbf16>, vector<4x288xbf16>, vector<16x288xf32> -> vector<16x288xf32>
    %34 = arith.addf %28, %33 : vector<16x288xf32>
    %c0_32 = arith.constant 0 : index
    %c0_33 = arith.constant 0 : index
    %c36 = arith.constant 36 : index
    %35 = vector.load %arg2[%c0_32, %c0_33, %c36] : memref<1x4x384xbf16, #tpu.memory_space<vmem>>, vector<1x4x288xbf16>
    %36 = vector.shape_cast %35 : vector<1x4x288xbf16> to vector<4x288xbf16>
    %c6 = arith.constant 6 : index
    %c0_34 = arith.constant 0 : index
    %c0_35 = arith.constant 0 : index
    %37 = vector.load %arg3[%c6, %c0_34, %c0_35] : memref<9x16x4xbf16, #tpu.memory_space<vmem>>, vector<1x16x4xbf16>
    %38 = vector.shape_cast %37 : vector<1x16x4xbf16> to vector<16x4xbf16>
    %cst_36 = arith.constant dense<0.000000e+00> : vector<16x288xf32>
    %39 = tpu.matmul %38, %36, %cst_36 {dimension_numbers = #tpu.dot_dimension_numbers<[1], [0], [0], [1], [0, 0, 1, 1], [], []>} : vector<16x4xbf16>, vector<4x288xbf16>, vector<16x288xf32> -> vector<16x288xf32>
    %40 = arith.addf %34, %39 : vector<16x288xf32>
    %c0_37 = arith.constant 0 : index
    %c0_38 = arith.constant 0 : index
    %c37 = arith.constant 37 : index
    %41 = vector.load %arg2[%c0_37, %c0_38, %c37] : memref<1x4x384xbf16, #tpu.memory_space<vmem>>, vector<1x4x288xbf16>
    %42 = vector.shape_cast %41 : vector<1x4x288xbf16> to vector<4x288xbf16>
    %c7 = arith.constant 7 : index
    %c0_39 = arith.constant 0 : index
    %c0_40 = arith.constant 0 : index
    %43 = vector.load %arg3[%c7, %c0_39, %c0_40] : memref<9x16x4xbf16, #tpu.memory_space<vmem>>, vector<1x16x4xbf16>
    %44 = vector.shape_cast %43 : vector<1x16x4xbf16> to vector<16x4xbf16>
    %cst_41 = arith.constant dense<0.000000e+00> : vector<16x288xf32>
    %45 = tpu.matmul %44, %42, %cst_41 {dimension_numbers = #tpu.dot_dimension_numbers<[1], [0], [0], [1], [0, 0, 1, 1], [], []>} : vector<16x4xbf16>, vector<4x288xbf16>, vector<16x288xf32> -> vector<16x288xf32>
    %46 = arith.addf %40, %45 : vector<16x288xf32>
    %c0_42 = arith.constant 0 : index
    %c0_43 = arith.constant 0 : index
    %c38 = arith.constant 38 : index
    %47 = vector.load %arg2[%c0_42, %c0_43, %c38] : memref<1x4x384xbf16, #tpu.memory_space<vmem>>, vector<1x4x288xbf16>
    %48 = vector.shape_cast %47 : vector<1x4x288xbf16> to vector<4x288xbf16>
    %c8 = arith.constant 8 : index
    %c0_44 = arith.constant 0 : index
    %c0_45 = arith.constant 0 : index
    %49 = vector.load %arg3[%c8, %c0_44, %c0_45] : memref<9x16x4xbf16, #tpu.memory_space<vmem>>, vector<1x16x4xbf16>
    %50 = vector.shape_cast %49 : vector<1x16x4xbf16> to vector<16x4xbf16>
    %cst_46 = arith.constant dense<0.000000e+00> : vector<16x288xf32>
    %51 = tpu.matmul %50, %48, %cst_46 {dimension_numbers = #tpu.dot_dimension_numbers<[1], [0], [0], [1], [0, 0, 1, 1], [], []>} : vector<16x4xbf16>, vector<4x288xbf16>, vector<16x288xf32> -> vector<16x288xf32>
    %52 = arith.addf %46, %51 : vector<16x288xf32>
    %c0_47 = arith.constant 0 : index
    %c0_48 = arith.constant 0 : index
    %53 = vector.load %arg4[%c0_47, %c0_48] : memref<16x1xf32, #tpu.memory_space<vmem>>, vector<16x1xf32>
    %54 = vector.broadcast %53 : vector<16x1xf32> to vector<16x288xf32>
    %55 = arith.addf %52, %54 : vector<16x288xf32>
    %cst_49 = arith.constant 0.000000e+00 : f32
    %56 = vector.broadcast %cst_49 : f32 to vector<16x288xf32>
    %57 = arith.maximumf %55, %56 : vector<16x288xf32>
    %58 = arith.truncf %57 : vector<16x288xf32> to vector<16x288xbf16>
    %c0_50 = arith.constant 0 : index
    %c0_51 = arith.constant 0 : index
    %59 = vector.load %arg5[%c0_50, %c0_51] : memref<32x16xbf16, #tpu.memory_space<vmem>>, vector<32x16xbf16>
    %cst_52 = arith.constant dense<0.000000e+00> : vector<32x288xf32>
    %60 = tpu.matmul %59, %58, %cst_52 {dimension_numbers = #tpu.dot_dimension_numbers<[1], [0], [0], [1], [0, 0, 1, 1], [], []>} : vector<32x16xbf16>, vector<16x288xbf16>, vector<32x288xf32> -> vector<32x288xf32>
    %c0_53 = arith.constant 0 : index
    %c0_54 = arith.constant 0 : index
    %61 = vector.load %arg6[%c0_53, %c0_54] : memref<32x1xf32, #tpu.memory_space<vmem>>, vector<32x1xf32>
    %62 = vector.broadcast %61 : vector<32x1xf32> to vector<32x288xf32>
    %63 = arith.addf %60, %62 : vector<32x288xf32>
    %cst_55 = arith.constant 0.000000e+00 : f32
    %64 = vector.broadcast %cst_55 : f32 to vector<32x288xf32>
    %65 = arith.maximumf %63, %64 : vector<32x288xf32>
    %66 = arith.truncf %65 : vector<32x288xf32> to vector<32x288xbf16>
    %c0_56 = arith.constant 0 : index
    %c0_57 = arith.constant 0 : index
    %67 = vector.load %arg7[%c0_56, %c0_57] : memref<8x32xbf16, #tpu.memory_space<vmem>>, vector<8x32xbf16>
    %cst_58 = arith.constant dense<0.000000e+00> : vector<8x288xf32>
    %68 = tpu.matmul %67, %66, %cst_58 {dimension_numbers = #tpu.dot_dimension_numbers<[1], [0], [0], [1], [0, 0, 1, 1], [], []>} : vector<8x32xbf16>, vector<32x288xbf16>, vector<8x288xf32> -> vector<8x288xf32>
    %c0_59 = arith.constant 0 : index
    %c0_60 = arith.constant 0 : index
    %69 = vector.load %arg8[%c0_59, %c0_60] : memref<8x1xf32, #tpu.memory_space<vmem>>, vector<8x1xf32>
    %70 = vector.broadcast %69 : vector<8x1xf32> to vector<8x288xf32>
    %71 = arith.addf %68, %70 : vector<8x288xf32>
    %72 = vector.shape_cast %71 : vector<8x288xf32> to vector<1x8x288xf32>
    %c0_61 = arith.constant 0 : index
    %c0_62 = arith.constant 0 : index
    %c0_63 = arith.constant 0 : index
    %73 = vector.load %arg9[%c0_61, %c0_62, %c0_63] : memref<1x8x288xf32, #tpu.memory_space<vmem>>, vector<1x8x288xf32>
    tpu.vector_store %arg9[%c0_61, %c0_62, %c0_63], %72 {strides = array<i32>} : memref<1x8x288xf32, #tpu.memory_space<vmem>>, vector<1x8x288xf32>,
    return
  }
  func.func @transform_0(%arg0: i32, %arg1: i32) -> (i32, i32, i32) {
    %c0_i32 = arith.constant 0 : i32
    %c0_i32_0 = arith.constant 0 : i32
    %c0_i32_1 = arith.constant 0 : i32
    return %arg0, %c0_i32, %c0_i32_0 : i32, i32, i32
  }
  func.func @transform_1(%arg0: i32, %arg1: i32) -> (i32, i32, i32) {
    %c0_i32 = arith.constant 0 : i32
    %c0_i32_0 = arith.constant 0 : i32
    %c0_i32_1 = arith.constant 0 : i32
    %c0_i32_2 = arith.constant 0 : i32
    return %c0_i32, %c0_i32_0, %c0_i32_1 : i32, i32, i32
  }
  func.func @transform_2(%arg0: i32, %arg1: i32) -> (i32, i32) {
    %c0_i32 = arith.constant 0 : i32
    %c0_i32_0 = arith.constant 0 : i32
    %c0_i32_1 = arith.constant 0 : i32
    return %c0_i32, %c0_i32_0 : i32, i32
  }
  func.func @transform_3(%arg0: i32, %arg1: i32) -> (i32, i32) {
    %c0_i32 = arith.constant 0 : i32
    %c0_i32_0 = arith.constant 0 : i32
    %c0_i32_1 = arith.constant 0 : i32
    return %c0_i32, %c0_i32_0 : i32, i32
  }
  func.func @transform_4(%arg0: i32, %arg1: i32) -> (i32, i32) {
    %c0_i32 = arith.constant 0 : i32
    %c0_i32_0 = arith.constant 0 : i32
    %c0_i32_1 = arith.constant 0 : i32
    return %c0_i32, %c0_i32_0 : i32, i32
  }
  func.func @transform_5(%arg0: i32, %arg1: i32) -> (i32, i32) {
    %c0_i32 = arith.constant 0 : i32
    %c0_i32_0 = arith.constant 0 : i32
    %c0_i32_1 = arith.constant 0 : i32
    return %c0_i32, %c0_i32_0 : i32, i32
  }
  func.func @transform_6(%arg0: i32, %arg1: i32) -> (i32, i32) {
    %c0_i32 = arith.constant 0 : i32
    %c0_i32_0 = arith.constant 0 : i32
    %c0_i32_1 = arith.constant 0 : i32
    return %c0_i32, %c0_i32_0 : i32, i32
  }
  func.func @transform_7(%arg0: i32, %arg1: i32) -> (i32, i32, i32) {
    %c0_i32 = arith.constant 0 : i32
    %c0_i32_0 = arith.constant 0 : i32
    return %arg0, %c0_i32, %arg1 : i32, i32, i32
  }
}

module attributes {stable_mosaic.version = 11 : i64} {
  func.func @_fused_kernel(%arg0: i32, %arg1: i32, %arg2: memref<1x4x384xbf16, #tpu.memory_space<vmem>>, %arg3: memref<9x16x4xbf16, #tpu.memory_space<vmem>>, %arg4: memref<16x1xf32, #tpu.memory_space<vmem>>, %arg5: memref<32x16xbf16, #tpu.memory_space<vmem>>, %arg6: memref<32x1xf32, #tpu.memory_space<vmem>>, %arg7: memref<8x32xbf16, #tpu.memory_space<vmem>>, %arg8: memref<8x1xf32, #tpu.memory_space<vmem>>, %arg9: memref<1x8x288xf32, #tpu.memory_space<vmem>>) attributes {dimension_semantics = [#tpu.dimension_semantics<parallel>, #tpu.dimension_semantics<arbitrary>], iteration_bounds = array<i64: 2, 1>, scalar_prefetch = 0 : i64, scratch_operands = 0 : i64, tpu.core_type = #tpu.core_type<tc>, window_params = [{transform_indices = @transform_0, window_bounds = array<i64: 1, 4, 384>}, {pipeline_mode = #tpu.pipeline_mode<synchronous>, transform_indices = @transform_1, window_bounds = array<i64: 9, 16, 4>}, {pipeline_mode = #tpu.pipeline_mode<synchronous>, transform_indices = @transform_2, window_bounds = array<i64: 16, 1>}, {pipeline_mode = #tpu.pipeline_mode<synchronous>, transform_indices = @transform_3, window_bounds = array<i64: 32, 16>}, {pipeline_mode = #tpu.pipeline_mode<synchronous>, transform_indices = @transform_4, window_bounds = array<i64: 32, 1>}, {pipeline_mode = #tpu.pipeline_mode<synchronous>, transform_indices = @transform_5, window_bounds = array<i64: 8, 32>}, {pipeline_mode = #tpu.pipeline_mode<synchronous>, transform_indices = @transform_6, window_bounds = array<i64: 8, 1>}, {transform_indices = @transform_7, window_bounds = array<i64: 1, 8, 288>}]} {
    %c0 = arith.constant 0 : index
    %c0_0 = arith.constant 0 : index
    %c0_1 = arith.constant 0 : index
    %0 = vector.load %arg2[%c0, %c0_0, %c0_1] : memref<1x4x384xbf16, #tpu.memory_space<vmem>>, vector<1x4x288xbf16>
    %1 = vector.shape_cast %0 : vector<1x4x288xbf16> to vector<4x288xbf16>
    %c0_2 = arith.constant 0 : index
    %c0_3 = arith.constant 0 : index
    %c0_4 = arith.constant 0 : index
    %2 = vector.load %arg3[%c0_2, %c0_3, %c0_4] : memref<9x16x4xbf16, #tpu.memory_space<vmem>>, vector<1x16x4xbf16>
    %3 = vector.shape_cast %2 : vector<1x16x4xbf16> to vector<16x4xbf16>
    %cst = arith.constant dense<0.000000e+00> : vector<16x288xf32>
    %4 = tpu.matmul %3, %1, %cst {dimension_numbers = #tpu.dot_dimension_numbers<[1], [0], [0], [1], [0, 0, 1, 1], [], []>} : vector<16x4xbf16>, vector<4x288xbf16>, vector<16x288xf32> -> vector<16x288xf32>
    %c0_5 = arith.constant 0 : index
    %c0_6 = arith.constant 0 : index
    %c1 = arith.constant 1 : index
    %5 = vector.load %arg2[%c0_5, %c0_6, %c1] : memref<1x4x384xbf16, #tpu.memory_space<vmem>>, vector<1x4x288xbf16>
    %6 = vector.shape_cast %5 : vector<1x4x288xbf16> to vector<4x288xbf16>
    %c1_7 = arith.constant 1 : index
    %c0_8 = arith.constant 0 : index
    %c0_9 = arith.constant 0 : index
    %7 = vector.load %arg3[%c1_7, %c0_8, %c0_9] : memref<9x16x4xbf16, #tpu.memory_space<vmem>>, vector<1x16x4xbf16>
    %8 = vector.shape_cast %7 : vector<1x16x4xbf16> to vector<16x4xbf16>
    %cst_10 = arith.constant dense<0.000000e+00> : vector<16x288xf32>
    %9 = tpu.matmul %8, %6, %cst_10 {dimension_numbers = #tpu.dot_dimension_numbers<[1], [0], [0], [1], [0, 0, 1, 1], [], []>} : vector<16x4xbf16>, vector<4x288xbf16>, vector<16x288xf32> -> vector<16x288xf32>
    %10 = arith.addf %4, %9 : vector<16x288xf32>
    %c0_11 = arith.constant 0 : index
    %c0_12 = arith.constant 0 : index
    %c2 = arith.constant 2 : index
    %11 = vector.load %arg2[%c0_11, %c0_12, %c2] : memref<1x4x384xbf16, #tpu.memory_space<vmem>>, vector<1x4x288xbf16>
    %12 = vector.shape_cast %11 : vector<1x4x288xbf16> to vector<4x288xbf16>
    %c2_13 = arith.constant 2 : index
    %c0_14 = arith.constant 0 : index
    %c0_15 = arith.constant 0 : index
    %13 = vector.load %arg3[%c2_13, %c0_14, %c0_15] : memref<9x16x4xbf16, #tpu.memory_space<vmem>>, vector<1x16x4xbf16>
    %14 = vector.shape_cast %13 : vector<1x16x4xbf16> to vector<16x4xbf16>
    %cst_16 = arith.constant dense<0.000000e+00> : vector<16x288xf32>
    %15 = tpu.matmul %14, %12, %cst_16 {dimension_numbers = #tpu.dot_dimension_numbers<[1], [0], [0], [1], [0, 0, 1, 1], [], []>} : vector<16x4xbf16>, vector<4x288xbf16>, vector<16x288xf32> -> vector<16x288xf32>
    %16 = arith.addf %10, %15 : vector<16x288xf32>
    %c0_17 = arith.constant 0 : index
    %c0_18 = arith.constant 0 : index
    %c18 = arith.constant 18 : index
    %17 = vector.load %arg2[%c0_17, %c0_18, %c18] : memref<1x4x384xbf16, #tpu.memory_space<vmem>>, vector<1x4x288xbf16>
    %18 = vector.shape_cast %17 : vector<1x4x288xbf16> to vector<4x288xbf16>
    %c3 = arith.constant 3 : index
    %c0_19 = arith.constant 0 : index
    %c0_20 = arith.constant 0 : index
    %19 = vector.load %arg3[%c3, %c0_19, %c0_20] : memref<9x16x4xbf16, #tpu.memory_space<vmem>>, vector<1x16x4xbf16>
    %20 = vector.shape_cast %19 : vector<1x16x4xbf16> to vector<16x4xbf16>
    %cst_21 = arith.constant dense<0.000000e+00> : vector<16x288xf32>
    %21 = tpu.matmul %20, %18, %cst_21 {dimension_numbers = #tpu.dot_dimension_numbers<[1], [0], [0], [1], [0, 0, 1, 1], [], []>} : vector<16x4xbf16>, vector<4x288xbf16>, vector<16x288xf32> -> vector<16x288xf32>
    %22 = arith.addf %16, %21 : vector<16x288xf32>
    %c0_22 = arith.constant 0 : index
    %c0_23 = arith.constant 0 : index
    %c19 = arith.constant 19 : index
    %23 = vector.load %arg2[%c0_22, %c0_23, %c19] : memref<1x4x384xbf16, #tpu.memory_space<vmem>>, vector<1x4x288xbf16>
    %24 = vector.shape_cast %23 : vector<1x4x288xbf16> to vector<4x288xbf16>
    %c4 = arith.constant 4 : index
    %c0_24 = arith.constant 0 : index
    %c0_25 = arith.constant 0 : index
    %25 = vector.load %arg3[%c4, %c0_24, %c0_25] : memref<9x16x4xbf16, #tpu.memory_space<vmem>>, vector<1x16x4xbf16>
    %26 = vector.shape_cast %25 : vector<1x16x4xbf16> to vector<16x4xbf16>
    %cst_26 = arith.constant dense<0.000000e+00> : vector<16x288xf32>
    %27 = tpu.matmul %26, %24, %cst_26 {dimension_numbers = #tpu.dot_dimension_numbers<[1], [0], [0], [1], [0, 0, 1, 1], [], []>} : vector<16x4xbf16>, vector<4x288xbf16>, vector<16x288xf32> -> vector<16x288xf32>
    %28 = arith.addf %22, %27 : vector<16x288xf32>
    %c0_27 = arith.constant 0 : index
    %c0_28 = arith.constant 0 : index
    %c20 = arith.constant 20 : index
    %29 = vector.load %arg2[%c0_27, %c0_28, %c20] : memref<1x4x384xbf16, #tpu.memory_space<vmem>>, vector<1x4x288xbf16>
    %30 = vector.shape_cast %29 : vector<1x4x288xbf16> to vector<4x288xbf16>
    %c5 = arith.constant 5 : index
    %c0_29 = arith.constant 0 : index
    %c0_30 = arith.constant 0 : index
    %31 = vector.load %arg3[%c5, %c0_29, %c0_30] : memref<9x16x4xbf16, #tpu.memory_space<vmem>>, vector<1x16x4xbf16>
    %32 = vector.shape_cast %31 : vector<1x16x4xbf16> to vector<16x4xbf16>
    %cst_31 = arith.constant dense<0.000000e+00> : vector<16x288xf32>
    %33 = tpu.matmul %32, %30, %cst_31 {dimension_numbers = #tpu.dot_dimension_numbers<[1], [0], [0], [1], [0, 0, 1, 1], [], []>} : vector<16x4xbf16>, vector<4x288xbf16>, vector<16x288xf32> -> vector<16x288xf32>
    %34 = arith.addf %28, %33 : vector<16x288xf32>
    %c0_32 = arith.constant 0 : index
    %c0_33 = arith.constant 0 : index
    %c36 = arith.constant 36 : index
    %35 = vector.load %arg2[%c0_32, %c0_33, %c36] : memref<1x4x384xbf16, #tpu.memory_space<vmem>>, vector<1x4x288xbf16>
    %36 = vector.shape_cast %35 : vector<1x4x288xbf16> to vector<4x288xbf16>
    %c6 = arith.constant 6 : index
    %c0_34 = arith.constant 0 : index
    %c0_35 = arith.constant 0 : index
    %37 = vector.load %arg3[%c6, %c0_34, %c0_35] : memref<9x16x4xbf16, #tpu.memory_space<vmem>>, vector<1x16x4xbf16>
    %38 = vector.shape_cast %37 : vector<1x16x4xbf16> to vector<16x4xbf16>
    %cst_36 = arith.constant dense<0.000000e+00> : vector<16x288xf32>
    %39 = tpu.matmul %38, %36, %cst_36 {dimension_numbers = #tpu.dot_dimension_numbers<[1], [0], [0], [1], [0, 0, 1, 1], [], []>} : vector<16x4xbf16>, vector<4x288xbf16>, vector<16x288xf32> -> vector<16x288xf32>
    %40 = arith.addf %34, %39 : vector<16x288xf32>
    %c0_37 = arith.constant 0 : index
    %c0_38 = arith.constant 0 : index
    %c37 = arith.constant 37 : index
    %41 = vector.load %arg2[%c0_37, %c0_38, %c37] : memref<1x4x384xbf16, #tpu.memory_space<vmem>>, vector<1x4x288xbf16>
    %42 = vector.shape_cast %41 : vector<1x4x288xbf16> to vector<4x288xbf16>
    %c7 = arith.constant 7 : index
    %c0_39 = arith.constant 0 : index
    %c0_40 = arith.constant 0 : index
    %43 = vector.load %arg3[%c7, %c0_39, %c0_40] : memref<9x16x4xbf16, #tpu.memory_space<vmem>>, vector<1x16x4xbf16>
    %44 = vector.shape_cast %43 : vector<1x16x4xbf16> to vector<16x4xbf16>
    %cst_41 = arith.constant dense<0.000000e+00> : vector<16x288xf32>
    %45 = tpu.matmul %44, %42, %cst_41 {dimension_numbers = #tpu.dot_dimension_numbers<[1], [0], [0], [1], [0, 0, 1, 1], [], []>} : vector<16x4xbf16>, vector<4x288xbf16>, vector<16x288xf32> -> vector<16x288xf32>
    %46 = arith.addf %40, %45 : vector<16x288xf32>
    %c0_42 = arith.constant 0 : index
    %c0_43 = arith.constant 0 : index
    %c38 = arith.constant 38 : index
    %47 = vector.load %arg2[%c0_42, %c0_43, %c38] : memref<1x4x384xbf16, #tpu.memory_space<vmem>>, vector<1x4x288xbf16>
    %48 = vector.shape_cast %47 : vector<1x4x288xbf16> to vector<4x288xbf16>
    %c8 = arith.constant 8 : index
    %c0_44 = arith.constant 0 : index
    %c0_45 = arith.constant 0 : index
    %49 = vector.load %arg3[%c8, %c0_44, %c0_45] : memref<9x16x4xbf16, #tpu.memory_space<vmem>>, vector<1x16x4xbf16>
    %50 = vector.shape_cast %49 : vector<1x16x4xbf16> to vector<16x4xbf16>
    %cst_46 = arith.constant dense<0.000000e+00> : vector<16x288xf32>
    %51 = tpu.matmul %50, %48, %cst_46 {dimension_numbers = #tpu.dot_dimension_numbers<[1], [0], [0], [1], [0, 0, 1, 1], [], []>} : vector<16x4xbf16>, vector<4x288xbf16>, vector<16x288xf32> -> vector<16x288xf32>
    %52 = arith.addf %46, %51 : vector<16x288xf32>
    %c0_47 = arith.constant 0 : index
    %c0_48 = arith.constant 0 : index
    %53 = vector.load %arg4[%c0_47, %c0_48] : memref<16x1xf32, #tpu.memory_space<vmem>>, vector<16x1xf32>
    %54 = vector.broadcast %53 : vector<16x1xf32> to vector<16x288xf32>
    %55 = arith.addf %52, %54 : vector<16x288xf32>
    %cst_49 = arith.constant 0.000000e+00 : f32
    %56 = vector.broadcast %cst_49 : f32 to vector<16x288xf32>
    %57 = arith.maximumf %55, %56 : vector<16x288xf32>
    %58 = arith.truncf %57 : vector<16x288xf32> to vector<16x288xbf16>
    %c0_50 = arith.constant 0 : index
    %c0_51 = arith.constant 0 : index
    %59 = vector.load %arg5[%c0_50, %c0_51] : memref<32x16xbf16, #tpu.memory_space<vmem>>, vector<32x16xbf16>
    %cst_52 = arith.constant dense<0.000000e+00> : vector<32x288xf32>
    %60 = tpu.matmul %59, %58, %cst_52 {dimension_numbers = #tpu.dot_dimension_numbers<[1], [0], [0], [1], [0, 0, 1, 1], [], []>} : vector<32x16xbf16>, vector<16x288xbf16>, vector<32x288xf32> -> vector<32x288xf32>
    %c0_53 = arith.constant 0 : index
    %c0_54 = arith.constant 0 : index
    %61 = vector.load %arg6[%c0_53, %c0_54] : memref<32x1xf32, #tpu.memory_space<vmem>>, vector<32x1xf32>
    %62 = vector.broadcast %61 : vector<32x1xf32> to vector<32x288xf32>
    %63 = arith.addf %60, %62 : vector<32x288xf32>
    %cst_55 = arith.constant 0.000000e+00 : f32
    %64 = vector.broadcast %cst_55 : f32 to vector<32x288xf32>
    %65 = arith.maximumf %63, %64 : vector<32x288xf32>
    %66 = arith.truncf %65 : vector<32x288xf32> to vector<32x288xbf16>
    %c0_56 = arith.constant 0 : index
    %c0_57 = arith.constant 0 : index
    %67 = vector.load %arg7[%c0_56, %c0_57] : memref<8x32xbf16, #tpu.memory_space<vmem>>, vector<8x32xbf16>
    %cst_58 = arith.constant dense<0.000000e+00> : vector<8x288xf32>
    %68 = tpu.matmul %67, %66, %cst_58 {dimension_numbers = #tpu.dot_dimension_numbers<[1], [0], [0], [1], [0, 0, 1, 1], [], []>} : vector<8x32xbf16>, vector<32x288xbf16>, vector<8x288xf32> -> vector<8x288xf32>
    %c0_59 = arith.constant 0 : index
    %c0_60 = arith.constant 0 : index
    %69 = vector.load %arg8[%c0_59, %c0_60] : memref<8x1xf32, #tpu.memory_space<vmem>>, vector<8x1xf32>
    %70 = vector.broadcast %69 : vector<8x1xf32> to vector<8x288xf32>
    %71 = arith.addf %68, %70 : vector<8x288xf32>
    %72 = vector.shape_cast %71 : vector<8x288xf32> to vector<1x8x288xf32>
    %c0_61 = arith.constant 0 : index
    %c0_62 = arith.constant 0 : index
    %c0_63 = arith.constant 0 : index
    %73 = vector.load %arg9[%c0_61, %c0_62, %c0_63] : memref<1x8x288xf32, #tpu.memory_space<vmem>>, vector<1x8x288xf32>
    tpu.vector_store %arg9[%c0_61, %c0_62, %c0_63], %72 {strides = array<i32>} : memref<1x8x288xf32, #tpu.memory_space<vmem>>, vector<1x8x288xf32>,
    return
  }
  func.func @transform_0(%arg0: i32, %arg1: i32) -> (i32, i32, i32) {
    %c0_i32 = arith.constant 0 : i32
    %c0_i32_0 = arith.constant 0 : i32
    %c0_i32_1 = arith.constant 0 : i32
    return %arg0, %c0_i32, %c0_i32_0 : i32, i32, i32
  }
  func.func @transform_1(%arg0: i32, %arg1: i32) -> (i32, i32, i32) {
    %c0_i32 = arith.constant 0 : i32
    %c0_i32_0 = arith.constant 0 : i32
    %c0_i32_1 = arith.constant 0 : i32
    %c0_i32_2 = arith.constant 0 : i32
    return %c0_i32, %c0_i32_0, %c0_i32_1 : i32, i32, i32
  }
  func.func @transform_2(%arg0: i32, %arg1: i32) -> (i32, i32) {
    %c0_i32 = arith.constant 0 : i32
    %c0_i32_0 = arith.constant 0 : i32
    %c0_i32_1 = arith.constant 0 : i32
    return %c0_i32, %c0_i32_0 : i32, i32
  }
  func.func @transform_3(%arg0: i32, %arg1: i32) -> (i32, i32) {
    %c0_i32 = arith.constant 0 : i32
    %c0_i32_0 = arith.constant 0 : i32
    %c0_i32_1 = arith.constant 0 : i32
    return %c0_i32, %c0_i32_0 : i32, i32
  }
  func.func @transform_4(%arg0: i32, %arg1: i32) -> (i32, i32) {
    %c0_i32 = arith.constant 0 : i32
    %c0_i32_0 = arith.constant 0 : i32
    %c0_i32_1 = arith.constant 0 : i32
    return %c0_i32, %c0_i32_0 : i32, i32
  }
  func.func @transform_5(%arg0: i32, %arg1: i32) -> (i32, i32) {
    %c0_i32 = arith.constant 0 : i32
    %c0_i32_0 = arith.constant 0 : i32
    %c0_i32_1 = arith.constant 0 : i32
    return %c0_i32, %c0_i32_0 : i32, i32
  }
  func.func @transform_6(%arg0: i32, %arg1: i32) -> (i32, i32) {
    %c0_i32 = arith.constant 0 : i32
    %c0_i32_0 = arith.constant 0 : i32
    %c0_i32_1 = arith.constant 0 : i32
    return %c0_i32, %c0_i32_0 : i32, i32
  }
  func.func @transform_7(%arg0: i32, %arg1: i32) -> (i32, i32, i32) {
    %c0_i32 = arith.constant 0 : i32
    %c0_i32_0 = arith.constant 0 : i32
    return %arg0, %c0_i32, %arg1 : i32, i32, i32
  }
}

</mosaic_0001>

<llo_original>
// kernel: tpu_custom_call.1
$region0: #{tpu_custom_call.1}
  #allocation0 [shape = 'u32[]', space=smem, size = 0x4, offset = 0x4, fixed_abs, tag = 'smem constant byte address 0x4 - core index']
  #allocation1 [shape = 'u32[144,128]{1,0:T(1,128)}', space=vmem, size = 0x12000, scoped, tag = 'internal scratch']
  %s0 = inlined_call_operand.vmem [shape: bf16[2,4,384], index: 0, kind: input, shape index: {}]
  %s1 = inlined_call_operand.vmem [shape: bf16[9,16,4], index: 1, kind: input, shape index: {}]
  %s2 = inlined_call_operand.vmem [shape: f32[16,1], index: 2, kind: input, shape index: {}]
  %s3 = inlined_call_operand.vmem [shape: bf16[32,16], index: 3, kind: input, shape index: {}]
  %s4 = inlined_call_operand.vmem [shape: f32[32,1], index: 4, kind: input, shape index: {}]
  %s5 = inlined_call_operand.vmem [shape: bf16[8,32], index: 5, kind: input, shape index: {}]
  %s6 = inlined_call_operand.vmem [shape: f32[8,1], index: 6, kind: input, shape index: {}]
  %s7 = inlined_call_operand.hbm [shape: f32[2,8,288], index: 7, kind: output, shape index: {}]
  %s8 = sld [smem:[#allocation0]]
  $region61: #{tpu_custom_call.1} parent=0
    _
  %s10 = ssub.s32 1, %s8
  %s11 = scalar_select 0, %s10, %s8
  $region1: #{tpu_custom_call.1} parent=0
    #allocation2 [shape = 'u8[24576]{0}', space=vmem, size = 0x6000, scoped, tag = 'output window, operand 0']
    #allocation3 [shape = 's32[2]{0}', space=sflag, size = 0x8, scoped, tag = 'scoped memory for tpu_custom_call.1']
    %12 = vsyncpa [#allocation3], 0
    %s13 = scalar_lea.sflag [#allocation3], 1
    %14 = vsyncpa %s13, 0
    loop: start=0, step=1, limit=4
    $region2: #{tpu_custom_call.1} parent=1 // loop_pre_header
      _
    $region3: #{tpu_custom_call.1} parent=1 // loop_header
      %s16 = sphi 0, %s20
      %p17 = scmp.ge.s32.totalorder %s16, 4
      %s23 = sphi 0, %s35
      %s24 = sphi 0, %s31
      %s25 = sphi 0, %s23
      %s26 = sphi 0, %s24
      %s27 = sphi 0, %s25
      %s28 = sphi 0, %s26
      %s38 = sphi 0, %s40
      %s41 = sphi 0, %s38
      %s42 = sphi 0, %s41
      %s58 = sphi 0, %s42
      %s62 = sphi 0, %s62
      %s64 = sphi 0, %s62
      %s65 = sphi 0, %s64
      %s79 = sphi 0, %s65
      %s83 = sphi 0, %s83
      %s85 = sphi 0, %s83
      %s86 = sphi 0, %s85
      %s100 = sphi 0, %s86
      %s104 = sphi 0, %s104
      %s106 = sphi 0, %s104
      %s107 = sphi 0, %s106
      %s121 = sphi 0, %s107
      %s125 = sphi 0, %s125
      %s127 = sphi 0, %s125
      %s128 = sphi 0, %s127
      %s142 = sphi 0, %s128
      %s146 = sphi 0, %s146
      %s148 = sphi 0, %s146
      %s149 = sphi 0, %s148
      %s163 = sphi 0, %s149
      %s167 = sphi 0, %s167
      %s169 = sphi 0, %s167
      %s170 = sphi 0, %s169
      %s184 = sphi 0, %s170
      %s192 = sphi 0, %s194
      %s195 = sphi 0, %s192
      %s196 = sphi 0, %s195
      %s212 = sphi 0, %s196
    $region4: #{tpu_custom_call.1} parent=1 // loop_header_branch
      %19 = sbr.rel (%p17) target = $region8
    $region5: #{tpu_custom_call.1} parent=1 // loop_body
      %s21 = ssub.s32 %s16, 1
      %s22 = ssub.s32 %s16, 2
      %s29 = sadd.s32 1, %s24
      %p30 = scmp.ge.s32.totalorder %s29, 1
      %s31 = scalar_select %p30, 0, %s29
      %s32 = sadd.s32 1, %s23
      %s33 = scalar_select %p30, %s32, %s23
      %p34 = scmp.ge.s32.totalorder %s33, 2
      %s35 = scalar_select %p34, 0, %s33
      %s36 = ssub.s32 %s23, %s35
      %p37 = scmp.eq.s32.totalorder %s36, 0
      %s39 = sadd.s32 %s38, 1
      %s40 = scalar_select %p37, %s38, %s39
      %p43 = pneg %p37
      %p44 = scmp.eq.s32.totalorder %s16, 1
      %p45 = por %p43, %p44
      %p46 = scmp.ne.s32.totalorder %s38, %s41
      %p47 = scmp.eq.s32.totalorder %s16, 0
      %p48 = por %p46, %p47
      %p49 = scmp.ne.s32.totalorder %s38, %s41
      %p50 = scmp.eq.s32.totalorder %s21, 1
      %p51 = por %p49, %p50
      %p52 = scmp.ne.s32.totalorder %s41, %s42
      %p53 = scmp.eq.s32.totalorder %s21, 0
      %p54 = por %p52, %p53
      %p55 = scmp.ne.s32.totalorder %s41, %s42
      %p56 = scmp.eq.s32.totalorder %s22, 1
      %p57 = por %p55, %p56
      %p59 = scmp.ne.s32.totalorder %s42, %s58
      %p60 = scmp.eq.s32.totalorder %s22, 0
      %p61 = por %p59, %p60
      %s63 = sadd.s32 %s62, 1
      %p66 = scmp.eq.s32.totalorder %s16, 1
      %p67 = scmp.ne.s32.totalorder %s62, %s64
      %p68 = scmp.eq.s32.totalorder %s16, 0
      %p69 = por %p67, %p68
      %p70 = scmp.ne.s32.totalorder %s62, %s64
      %p71 = scmp.eq.s32.totalorder %s21, 1
      %p72 = por %p70, %p71
      %p73 = scmp.ne.s32.totalorder %s64, %s65
      %p74 = scmp.eq.s32.totalorder %s21, 0
      %p75 = por %p73, %p74
      %p76 = scmp.ne.s32.totalorder %s64, %s65
      %p77 = scmp.eq.s32.totalorder %s22, 1
      %p78 = por %p76, %p77
      %p80 = scmp.ne.s32.totalorder %s65, %s79
      %p81 = scmp.eq.s32.totalorder %s22, 0
      %p82 = por %p80, %p81
      %s84 = sadd.s32 %s83, 1
      %p87 = scmp.eq.s32.totalorder %s16, 1
      %p88 = scmp.ne.s32.totalorder %s83, %s85
      %p89 = scmp.eq.s32.totalorder %s16, 0
      %p90 = por %p88, %p89
      %p91 = scmp.ne.s32.totalorder %s83, %s85
      %p92 = scmp.eq.s32.totalorder %s21, 1
      %p93 = por %p91, %p92
      %p94 = scmp.ne.s32.totalorder %s85, %s86
      %p95 = scmp.eq.s32.totalorder %s21, 0
      %p96 = por %p94, %p95
      %p97 = scmp.ne.s32.totalorder %s85, %s86
      %p98 = scmp.eq.s32.totalorder %s22, 1
      %p99 = por %p97, %p98
      %p101 = scmp.ne.s32.totalorder %s86, %s100
      %p102 = scmp.eq.s32.totalorder %s22, 0
      %p103 = por %p101, %p102
      %s105 = sadd.s32 %s104, 1
      %p108 = scmp.eq.s32.totalorder %s16, 1
      %p109 = scmp.ne.s32.totalorder %s104, %s106
      %p110 = scmp.eq.s32.totalorder %s16, 0
      %p111 = por %p109, %p110
      %p112 = scmp.ne.s32.totalorder %s104, %s106
      %p113 = scmp.eq.s32.totalorder %s21, 1
      %p114 = por %p112, %p113
      %p115 = scmp.ne.s32.totalorder %s106, %s107
      %p116 = scmp.eq.s32.totalorder %s21, 0
      %p117 = por %p115, %p116
      %p118 = scmp.ne.s32.totalorder %s106, %s107
      %p119 = scmp.eq.s32.totalorder %s22, 1
      %p120 = por %p118, %p119
      %p122 = scmp.ne.s32.totalorder %s107, %s121
      %p123 = scmp.eq.s32.totalorder %s22, 0
      %p124 = por %p122, %p123
      %s126 = sadd.s32 %s125, 1
      %p129 = scmp.eq.s32.totalorder %s16, 1
      %p130 = scmp.ne.s32.totalorder %s125, %s127
      %p131 = scmp.eq.s32.totalorder %s16, 0
      %p132 = por %p130, %p131
      %p133 = scmp.ne.s32.totalorder %s125, %s127
      %p134 = scmp.eq.s32.totalorder %s21, 1
      %p135 = por %p133, %p134
      %p136 = scmp.ne.s32.totalorder %s127, %s128
      %p137 = scmp.eq.s32.totalorder %s21, 0
      %p138 = por %p136, %p137
      %p139 = scmp.ne.s32.totalorder %s127, %s128
      %p140 = scmp.eq.s32.totalorder %s22, 1
      %p141 = por %p139, %p140
      %p143 = scmp.ne.s32.totalorder %s128, %s142
      %p144 = scmp.eq.s32.totalorder %s22, 0
      %p145 = por %p143, %p144
      %s147 = sadd.s32 %s146, 1
      %p150 = scmp.eq.s32.totalorder %s16, 1
      %p151 = scmp.ne.s32.totalorder %s146, %s148
      %p152 = scmp.eq.s32.totalorder %s16, 0
      %p153 = por %p151, %p152
      %p154 = scmp.ne.s32.totalorder %s146, %s148
      %p155 = scmp.eq.s32.totalorder %s21, 1
      %p156 = por %p154, %p155
      %p157 = scmp.ne.s32.totalorder %s148, %s149
      %p158 = scmp.eq.s32.totalorder %s21, 0
      %p159 = por %p157, %p158
      %p160 = scmp.ne.s32.totalorder %s148, %s149
      %p161 = scmp.eq.s32.totalorder %s22, 1
      %p162 = por %p160, %p161
      %p164 = scmp.ne.s32.totalorder %s149, %s163
      %p165 = scmp.eq.s32.totalorder %s22, 0
      %p166 = por %p164, %p165
      %s168 = sadd.s32 %s167, 1
      %p171 = scmp.eq.s32.totalorder %s16, 1
      %p172 = scmp.ne.s32.totalorder %s167, %s169
      %p173 = scmp.eq.s32.totalorder %s16, 0
      %p174 = por %p172, %p173
      %p175 = scmp.ne.s32.totalorder %s167, %s169
      %p176 = scmp.eq.s32.totalorder %s21, 1
      %p177 = por %p175, %p176
      %p178 = scmp.ne.s32.totalorder %s169, %s170
      %p179 = scmp.eq.s32.totalorder %s21, 0
      %p180 = por %p178, %p179
      %p181 = scmp.ne.s32.totalorder %s169, %s170
      %p182 = scmp.eq.s32.totalorder %s22, 1
      %p183 = por %p181, %p182
      %p185 = scmp.ne.s32.totalorder %s170, %s184
      %p186 = scmp.eq.s32.totalorder %s22, 0
      %p187 = por %p185, %p186
      %s188 = ssub.s32 %s23, %s35
      %s189 = ssub.s32 %s24, %s31
      %s190 = sor.u32 %s188, %s189
      %p191 = scmp.eq.s32.totalorder %s190, 0
      %s193 = sadd.s32 %s192, 1
      %s194 = scalar_select %p191, %s192, %s193
      %p197 = pneg %p191
      %p198 = scmp.eq.s32.totalorder %s16, 1
      %p199 = por %p197, %p198
      %p200 = scmp.ne.s32.totalorder %s192, %s195
      %p201 = scmp.eq.s32.totalorder %s16, 0
      %p202 = por %p200, %p201
      %p203 = scmp.ne.s32.totalorder %s192, %s195
      %p204 = scmp.eq.s32.totalorder %s21, 1
      %p205 = por %p203, %p204
      %p206 = scmp.ne.s32.totalorder %s195, %s196
      %p207 = scmp.eq.s32.totalorder %s21, 0
      %p208 = por %p206, %p207
      %p209 = scmp.ne.s32.totalorder %s195, %s196
      %p210 = scmp.eq.s32.totalorder %s22, 1
      %p211 = por %p209, %p210
      %p213 = scmp.ne.s32.totalorder %s196, %s212
      %p214 = scmp.eq.s32.totalorder %s22, 0
      %p215 = por %p213, %p214
      %p216 = scmp.le.s32.totalorder 1, %s16
      %p217 = scmp.lt.s32.totalorder %s16, 3
      %p218 = pnand %p216, %p217
      %p219 = pneg %p218
      // Predicated region
      $region9: #{tpu_custom_call.1} parent=5 // pred_check
        _
      $region10: #{tpu_custom_call.1} parent=5 // pred_check_branch
        %221 = sbr.rel (%p218) target = $region12
      $region11: #{tpu_custom_call.1} parent=5 // pred_region
        %s222 = ssub.s32 %s16, 1
        // Predicated region
        $region13: #{tpu_custom_call.1} parent=11 // pred_check
          %p223 = pneg %p54
        $region14: #{tpu_custom_call.1} parent=11 // pred_check_branch
          %225 = sbr.rel (%p223) target = $region16
        $region15: #{tpu_custom_call.1} parent=11 // pred_region
          %p226 = scmp.lt.s32.totalorder %s25, 1
          %s227 = scalar_select %p226, %s25, 1
          %s228 = smul.addr %s227, 3
          %s229 = smul.addr %s228, 2
          %s230 = scalar_lea.vmem %s0, %s229
        $region16: #{tpu_custom_call.1} parent=11 // pred_fallthru
          _
        // Predicated region
        $region17: #{tpu_custom_call.1} parent=11 // pred_check
          %p231 = pneg %p75
        $region18: #{tpu_custom_call.1} parent=11 // pred_check_branch
          %233 = sbr.rel (%p231) target = $region20
        $region19: #{tpu_custom_call.1} parent=11 // pred_region
          _
        $region20: #{tpu_custom_call.1} parent=11 // pred_fallthru
          _
        // Predicated region
        $region21: #{tpu_custom_call.1} parent=11 // pred_check
          %p234 = pneg %p96
        $region22: #{tpu_custom_call.1} parent=11 // pred_check_branch
          %236 = sbr.rel (%p234) target = $region24
        $region23: #{tpu_custom_call.1} parent=11 // pred_region
          _
        $region24: #{tpu_custom_call.1} parent=11 // pred_fallthru
          _
        // Predicated region
        $region25: #{tpu_custom_call.1} parent=11 // pred_check
          %p237 = pneg %p117
        $region26: #{tpu_custom_call.1} parent=11 // pred_check_branch
          %239 = sbr.rel (%p237) target = $region28
        $region27: #{tpu_custom_call.1} parent=11 // pred_region
          _
        $region28: #{tpu_custom_call.1} parent=11 // pred_fallthru
          _
        // Predicated region
        $region29: #{tpu_custom_call.1} parent=11 // pred_check
          %p240 = pneg %p138
        $region30: #{tpu_custom_call.1} parent=11 // pred_check_branch
          %242 = sbr.rel (%p240) target = $region32
        $region31: #{tpu_custom_call.1} parent=11 // pred_region
          _
        $region32: #{tpu_custom_call.1} parent=11 // pred_fallthru
          _
        // Predicated region
        $region33: #{tpu_custom_call.1} parent=11 // pred_check
          %p243 = pneg %p159
        $region34: #{tpu_custom_call.1} parent=11 // pred_check_branch
          %245 = sbr.rel (%p243) target = $region36
        $region35: #{tpu_custom_call.1} parent=11 // pred_region
          _
        $region36: #{tpu_custom_call.1} parent=11 // pred_fallthru
          _
        // Predicated region
        $region37: #{tpu_custom_call.1} parent=11 // pred_check
          %p246 = pneg %p180
        $region38: #{tpu_custom_call.1} parent=11 // pred_check_branch
          %248 = sbr.rel (%p246) target = $region40
        $region39: #{tpu_custom_call.1} parent=11 // pred_region
          _
        $region40: #{tpu_custom_call.1} parent=11 // pred_fallthru
          _
      $region12: #{tpu_custom_call.1} parent=5 // pred_fallthru
        _
      %p249 = scmp.lt.s32.totalorder %s16, 2
      // Predicated region
      $region41: #{tpu_custom_call.1} parent=5 // pred_check
        %p250 = pneg %p249
      $region42: #{tpu_custom_call.1} parent=5 // pred_check_branch
        %252 = sbr.rel (%p250) target = $region44
      $region43: #{tpu_custom_call.1} parent=5 // pred_region
        _
      $region44: #{tpu_custom_call.1} parent=5 // pred_fallthru
        _
      %p253 = scmp.le.s32.totalorder 1, %s16
      %p254 = scmp.lt.s32.totalorder %s16, 3
      %p255 = pnand %p253, %p254
      %p256 = pneg %p255
      // Predicated region
      $region45: #{tpu_custom_call.1} parent=5 // pred_check
        _
      $region46: #{tpu_custom_call.1} parent=5 // pred_check_branch
        %258 = sbr.rel (%p255) target = $region48
      $region47: #{tpu_custom_call.1} parent=5 // pred_region
        %s259 = ssub.s32 %s16, 1
        %p260 = scmp.lt.s32.totalorder %s25, 1
        %s261 = scalar_select %p260, %s25, 1
        %s262 = smul.addr %s261, 3
        %s263 = smul.addr %s262, 2
        %s264 = scalar_lea.vmem %s0, %s263
        %p265 = pneg %p54
        %p266 = pneg %p51
        %p267 = pneg %p75
        %p268 = pneg %p72
        %p269 = pneg %p96
        %p270 = pneg %p93
        %p271 = pneg %p117
        %p272 = pneg %p114
        %p273 = pneg %p138
        %p274 = pneg %p135
        %p275 = pneg %p159
        %p276 = pneg %p156
        %p277 = pneg %p180
        %p278 = pneg %p177
        %p279 = pneg %p208
        %p280 = pneg %p205
        %s281 = sand.u32 %s195, 1
        %s282 = scalar_lea.sflag [#allocation3], %s281
        %s283 = sand.u32 %s195, 1
        %s284 = smul.addr %s283, 24
        %s285 = scalar_lea.vmem [#allocation2], %s284
        %p286 = scmp.lt.s32.totalorder %s25, 1
        %s287 = scalar_select %p286, %s25, 1
        %s288 = smul.addr %s287, 3
        %s289 = smul.addr %s288, 2
        %s290 = scalar_lea.vmem %s0, %s289
        %s291 = smul.u32 3, %s26
        %v293 = vld [vmem:[%s290] sm:$0x3f]
        %v294 = vld [vmem:[%s1] sm:$0xf]
        %v295 = vld [vmem:[%s1 + $0x4] sm:$0xf]
        %s296 = scalar_lea.vmem %s1, 8
        %v297 = vld [vmem:[%s296] sm:$0xf]
        %v298 = vld [vmem:[%s296 + $0x4] sm:$0xf]
        %v301 = vunpack.c.l.b16 %v297
        %v302 = vunpack.c.l.b16 %v298
        %v303 = vpack.c.b16 %v302, %v301
        %v305 = vcombine.high %v293, %v293
        %v307 = vunpack.c.l.s4 1983009808
        %v308 = vunpack.c.0.s8 %v307
        %v309 = vlaneseq
        %v310 = vshrl.u32 %v309, 7
        %v311 = vsub.s32 %v308, %v310
        %v312 = vrot.slane %v293, %v311
        %v314 = vunpack.c.l.s4 1983009808
        %v315 = vunpack.c.0.s8 %v314
        %v316 = vlaneseq
        %v317 = vshrl.u32 %v316, 7
        %v318 = vsub.s32 %v315, %v317
        %v319 = vrot.slane %v305, %v318
        %v320 = vcombine.high %v312, %v312
        %321 = vrot.lane.b32.xlu0 %v312, 127
        %v322 = vpop.permute.xlu0 %321
        %323 = vrot.lane.b32.xlu0 %v320, 127
        %v324 = vpop.permute.xlu0 %323
        %325 = vrot.lane.b32.xlu0 %v319, 127
        %v326 = vpop.permute.xlu0 %325
        %vm327 = vcmask 1039360
        %v328 = vsel %vm327, %v322, %v324
        %v329 = vsel %vm327, %v324, %v326
        %vm330 = vcmask 31744
        %v332 = vsel %vm330, %v303, 0
        %vm334 = vcmask 1041408
        %v336 = vsel %vm334, %v328, 0
        %v339 = vsel %vm334, %v329, 0
        %v342 = vsel %vm334, %v326, 0
        %344 = vmatprep.subr.bf16.mxu0 %v339
        %345 = vmatpush1.bf16.msra.mxu0 %v336
        %346 = vmatprep.subr.bf16.mxu0 0
        %347 = vmatpush1.bf16.msra.mxu0 0
        %348 = vmatprep.subr.bf16.mxu0 0
        %349 = vmatpush1.bf16.msra.mxu0 0
        %350 = vmatprep.subr.bf16.mxu0 0
        %351 = vmatpush1.bf16.msra.mxu0 0
        %352 = vmatprep.subr.bf16.mxu0 0
        %353 = vmatpush1.bf16.msra.mxu0 0
        %354 = vmatprep.subr.bf16.mxu0 0
        %355 = vmatpush1.bf16.msra.mxu0 0
        %356 = vmatprep.subr.bf16.mxu0 0
        %357 = vmatpush1.bf16.msra.mxu0 0
        %358 = vmatprep.subr.bf16.mxu0 0
        %359 = vmatpush1.bf16.msra.mxu0 0
        %360 = vmatprep.subr.bf16.mxu0 0
        %361 = vmatpush1.bf16.msra.mxu0 0
        %362 = vmatprep.subr.bf16.mxu0 0
        %363 = vmatpush1.bf16.msra.mxu0 0
        %364 = vmatprep.subr.bf16.mxu0 0
        %365 = vmatpush1.bf16.msra.mxu0 0
        %366 = vmatprep.subr.bf16.mxu0 0
        %367 = vmatpush1.bf16.msra.mxu0 0
        %368 = vmatprep.subr.bf16.mxu0 0
        %369 = vmatpush1.bf16.msra.mxu0 0
        %370 = vmatprep.subr.bf16.mxu0 0
        %371 = vmatpush1.bf16.msra.mxu0 0
        %372 = vmatprep.subr.bf16.mxu0 0
        %373 = vmatpush1.bf16.msra.mxu0 0
        %374 = vmatprep.subr.bf16.mxu0 0
        %375 = vmatpush1.bf16.msra.mxu0 0
        %376 = vmatprep.mubr.bf16.mxu0 0
        %377 = vmatmul.mubr.bf16.gmra.mrb[0].mxu0 %v332
        %v378 = vpop.f32.mrb[0].mxu0
        %v379 = vadd.f32 0.0, %v378
        %v380 = vpop.f32.mrb[0].mxu0
        %v381 = vadd.f32 0.0, %v380
        %v382 = vpop.f32.mrb[0].mxu0
        %v383 = vadd.f32 0.0, %v382
        %v384 = vpop.f32.mrb[0].mxu0
        %v385 = vadd.f32 0.0, %v384
        %386 = vdwg.mxu0
        %387 = vmatprep.subr.bf16.mxu0 0
        %388 = vmatpush1.bf16.msra.mxu0 %v342
        %389 = vmatprep.subr.bf16.mxu0 0
        %390 = vmatpush1.bf16.msra.mxu0 0
        %391 = vmatprep.subr.bf16.mxu0 0
        %392 = vmatpush1.bf16.msra.mxu0 0
        %393 = vmatprep.subr.bf16.mxu0 0
        %394 = vmatpush1.bf16.msra.mxu0 0
        %395 = vmatprep.subr.bf16.mxu0 0
        %396 = vmatpush1.bf16.msra.mxu0 0
        %397 = vmatprep.subr.bf16.mxu0 0
        %398 = vmatpush1.bf16.msra.mxu0 0
        %399 = vmatprep.subr.bf16.mxu0 0
        %400 = vmatpush1.bf16.msra.mxu0 0
        %401 = vmatprep.subr.bf16.mxu0 0
        %402 = vmatpush1.bf16.msra.mxu0 0
        %403 = vmatprep.subr.bf16.mxu0 0
        %404 = vmatpush1.bf16.msra.mxu0 0
        %405 = vmatprep.subr.bf16.mxu0 0
        %406 = vmatpush1.bf16.msra.mxu0 0
        %407 = vmatprep.subr.bf16.mxu0 0
        %408 = vmatpush1.bf16.msra.mxu0 0
        %409 = vmatprep.subr.bf16.mxu0 0
        %410 = vmatpush1.bf16.msra.mxu0 0
        %411 = vmatprep.subr.bf16.mxu0 0
        %412 = vmatpush1.bf16.msra.mxu0 0
        %413 = vmatprep.subr.bf16.mxu0 0
        %414 = vmatpush1.bf16.msra.mxu0 0
        %415 = vmatprep.subr.bf16.mxu0 0
        %416 = vmatpush1.bf16.msra.mxu0 0
        %417 = vmatprep.subr.bf16.mxu0 0
        %418 = vmatpush1.bf16.msra.mxu0 0
        %419 = vmatprep.mubr.bf16.mxu0 0
        %420 = vmatmul.mubr.bf16.gmra.mrb[0].mxu0 %v332
        %v421 = vpop.f32.mrb[0].mxu0
        %v422 = vadd.f32 0.0, %v421
        %v423 = vpop.f32.mrb[0].mxu0
        %v424 = vpop.f32.mrb[0].mxu0
        %v425 = vadd.f32 0.0, %v424
        %v426 = vpop.f32.mrb[0].mxu0
        %427 = vdwg.mxu0
        %v430 = vunpack.c.l.b16 %v294
        %v431 = vunpack.c.l.b16 %v295
        %v432 = vpack.c.b16 %v431, %v430
        %v434 = vsel %vm330, %v432, 0
        %v437 = vsel %vm334, %v312, 0
        %v440 = vsel %vm334, %v320, 0
        %v443 = vsel %vm334, %v319, 0
        %445 = vmatprep.subr.bf16.mxu0 %v440
        %446 = vmatpush1.bf16.msra.mxu0 %v437
        %447 = vmatprep.subr.bf16.mxu0 0
        %448 = vmatpush1.bf16.msra.mxu0 0
        %449 = vmatprep.subr.bf16.mxu0 0
        %450 = vmatpush1.bf16.msra.mxu0 0
        %451 = vmatprep.subr.bf16.mxu0 0
        %452 = vmatpush1.bf16.msra.mxu0 0
        %453 = vmatprep.subr.bf16.mxu0 0
        %454 = vmatpush1.bf16.msra.mxu0 0
        %455 = vmatprep.subr.bf16.mxu0 0
        %456 = vmatpush1.bf16.msra.mxu0 0
        %457 = vmatprep.subr.bf16.mxu0 0
        %458 = vmatpush1.bf16.msra.mxu0 0
        %459 = vmatprep.subr.bf16.mxu0 0
        %460 = vmatpush1.bf16.msra.mxu0 0
        %461 = vmatprep.subr.bf16.mxu0 0
        %462 = vmatpush1.bf16.msra.mxu0 0
        %463 = vmatprep.subr.bf16.mxu0 0
        %464 = vmatpush1.bf16.msra.mxu0 0
        %465 = vmatprep.subr.bf16.mxu0 0
        %466 = vmatpush1.bf16.msra.mxu0 0
        %467 = vmatprep.subr.bf16.mxu0 0
        %468 = vmatpush1.bf16.msra.mxu0 0
        %469 = vmatprep.subr.bf16.mxu0 0
        %470 = vmatpush1.bf16.msra.mxu0 0
        %471 = vmatprep.subr.bf16.mxu0 0
        %472 = vmatpush1.bf16.msra.mxu0 0
        %473 = vmatprep.subr.bf16.mxu0 0
        %474 = vmatpush1.bf16.msra.mxu0 0
        %475 = vmatprep.subr.bf16.mxu0 0
        %476 = vmatpush1.bf16.msra.mxu0 0
        %477 = vmatprep.mubr.bf16.mxu0 0
        %478 = vmatmul.mubr.bf16.gmra.mrb[0].mxu0 %v434
        %v479 = vpop.f32.mrb[0].mxu0
        %v480 = vadd.f32 %v379, %v479
        %v481 = vpop.f32.mrb[0].mxu0
        %v482 = vadd.f32 %v381, %v481
        %v483 = vpop.f32.mrb[0].mxu0
        %v484 = vadd.f32 %v383, %v483
        %v485 = vpop.f32.mrb[0].mxu0
        %v486 = vadd.f32 %v385, %v485
        %487 = vdwg.mxu0
        %488 = vmatprep.subr.bf16.mxu0 0
        %489 = vmatpush1.bf16.msra.mxu0 %v443
        %490 = vmatprep.subr.bf16.mxu0 0
        %491 = vmatpush1.bf16.msra.mxu0 0
        %492 = vmatprep.subr.bf16.mxu0 0
        %493 = vmatpush1.bf16.msra.mxu0 0
        %494 = vmatprep.subr.bf16.mxu0 0
        %495 = vmatpush1.bf16.msra.mxu0 0
        %496 = vmatprep.subr.bf16.mxu0 0
        %497 = vmatpush1.bf16.msra.mxu0 0
        %498 = vmatprep.subr.bf16.mxu0 0
        %499 = vmatpush1.bf16.msra.mxu0 0
        %500 = vmatprep.subr.bf16.mxu0 0
        %501 = vmatpush1.bf16.msra.mxu0 0
        %502 = vmatprep.subr.bf16.mxu0 0
        %503 = vmatpush1.bf16.msra.mxu0 0
        %504 = vmatprep.subr.bf16.mxu0 0
        %505 = vmatpush1.bf16.msra.mxu0 0
        %506 = vmatprep.subr.bf16.mxu0 0
        %507 = vmatpush1.bf16.msra.mxu0 0
        %508 = vmatprep.subr.bf16.mxu0 0
        %509 = vmatpush1.bf16.msra.mxu0 0
        %510 = vmatprep.subr.bf16.mxu0 0
        %511 = vmatpush1.bf16.msra.mxu0 0
        %512 = vmatprep.subr.bf16.mxu0 0
        %513 = vmatpush1.bf16.msra.mxu0 0
        %514 = vmatprep.subr.bf16.mxu0 0
        %515 = vmatpush1.bf16.msra.mxu0 0
        %516 = vmatprep.subr.bf16.mxu0 0
        %517 = vmatpush1.bf16.msra.mxu0 0
        %518 = vmatprep.subr.bf16.mxu0 0
        %519 = vmatpush1.bf16.msra.mxu0 0
        %520 = vmatprep.mubr.bf16.mxu0 0
        %521 = vmatmul.mubr.bf16.gmra.mrb[0].mxu0 %v434
        %v522 = vpop.f32.mrb[0].mxu0
        %v523 = vadd.f32 %v422, %v522
        %v524 = vpop.f32.mrb[0].mxu0
        %v525 = vpop.f32.mrb[0].mxu0
        %v526 = vadd.f32 %v425, %v525
        %v527 = vpop.f32.mrb[0].mxu0
        %528 = vdwg.mxu0
        %v529 = vld [vmem:[%s290] sm:$0x3f]
        %s530 = scalar_lea.vmem %s1, 16
        %v531 = vld [vmem:[%s530] sm:$0xf]
        %v532 = vld [vmem:[%s530 + $0x4] sm:$0xf]
        %v535 = vunpack.c.l.b16 %v531
        %v536 = vunpack.c.l.b16 %v532
        %v537 = vpack.c.b16 %v536, %v535
        %v539 = vcombine.high %v529, %v529
        %v541 = vunpack.c.l.s4 1983009808
        %v542 = vunpack.c.0.s8 %v541
        %v543 = vlaneseq
        %v544 = vshrl.u32 %v543, 7
        %v545 = vsub.s32 %v542, %v544
        %v546 = vrot.slane %v529, %v545
        %v548 = vunpack.c.l.s4 1983009808
        %v549 = vunpack.c.0.s8 %v548
        %v550 = vlaneseq
        %v551 = vshrl.u32 %v550, 7
        %v552 = vsub.s32 %v549, %v551
        %v553 = vrot.slane %v539, %v552
        %v554 = vcombine.high %v546, %v546
        %555 = vrot.lane.b32.xlu0 %v546, 126
        %v556 = vpop.permute.xlu0 %555
        %557 = vrot.lane.b32.xlu0 %v554, 126
        %v558 = vpop.permute.xlu0 %557
        %559 = vrot.lane.b32.xlu0 %v553, 126
        %v560 = vpop.permute.xlu0 %559
        %vm561 = vcmask 1031168
        %v562 = vsel %vm561, %v556, %v558
        %v563 = vsel %vm561, %v558, %v560
        %v565 = vsel %vm330, %v537, 0
        %v568 = vsel %vm334, %v562, 0
        %v571 = vsel %vm334, %v563, 0
        %v574 = vsel %vm334, %v560, 0
        %576 = vmatprep.subr.bf16.mxu0 %v571
        %577 = vmatpush1.bf16.msra.mxu0 %v568
        %578 = vmatprep.subr.bf16.mxu0 0
        %579 = vmatpush1.bf16.msra.mxu0 0
        %580 = vmatprep.subr.bf16.mxu0 0
        %581 = vmatpush1.bf16.msra.mxu0 0
        %582 = vmatprep.subr.bf16.mxu0 0
        %583 = vmatpush1.bf16.msra.mxu0 0
        %584 = vmatprep.subr.bf16.mxu0 0
        %585 = vmatpush1.bf16.msra.mxu0 0
        %586 = vmatprep.subr.bf16.mxu0 0
        %587 = vmatpush1.bf16.msra.mxu0 0
        %588 = vmatprep.subr.bf16.mxu0 0
        %589 = vmatpush1.bf16.msra.mxu0 0
        %590 = vmatprep.subr.bf16.mxu0 0
        %591 = vmatpush1.bf16.msra.mxu0 0
        %592 = vmatprep.subr.bf16.mxu0 0
        %593 = vmatpush1.bf16.msra.mxu0 0
        %594 = vmatprep.subr.bf16.mxu0 0
        %595 = vmatpush1.bf16.msra.mxu0 0
        %596 = vmatprep.subr.bf16.mxu0 0
        %597 = vmatpush1.bf16.msra.mxu0 0
        %598 = vmatprep.subr.bf16.mxu0 0
        %599 = vmatpush1.bf16.msra.mxu0 0
        %600 = vmatprep.subr.bf16.mxu0 0
        %601 = vmatpush1.bf16.msra.mxu0 0
        %602 = vmatprep.subr.bf16.mxu0 0
        %603 = vmatpush1.bf16.msra.mxu0 0
        %604 = vmatprep.subr.bf16.mxu0 0
        %605 = vmatpush1.bf16.msra.mxu0 0
        %606 = vmatprep.subr.bf16.mxu0 0
        %607 = vmatpush1.bf16.msra.mxu0 0
        %608 = vmatprep.mubr.bf16.mxu0 0
        %609 = vmatmul.mubr.bf16.gmra.mrb[0].mxu0 %v565
        %v610 = vpop.f32.mrb[0].mxu0
        %v611 = vadd.f32 0.0, %v610
        %v612 = vpop.f32.mrb[0].mxu0
        %v613 = vadd.f32 0.0, %v612
        %v614 = vpop.f32.mrb[0].mxu0
        %v615 = vadd.f32 0.0, %v614
        %v616 = vpop.f32.mrb[0].mxu0
        %v617 = vadd.f32 0.0, %v616
        %618 = vdwg.mxu0
        %619 = vmatprep.subr.bf16.mxu0 0
        %620 = vmatpush1.bf16.msra.mxu0 %v574
        %621 = vmatprep.subr.bf16.mxu0 0
        %622 = vmatpush1.bf16.msra.mxu0 0
        %623 = vmatprep.subr.bf16.mxu0 0
        %624 = vmatpush1.bf16.msra.mxu0 0
        %625 = vmatprep.subr.bf16.mxu0 0
        %626 = vmatpush1.bf16.msra.mxu0 0
        %627 = vmatprep.subr.bf16.mxu0 0
        %628 = vmatpush1.bf16.msra.mxu0 0
        %629 = vmatprep.subr.bf16.mxu0 0
        %630 = vmatpush1.bf16.msra.mxu0 0
        %631 = vmatprep.subr.bf16.mxu0 0
        %632 = vmatpush1.bf16.msra.mxu0 0
        %633 = vmatprep.subr.bf16.mxu0 0
        %634 = vmatpush1.bf16.msra.mxu0 0
        %635 = vmatprep.subr.bf16.mxu0 0
        %636 = vmatpush1.bf16.msra.mxu0 0
        %637 = vmatprep.subr.bf16.mxu0 0
        %638 = vmatpush1.bf16.msra.mxu0 0
        %639 = vmatprep.subr.bf16.mxu0 0
        %640 = vmatpush1.bf16.msra.mxu0 0
        %641 = vmatprep.subr.bf16.mxu0 0
        %642 = vmatpush1.bf16.msra.mxu0 0
        %643 = vmatprep.subr.bf16.mxu0 0
        %644 = vmatpush1.bf16.msra.mxu0 0
        %645 = vmatprep.subr.bf16.mxu0 0
        %646 = vmatpush1.bf16.msra.mxu0 0
        %647 = vmatprep.subr.bf16.mxu0 0
        %648 = vmatpush1.bf16.msra.mxu0 0
        %649 = vmatprep.subr.bf16.mxu0 0
        %650 = vmatpush1.bf16.msra.mxu0 0
        %651 = vmatprep.mubr.bf16.mxu0 0
        %652 = vmatmul.mubr.bf16.gmra.mrb[0].mxu0 %v565
        %v653 = vpop.f32.mrb[0].mxu0
        %v654 = vadd.f32 0.0, %v653
        %v655 = vpop.f32.mrb[0].mxu0
        %v656 = vpop.f32.mrb[0].mxu0
        %v657 = vadd.f32 0.0, %v656
        %v658 = vpop.f32.mrb[0].mxu0
        %659 = vdwg.mxu0
        %v660 = vadd.f32 %v480, %v611
        %v661 = vadd.f32 %v482, %v613
        %v662 = vadd.f32 %v523, %v654
        %v663 = vadd.f32 %v484, %v615
        %v664 = vadd.f32 %v486, %v617
        %v665 = vadd.f32 %v526, %v657
        %v666 = vld [vmem:[%s290] sm:$0x3f]
        %s667 = scalar_lea.vmem %s1, 24
        %v668 = vld [vmem:[%s667] sm:$0xf]
        %v669 = vld [vmem:[%s667 + $0x4] sm:$0xf]
        %v672 = vunpack.c.l.b16 %v668
        %v673 = vunpack.c.l.b16 %v669
        %v674 = vpack.c.b16 %v673, %v672
        %v676 = vcombine.high %v666, %v666
        %v678 = vunpack.c.l.s4 1983009808
        %v679 = vunpack.c.0.s8 %v678
        %v680 = vlaneseq
        %v681 = vshrl.u32 %v680, 7
        %v682 = vsub.s32 %v679, %v681
        %v683 = vrot.slane %v666, %v682
        %v685 = vunpack.c.l.s4 1983009808
        %v686 = vunpack.c.0.s8 %v685
        %v687 = vlaneseq
        %v688 = vshrl.u32 %v687, 7
        %v689 = vsub.s32 %v686, %v688
        %v690 = vrot.slane %v676, %v689
        %v691 = vcombine.high %v683, %v683
        %692 = vrot.lane.b32.xlu0 %v683, 110
        %v693 = vpop.permute.xlu0 %692
        %694 = vrot.lane.b32.xlu0 %v691, 110
        %v695 = vpop.permute.xlu0 %694
        %696 = vrot.lane.b32.xlu0 %v690, 110
        %v697 = vpop.permute.xlu0 %696
        %vm698 = vcmask 900096
        %v699 = vsel %vm698, %v693, %v695
        %v700 = vsel %vm698, %v695, %v697
        %v702 = vsel %vm330, %v674, 0
        %v705 = vsel %vm334, %v699, 0
        %v708 = vsel %vm334, %v700, 0
        %v711 = vsel %vm334, %v697, 0
        %713 = vmatprep.subr.bf16.mxu0 %v708
        %714 = vmatpush1.bf16.msra.mxu0 %v705
        %715 = vmatprep.subr.bf16.mxu0 0
        %716 = vmatpush1.bf16.msra.mxu0 0
        %717 = vmatprep.subr.bf16.mxu0 0
        %718 = vmatpush1.bf16.msra.mxu0 0
        %719 = vmatprep.subr.bf16.mxu0 0
        %720 = vmatpush1.bf16.msra.mxu0 0
        %721 = vmatprep.subr.bf16.mxu0 0
        %722 = vmatpush1.bf16.msra.mxu0 0
        %723 = vmatprep.subr.bf16.mxu0 0
        %724 = vmatpush1.bf16.msra.mxu0 0
        %725 = vmatprep.subr.bf16.mxu0 0
        %726 = vmatpush1.bf16.msra.mxu0 0
        %727 = vmatprep.subr.bf16.mxu0 0
        %728 = vmatpush1.bf16.msra.mxu0 0
        %729 = vmatprep.subr.bf16.mxu0 0
        %730 = vmatpush1.bf16.msra.mxu0 0
        %731 = vmatprep.subr.bf16.mxu0 0
        %732 = vmatpush1.bf16.msra.mxu0 0
        %733 = vmatprep.subr.bf16.mxu0 0
        %734 = vmatpush1.bf16.msra.mxu0 0
        %735 = vmatprep.subr.bf16.mxu0 0
        %736 = vmatpush1.bf16.msra.mxu0 0
        %737 = vmatprep.subr.bf16.mxu0 0
        %738 = vmatpush1.bf16.msra.mxu0 0
        %739 = vmatprep.subr.bf16.mxu0 0
        %740 = vmatpush1.bf16.msra.mxu0 0
        %741 = vmatprep.subr.bf16.mxu0 0
        %742 = vmatpush1.bf16.msra.mxu0 0
        %743 = vmatprep.subr.bf16.mxu0 0
        %744 = vmatpush1.bf16.msra.mxu0 0
        %745 = vmatprep.mubr.bf16.mxu0 0
        %746 = vmatmul.mubr.bf16.gmra.mrb[0].mxu0 %v702
        %v747 = vpop.f32.mrb[0].mxu0
        %v748 = vadd.f32 0.0, %v747
        %v749 = vpop.f32.mrb[0].mxu0
        %v750 = vadd.f32 0.0, %v749
        %v751 = vpop.f32.mrb[0].mxu0
        %v752 = vadd.f32 0.0, %v751
        %v753 = vpop.f32.mrb[0].mxu0
        %v754 = vadd.f32 0.0, %v753
        %755 = vdwg.mxu0
        %756 = vmatprep.subr.bf16.mxu0 0
        %757 = vmatpush1.bf16.msra.mxu0 %v711
        %758 = vmatprep.subr.bf16.mxu0 0
        %759 = vmatpush1.bf16.msra.mxu0 0
        %760 = vmatprep.subr.bf16.mxu0 0
        %761 = vmatpush1.bf16.msra.mxu0 0
        %762 = vmatprep.subr.bf16.mxu0 0
        %763 = vmatpush1.bf16.msra.mxu0 0
        %764 = vmatprep.subr.bf16.mxu0 0
        %765 = vmatpush1.bf16.msra.mxu0 0
        %766 = vmatprep.subr.bf16.mxu0 0
        %767 = vmatpush1.bf16.msra.mxu0 0
        %768 = vmatprep.subr.bf16.mxu0 0
        %769 = vmatpush1.bf16.msra.mxu0 0
        %770 = vmatprep.subr.bf16.mxu0 0
        %771 = vmatpush1.bf16.msra.mxu0 0
        %772 = vmatprep.subr.bf16.mxu0 0
        %773 = vmatpush1.bf16.msra.mxu0 0
        %774 = vmatprep.subr.bf16.mxu0 0
        %775 = vmatpush1.bf16.msra.mxu0 0
        %776 = vmatprep.subr.bf16.mxu0 0
        %777 = vmatpush1.bf16.msra.mxu0 0
        %778 = vmatprep.subr.bf16.mxu0 0
        %779 = vmatpush1.bf16.msra.mxu0 0
        %780 = vmatprep.subr.bf16.mxu0 0
        %781 = vmatpush1.bf16.msra.mxu0 0
        %782 = vmatprep.subr.bf16.mxu0 0
        %783 = vmatpush1.bf16.msra.mxu0 0
        %784 = vmatprep.subr.bf16.mxu0 0
        %785 = vmatpush1.bf16.msra.mxu0 0
        %786 = vmatprep.subr.bf16.mxu0 0
        %787 = vmatpush1.bf16.msra.mxu0 0
        %788 = vmatprep.mubr.bf16.mxu0 0
        %789 = vmatmul.mubr.bf16.gmra.mrb[0].mxu0 %v702
        %v790 = vpop.f32.mrb[0].mxu0
        %v791 = vadd.f32 0.0, %v790
        %v792 = vpop.f32.mrb[0].mxu0
        %v793 = vpop.f32.mrb[0].mxu0
        %v794 = vadd.f32 0.0, %v793
        %v795 = vpop.f32.mrb[0].mxu0
        %796 = vdwg.mxu0
        %v797 = vadd.f32 %v660, %v748
        %v798 = vadd.f32 %v661, %v750
        %v799 = vadd.f32 %v662, %v791
        %v800 = vadd.f32 %v663, %v752
        %v801 = vadd.f32 %v664, %v754
        %v802 = vadd.f32 %v665, %v794
        %v803 = vld [vmem:[%s290] sm:$0x3f]
        %s804 = scalar_lea.vmem %s1, 32
        %v805 = vld [vmem:[%s804] sm:$0xf]
        %v806 = vld [vmem:[%s804 + $0x4] sm:$0xf]
        %v809 = vunpack.c.l.b16 %v805
        %v810 = vunpack.c.l.b16 %v806
        %v811 = vpack.c.b16 %v810, %v809
        %v813 = vcombine.high %v803, %v803
        %v815 = vunpack.c.l.s4 1983009808
        %v816 = vunpack.c.0.s8 %v815
        %v817 = vlaneseq
        %v818 = vshrl.u32 %v817, 7
        %v819 = vsub.s32 %v816, %v818
        %v820 = vrot.slane %v803, %v819
        %v822 = vunpack.c.l.s4 1983009808
        %v823 = vunpack.c.0.s8 %v822
        %v824 = vlaneseq
        %v825 = vshrl.u32 %v824, 7
        %v826 = vsub.s32 %v823, %v825
        %v827 = vrot.slane %v813, %v826
        %v828 = vcombine.high %v820, %v820
        %829 = vrot.lane.b32.xlu0 %v820, 109
        %v830 = vpop.permute.xlu0 %829
        %831 = vrot.lane.b32.xlu0 %v828, 109
        %v832 = vpop.permute.xlu0 %831
        %833 = vrot.lane.b32.xlu0 %v827, 109
        %v834 = vpop.permute.xlu0 %833
        %vm835 = vcmask 891904
        %v836 = vsel %vm835, %v830, %v832
        %v837 = vsel %vm835, %v832, %v834
        %v839 = vsel %vm330, %v811, 0
        %v842 = vsel %vm334, %v836, 0
        %v845 = vsel %vm334, %v837, 0
        %v848 = vsel %vm334, %v834, 0
        %850 = vmatprep.subr.bf16.mxu0 %v845
        %851 = vmatpush1.bf16.msra.mxu0 %v842
        %852 = vmatprep.subr.bf16.mxu0 0
        %853 = vmatpush1.bf16.msra.mxu0 0
        %854 = vmatprep.subr.bf16.mxu0 0
        %855 = vmatpush1.bf16.msra.mxu0 0
        %856 = vmatprep.subr.bf16.mxu0 0
        %857 = vmatpush1.bf16.msra.mxu0 0
        %858 = vmatprep.subr.bf16.mxu0 0
        %859 = vmatpush1.bf16.msra.mxu0 0
        %860 = vmatprep.subr.bf16.mxu0 0
        %861 = vmatpush1.bf16.msra.mxu0 0
        %862 = vmatprep.subr.bf16.mxu0 0
        %863 = vmatpush1.bf16.msra.mxu0 0
        %864 = vmatprep.subr.bf16.mxu0 0
        %865 = vmatpush1.bf16.msra.mxu0 0
        %866 = vmatprep.subr.bf16.mxu0 0
        %867 = vmatpush1.bf16.msra.mxu0 0
        %868 = vmatprep.subr.bf16.mxu0 0
        %869 = vmatpush1.bf16.msra.mxu0 0
        %870 = vmatprep.subr.bf16.mxu0 0
        %871 = vmatpush1.bf16.msra.mxu0 0
        %872 = vmatprep.subr.bf16.mxu0 0
        %873 = vmatpush1.bf16.msra.mxu0 0
        %874 = vmatprep.subr.bf16.mxu0 0
        %875 = vmatpush1.bf16.msra.mxu0 0
        %876 = vmatprep.subr.bf16.mxu0 0
        %877 = vmatpush1.bf16.msra.mxu0 0
        %878 = vmatprep.subr.bf16.mxu0 0
        %879 = vmatpush1.bf16.msra.mxu0 0
        %880 = vmatprep.subr.bf16.mxu0 0
        %881 = vmatpush1.bf16.msra.mxu0 0
        %882 = vmatprep.mubr.bf16.mxu0 0
        %883 = vmatmul.mubr.bf16.gmra.mrb[0].mxu0 %v839
        %v884 = vpop.f32.mrb[0].mxu0
        %v885 = vadd.f32 0.0, %v884
        %v886 = vpop.f32.mrb[0].mxu0
        %v887 = vadd.f32 0.0, %v886
        %v888 = vpop.f32.mrb[0].mxu0
        %v889 = vadd.f32 0.0, %v888
        %v890 = vpop.f32.mrb[0].mxu0
        %v891 = vadd.f32 0.0, %v890
        %892 = vdwg.mxu0
        %893 = vmatprep.subr.bf16.mxu0 0
        %894 = vmatpush1.bf16.msra.mxu0 %v848
        %895 = vmatprep.subr.bf16.mxu0 0
        %896 = vmatpush1.bf16.msra.mxu0 0
        %897 = vmatprep.subr.bf16.mxu0 0
        %898 = vmatpush1.bf16.msra.mxu0 0
        %899 = vmatprep.subr.bf16.mxu0 0
        %900 = vmatpush1.bf16.msra.mxu0 0
        %901 = vmatprep.subr.bf16.mxu0 0
        %902 = vmatpush1.bf16.msra.mxu0 0
        %903 = vmatprep.subr.bf16.mxu0 0
        %904 = vmatpush1.bf16.msra.mxu0 0
        %905 = vmatprep.subr.bf16.mxu0 0
        %906 = vmatpush1.bf16.msra.mxu0 0
        %907 = vmatprep.subr.bf16.mxu0 0
        %908 = vmatpush1.bf16.msra.mxu0 0
        %909 = vmatprep.subr.bf16.mxu0 0
        %910 = vmatpush1.bf16.msra.mxu0 0
        %911 = vmatprep.subr.bf16.mxu0 0
        %912 = vmatpush1.bf16.msra.mxu0 0
        %913 = vmatprep.subr.bf16.mxu0 0
        %914 = vmatpush1.bf16.msra.mxu0 0
        %915 = vmatprep.subr.bf16.mxu0 0
        %916 = vmatpush1.bf16.msra.mxu0 0
        %917 = vmatprep.subr.bf16.mxu0 0
        %918 = vmatpush1.bf16.msra.mxu0 0
        %919 = vmatprep.subr.bf16.mxu0 0
        %920 = vmatpush1.bf16.msra.mxu0 0
        %921 = vmatprep.subr.bf16.mxu0 0
        %922 = vmatpush1.bf16.msra.mxu0 0
        %923 = vmatprep.subr.bf16.mxu0 0
        %924 = vmatpush1.bf16.msra.mxu0 0
        %925 = vmatprep.mubr.bf16.mxu0 0
        %926 = vmatmul.mubr.bf16.gmra.mrb[0].mxu0 %v839
        %v927 = vpop.f32.mrb[0].mxu0
        %v928 = vadd.f32 0.0, %v927
        %v929 = vpop.f32.mrb[0].mxu0
        %v930 = vpop.f32.mrb[0].mxu0
        %v931 = vadd.f32 0.0, %v930
        %v932 = vpop.f32.mrb[0].mxu0
        %933 = vdwg.mxu0
        %v934 = vadd.f32 %v797, %v885
        %v935 = vadd.f32 %v798, %v887
        %v936 = vadd.f32 %v799, %v928
        %v937 = vadd.f32 %v800, %v889
        %v938 = vadd.f32 %v801, %v891
        %v939 = vadd.f32 %v802, %v931
        %v940 = vld [vmem:[%s290] sm:$0x3f]
        %s941 = scalar_lea.vmem %s1, 40
        %v942 = vld [vmem:[%s941] sm:$0xf]
        %v943 = vld [vmem:[%s941 + $0x4] sm:$0xf]
        %v946 = vunpack.c.l.b16 %v942
        %v947 = vunpack.c.l.b16 %v943
        %v948 = vpack.c.b16 %v947, %v946
        %v950 = vcombine.high %v940, %v940
        %v952 = vunpack.c.l.s4 1983009808
        %v953 = vunpack.c.0.s8 %v952
        %v954 = vlaneseq
        %v955 = vshrl.u32 %v954, 7
        %v956 = vsub.s32 %v953, %v955
        %v957 = vrot.slane %v940, %v956
        %v959 = vunpack.c.l.s4 1983009808
        %v960 = vunpack.c.0.s8 %v959
        %v961 = vlaneseq
        %v962 = vshrl.u32 %v961, 7
        %v963 = vsub.s32 %v960, %v962
        %v964 = vrot.slane %v950, %v963
        %v965 = vcombine.high %v957, %v957
        %966 = vrot.lane.b32.xlu0 %v957, 108
        %v967 = vpop.permute.xlu0 %966
        %968 = vrot.lane.b32.xlu0 %v965, 108
        %v969 = vpop.permute.xlu0 %968
        %970 = vrot.lane.b32.xlu0 %v964, 108
        %v971 = vpop.permute.xlu0 %970
        %vm972 = vcmask 883712
        %v973 = vsel %vm972, %v967, %v969
        %v974 = vsel %vm972, %v969, %v971
        %v976 = vsel %vm330, %v948, 0
        %v979 = vsel %vm334, %v973, 0
        %v982 = vsel %vm334, %v974, 0
        %v985 = vsel %vm334, %v971, 0
        %987 = vmatprep.subr.bf16.mxu0 %v982
        %988 = vmatpush1.bf16.msra.mxu0 %v979
        %989 = vmatprep.subr.bf16.mxu0 0
        %990 = vmatpush1.bf16.msra.mxu0 0
        %991 = vmatprep.subr.bf16.mxu0 0
        %992 = vmatpush1.bf16.msra.mxu0 0
        %993 = vmatprep.subr.bf16.mxu0 0
        %994 = vmatpush1.bf16.msra.mxu0 0
        %995 = vmatprep.subr.bf16.mxu0 0
        %996 = vmatpush1.bf16.msra.mxu0 0
        %997 = vmatprep.subr.bf16.mxu0 0
        %998 = vmatpush1.bf16.msra.mxu0 0
        %999 = vmatprep.subr.bf16.mxu0 0
        %1000 = vmatpush1.bf16.msra.mxu0 0
        %1001 = vmatprep.subr.bf16.mxu0 0
        %1002 = vmatpush1.bf16.msra.mxu0 0
        %1003 = vmatprep.subr.bf16.mxu0 0
        %1004 = vmatpush1.bf16.msra.mxu0 0
        %1005 = vmatprep.subr.bf16.mxu0 0
        %1006 = vmatpush1.bf16.msra.mxu0 0
        %1007 = vmatprep.subr.bf16.mxu0 0
        %1008 = vmatpush1.bf16.msra.mxu0 0
        %1009 = vmatprep.subr.bf16.mxu0 0
        %1010 = vmatpush1.bf16.msra.mxu0 0
        %1011 = vmatprep.subr.bf16.mxu0 0
        %1012 = vmatpush1.bf16.msra.mxu0 0
        %1013 = vmatprep.subr.bf16.mxu0 0
        %1014 = vmatpush1.bf16.msra.mxu0 0
        %1015 = vmatprep.subr.bf16.mxu0 0
        %1016 = vmatpush1.bf16.msra.mxu0 0
        %1017 = vmatprep.subr.bf16.mxu0 0
        %1018 = vmatpush1.bf16.msra.mxu0 0
        %1019 = vmatprep.mubr.bf16.mxu0 0
        %1020 = vmatmul.mubr.bf16.gmra.mrb[0].mxu0 %v976
        %v1021 = vpop.f32.mrb[0].mxu0
        %v1022 = vadd.f32 0.0, %v1021
        %v1023 = vpop.f32.mrb[0].mxu0
        %v1024 = vadd.f32 0.0, %v1023
        %v1025 = vpop.f32.mrb[0].mxu0
        %v1026 = vadd.f32 0.0, %v1025
        %v1027 = vpop.f32.mrb[0].mxu0
        %v1028 = vadd.f32 0.0, %v1027
        %1029 = vdwg.mxu0
        %1030 = vmatprep.subr.bf16.mxu0 0
        %1031 = vmatpush1.bf16.msra.mxu0 %v985
        %1032 = vmatprep.subr.bf16.mxu0 0
        %1033 = vmatpush1.bf16.msra.mxu0 0
        %1034 = vmatprep.subr.bf16.mxu0 0
        %1035 = vmatpush1.bf16.msra.mxu0 0
        %1036 = vmatprep.subr.bf16.mxu0 0
        %1037 = vmatpush1.bf16.msra.mxu0 0
        %1038 = vmatprep.subr.bf16.mxu0 0
        %1039 = vmatpush1.bf16.msra.mxu0 0
        %1040 = vmatprep.subr.bf16.mxu0 0
        %1041 = vmatpush1.bf16.msra.mxu0 0
        %1042 = vmatprep.subr.bf16.mxu0 0
        %1043 = vmatpush1.bf16.msra.mxu0 0
        %1044 = vmatprep.subr.bf16.mxu0 0
        %1045 = vmatpush1.bf16.msra.mxu0 0
        %1046 = vmatprep.subr.bf16.mxu0 0
        %1047 = vmatpush1.bf16.msra.mxu0 0
        %1048 = vmatprep.subr.bf16.mxu0 0
        %1049 = vmatpush1.bf16.msra.mxu0 0
        %1050 = vmatprep.subr.bf16.mxu0 0
        %1051 = vmatpush1.bf16.msra.mxu0 0
        %1052 = vmatprep.subr.bf16.mxu0 0
        %1053 = vmatpush1.bf16.msra.mxu0 0
        %1054 = vmatprep.subr.bf16.mxu0 0
        %1055 = vmatpush1.bf16.msra.mxu0 0
        %1056 = vmatprep.subr.bf16.mxu0 0
        %1057 = vmatpush1.bf16.msra.mxu0 0
        %1058 = vmatprep.subr.bf16.mxu0 0
        %1059 = vmatpush1.bf16.msra.mxu0 0
        %1060 = vmatprep.subr.bf16.mxu0 0
        %1061 = vmatpush1.bf16.msra.mxu0 0
        %1062 = vmatprep.mubr.bf16.mxu0 0
        %1063 = vmatmul.mubr.bf16.gmra.mrb[0].mxu0 %v976
        %v1064 = vpop.f32.mrb[0].mxu0
        %v1065 = vadd.f32 0.0, %v1064
        %v1066 = vpop.f32.mrb[0].mxu0
        %v1067 = vpop.f32.mrb[0].mxu0
        %v1068 = vadd.f32 0.0, %v1067
        %v1069 = vpop.f32.mrb[0].mxu0
        %1070 = vdwg.mxu0
        %v1071 = vadd.f32 %v934, %v1022
        %v1072 = vadd.f32 %v935, %v1024
        %v1073 = vadd.f32 %v936, %v1065
        %v1074 = vadd.f32 %v937, %v1026
        %v1075 = vadd.f32 %v938, %v1028
        %v1076 = vadd.f32 %v939, %v1068
        %v1077 = vld [vmem:[%s290] sm:$0x3f]
        %s1078 = scalar_lea.vmem %s1, 48
        %v1079 = vld [vmem:[%s1078] sm:$0xf]
        %v1080 = vld [vmem:[%s1078 + $0x4] sm:$0xf]
        %v1083 = vunpack.c.l.b16 %v1079
        %v1084 = vunpack.c.l.b16 %v1080
        %v1085 = vpack.c.b16 %v1084, %v1083
        %v1087 = vcombine.high %v1077, %v1077
        %v1089 = vunpack.c.l.s4 1983009808
        %v1090 = vunpack.c.0.s8 %v1089
        %v1091 = vlaneseq
        %v1092 = vshrl.u32 %v1091, 7
        %v1093 = vsub.s32 %v1090, %v1092
        %v1094 = vrot.slane %v1077, %v1093
        %v1096 = vunpack.c.l.s4 1983009808
        %v1097 = vunpack.c.0.s8 %v1096
        %v1098 = vlaneseq
        %v1099 = vshrl.u32 %v1098, 7
        %v1100 = vsub.s32 %v1097, %v1099
        %v1101 = vrot.slane %v1087, %v1100
        %v1102 = vcombine.high %v1094, %v1094
        %1103 = vrot.lane.b32.xlu0 %v1094, 92
        %v1104 = vpop.permute.xlu0 %1103
        %1105 = vrot.lane.b32.xlu0 %v1102, 92
        %v1106 = vpop.permute.xlu0 %1105
        %1107 = vrot.lane.b32.xlu0 %v1101, 92
        %v1108 = vpop.permute.xlu0 %1107
        %vm1109 = vcmask 752640
        %v1110 = vsel %vm1109, %v1104, %v1106
        %v1111 = vsel %vm1109, %v1106, %v1108
        %v1113 = vsel %vm330, %v1085, 0
        %v1116 = vsel %vm334, %v1110, 0
        %v1119 = vsel %vm334, %v1111, 0
        %v1122 = vsel %vm334, %v1108, 0
        %1124 = vmatprep.subr.bf16.mxu0 %v1119
        %1125 = vmatpush1.bf16.msra.mxu0 %v1116
        %1126 = vmatprep.subr.bf16.mxu0 0
        %1127 = vmatpush1.bf16.msra.mxu0 0
        %1128 = vmatprep.subr.bf16.mxu0 0
        %1129 = vmatpush1.bf16.msra.mxu0 0
        %1130 = vmatprep.subr.bf16.mxu0 0
        %1131 = vmatpush1.bf16.msra.mxu0 0
        %1132 = vmatprep.subr.bf16.mxu0 0
        %1133 = vmatpush1.bf16.msra.mxu0 0
        %1134 = vmatprep.subr.bf16.mxu0 0
        %1135 = vmatpush1.bf16.msra.mxu0 0
        %1136 = vmatprep.subr.bf16.mxu0 0
        %1137 = vmatpush1.bf16.msra.mxu0 0
        %1138 = vmatprep.subr.bf16.mxu0 0
        %1139 = vmatpush1.bf16.msra.mxu0 0
        %1140 = vmatprep.subr.bf16.mxu0 0
        %1141 = vmatpush1.bf16.msra.mxu0 0
        %1142 = vmatprep.subr.bf16.mxu0 0
        %1143 = vmatpush1.bf16.msra.mxu0 0
        %1144 = vmatprep.subr.bf16.mxu0 0
        %1145 = vmatpush1.bf16.msra.mxu0 0
        %1146 = vmatprep.subr.bf16.mxu0 0
        %1147 = vmatpush1.bf16.msra.mxu0 0
        %1148 = vmatprep.subr.bf16.mxu0 0
        %1149 = vmatpush1.bf16.msra.mxu0 0
        %1150 = vmatprep.subr.bf16.mxu0 0
        %1151 = vmatpush1.bf16.msra.mxu0 0
        %1152 = vmatprep.subr.bf16.mxu0 0
        %1153 = vmatpush1.bf16.msra.mxu0 0
        %1154 = vmatprep.subr.bf16.mxu0 0
        %1155 = vmatpush1.bf16.msra.mxu0 0
        %1156 = vmatprep.mubr.bf16.mxu0 0
        %1157 = vmatmul.mubr.bf16.gmra.mrb[0].mxu0 %v1113
        %v1158 = vpop.f32.mrb[0].mxu0
        %v1159 = vadd.f32 0.0, %v1158
        %v1160 = vpop.f32.mrb[0].mxu0
        %v1161 = vadd.f32 0.0, %v1160
        %v1162 = vpop.f32.mrb[0].mxu0
        %v1163 = vadd.f32 0.0, %v1162
        %v1164 = vpop.f32.mrb[0].mxu0
        %v1165 = vadd.f32 0.0, %v1164
        %1166 = vdwg.mxu0
        %1167 = vmatprep.subr.bf16.mxu0 0
        %1168 = vmatpush1.bf16.msra.mxu0 %v1122
        %1169 = vmatprep.subr.bf16.mxu0 0
        %1170 = vmatpush1.bf16.msra.mxu0 0
        %1171 = vmatprep.subr.bf16.mxu0 0
        %1172 = vmatpush1.bf16.msra.mxu0 0
        %1173 = vmatprep.subr.bf16.mxu0 0
        %1174 = vmatpush1.bf16.msra.mxu0 0
        %1175 = vmatprep.subr.bf16.mxu0 0
        %1176 = vmatpush1.bf16.msra.mxu0 0
        %1177 = vmatprep.subr.bf16.mxu0 0
        %1178 = vmatpush1.bf16.msra.mxu0 0
        %1179 = vmatprep.subr.bf16.mxu0 0
        %1180 = vmatpush1.bf16.msra.mxu0 0
        %1181 = vmatprep.subr.bf16.mxu0 0
        %1182 = vmatpush1.bf16.msra.mxu0 0
        %1183 = vmatprep.subr.bf16.mxu0 0
        %1184 = vmatpush1.bf16.msra.mxu0 0
        %1185 = vmatprep.subr.bf16.mxu0 0
        %1186 = vmatpush1.bf16.msra.mxu0 0
        %1187 = vmatprep.subr.bf16.mxu0 0
        %1188 = vmatpush1.bf16.msra.mxu0 0
        %1189 = vmatprep.subr.bf16.mxu0 0
        %1190 = vmatpush1.bf16.msra.mxu0 0
        %1191 = vmatprep.subr.bf16.mxu0 0
        %1192 = vmatpush1.bf16.msra.mxu0 0
        %1193 = vmatprep.subr.bf16.mxu0 0
        %1194 = vmatpush1.bf16.msra.mxu0 0
        %1195 = vmatprep.subr.bf16.mxu0 0
        %1196 = vmatpush1.bf16.msra.mxu0 0
        %1197 = vmatprep.subr.bf16.mxu0 0
        %1198 = vmatpush1.bf16.msra.mxu0 0
        %1199 = vmatprep.mubr.bf16.mxu0 0
        %1200 = vmatmul.mubr.bf16.gmra.mrb[0].mxu0 %v1113
        %v1201 = vpop.f32.mrb[0].mxu0
        %v1202 = vadd.f32 0.0, %v1201
        %v1203 = vpop.f32.mrb[0].mxu0
        %v1204 = vpop.f32.mrb[0].mxu0
        %v1205 = vadd.f32 0.0, %v1204
        %v1206 = vpop.f32.mrb[0].mxu0
        %1207 = vdwg.mxu0
        %v1208 = vadd.f32 %v1071, %v1159
        %v1209 = vadd.f32 %v1072, %v1161
        %v1210 = vadd.f32 %v1073, %v1202
        %v1211 = vadd.f32 %v1074, %v1163
        %v1212 = vadd.f32 %v1075, %v1165
        %v1213 = vadd.f32 %v1076, %v1205
        %v1214 = vld [vmem:[%s290] sm:$0x3f]
        %s1215 = scalar_lea.vmem %s1, 56
        %v1216 = vld [vmem:[%s1215] sm:$0xf]
        %v1217 = vld [vmem:[%s1215 + $0x4] sm:$0xf]
        %v1220 = vunpack.c.l.b16 %v1216
        %v1221 = vunpack.c.l.b16 %v1217
        %v1222 = vpack.c.b16 %v1221, %v1220
        %v1224 = vcombine.high %v1214, %v1214
        %v1226 = vunpack.c.l.s4 1983009808
        %v1227 = vunpack.c.0.s8 %v1226
        %v1228 = vlaneseq
        %v1229 = vshrl.u32 %v1228, 7
        %v1230 = vsub.s32 %v1227, %v1229
        %v1231 = vrot.slane %v1214, %v1230
        %v1233 = vunpack.c.l.s4 1983009808
        %v1234 = vunpack.c.0.s8 %v1233
        %v1235 = vlaneseq
        %v1236 = vshrl.u32 %v1235, 7
        %v1237 = vsub.s32 %v1234, %v1236
        %v1238 = vrot.slane %v1224, %v1237
        %v1239 = vcombine.high %v1231, %v1231
        %1240 = vrot.lane.b32.xlu0 %v1231, 91
        %v1241 = vpop.permute.xlu0 %1240
        %1242 = vrot.lane.b32.xlu0 %v1239, 91
        %v1243 = vpop.permute.xlu0 %1242
        %1244 = vrot.lane.b32.xlu0 %v1238, 91
        %v1245 = vpop.permute.xlu0 %1244
        %vm1246 = vcmask 744448
        %v1247 = vsel %vm1246, %v1241, %v1243
        %v1248 = vsel %vm1246, %v1243, %v1245
        %v1250 = vsel %vm330, %v1222, 0
        %v1253 = vsel %vm334, %v1247, 0
        %v1256 = vsel %vm334, %v1248, 0
        %v1259 = vsel %vm334, %v1245, 0
        %1261 = vmatprep.subr.bf16.mxu0 %v1256
        %1262 = vmatpush1.bf16.msra.mxu0 %v1253
        %1263 = vmatprep.subr.bf16.mxu0 0
        %1264 = vmatpush1.bf16.msra.mxu0 0
        %1265 = vmatprep.subr.bf16.mxu0 0
        %1266 = vmatpush1.bf16.msra.mxu0 0
        %1267 = vmatprep.subr.bf16.mxu0 0
        %1268 = vmatpush1.bf16.msra.mxu0 0
        %1269 = vmatprep.subr.bf16.mxu0 0
        %1270 = vmatpush1.bf16.msra.mxu0 0
        %1271 = vmatprep.subr.bf16.mxu0 0
        %1272 = vmatpush1.bf16.msra.mxu0 0
        %1273 = vmatprep.subr.bf16.mxu0 0
        %1274 = vmatpush1.bf16.msra.mxu0 0
        %1275 = vmatprep.subr.bf16.mxu0 0
        %1276 = vmatpush1.bf16.msra.mxu0 0
        %1277 = vmatprep.subr.bf16.mxu0 0
        %1278 = vmatpush1.bf16.msra.mxu0 0
        %1279 = vmatprep.subr.bf16.mxu0 0
        %1280 = vmatpush1.bf16.msra.mxu0 0
        %1281 = vmatprep.subr.bf16.mxu0 0
        %1282 = vmatpush1.bf16.msra.mxu0 0
        %1283 = vmatprep.subr.bf16.mxu0 0
        %1284 = vmatpush1.bf16.msra.mxu0 0
        %1285 = vmatprep.subr.bf16.mxu0 0
        %1286 = vmatpush1.bf16.msra.mxu0 0
        %1287 = vmatprep.subr.bf16.mxu0 0
        %1288 = vmatpush1.bf16.msra.mxu0 0
        %1289 = vmatprep.subr.bf16.mxu0 0
        %1290 = vmatpush1.bf16.msra.mxu0 0
        %1291 = vmatprep.subr.bf16.mxu0 0
        %1292 = vmatpush1.bf16.msra.mxu0 0
        %1293 = vmatprep.mubr.bf16.mxu0 0
        %1294 = vmatmul.mubr.bf16.gmra.mrb[0].mxu0 %v1250
        %v1295 = vpop.f32.mrb[0].mxu0
        %v1296 = vadd.f32 0.0, %v1295
        %v1297 = vpop.f32.mrb[0].mxu0
        %v1298 = vadd.f32 0.0, %v1297
        %v1299 = vpop.f32.mrb[0].mxu0
        %v1300 = vadd.f32 0.0, %v1299
        %v1301 = vpop.f32.mrb[0].mxu0
        %v1302 = vadd.f32 0.0, %v1301
        %1303 = vdwg.mxu0
        %1304 = vmatprep.subr.bf16.mxu0 0
        %1305 = vmatpush1.bf16.msra.mxu0 %v1259
        %1306 = vmatprep.subr.bf16.mxu0 0
        %1307 = vmatpush1.bf16.msra.mxu0 0
        %1308 = vmatprep.subr.bf16.mxu0 0
        %1309 = vmatpush1.bf16.msra.mxu0 0
        %1310 = vmatprep.subr.bf16.mxu0 0
        %1311 = vmatpush1.bf16.msra.mxu0 0
        %1312 = vmatprep.subr.bf16.mxu0 0
        %1313 = vmatpush1.bf16.msra.mxu0 0
        %1314 = vmatprep.subr.bf16.mxu0 0
        %1315 = vmatpush1.bf16.msra.mxu0 0
        %1316 = vmatprep.subr.bf16.mxu0 0
        %1317 = vmatpush1.bf16.msra.mxu0 0
        %1318 = vmatprep.subr.bf16.mxu0 0
        %1319 = vmatpush1.bf16.msra.mxu0 0
        %1320 = vmatprep.subr.bf16.mxu0 0
        %1321 = vmatpush1.bf16.msra.mxu0 0
        %1322 = vmatprep.subr.bf16.mxu0 0
        %1323 = vmatpush1.bf16.msra.mxu0 0
        %1324 = vmatprep.subr.bf16.mxu0 0
        %1325 = vmatpush1.bf16.msra.mxu0 0
        %1326 = vmatprep.subr.bf16.mxu0 0
        %1327 = vmatpush1.bf16.msra.mxu0 0
        %1328 = vmatprep.subr.bf16.mxu0 0
        %1329 = vmatpush1.bf16.msra.mxu0 0
        %1330 = vmatprep.subr.bf16.mxu0 0
        %1331 = vmatpush1.bf16.msra.mxu0 0
        %1332 = vmatprep.subr.bf16.mxu0 0
        %1333 = vmatpush1.bf16.msra.mxu0 0
        %1334 = vmatprep.subr.bf16.mxu0 0
        %1335 = vmatpush1.bf16.msra.mxu0 0
        %1336 = vmatprep.mubr.bf16.mxu0 0
        %1337 = vmatmul.mubr.bf16.gmra.mrb[0].mxu0 %v1250
        %v1338 = vpop.f32.mrb[0].mxu0
        %v1339 = vadd.f32 0.0, %v1338
        %v1340 = vpop.f32.mrb[0].mxu0
        %v1341 = vpop.f32.mrb[0].mxu0
        %v1342 = vadd.f32 0.0, %v1341
        %v1343 = vpop.f32.mrb[0].mxu0
        %1344 = vdwg.mxu0
        %v1345 = vadd.f32 %v1208, %v1296
        %v1346 = vadd.f32 %v1209, %v1298
        %v1347 = vadd.f32 %v1210, %v1339
        %v1348 = vadd.f32 %v1211, %v1300
        %v1349 = vadd.f32 %v1212, %v1302
        %v1350 = vadd.f32 %v1213, %v1342
        %v1351 = vld [vmem:[%s290] sm:$0x3f]
        %s1352 = scalar_lea.vmem %s1, 64
        %v1353 = vld [vmem:[%s1352] sm:$0xf]
        %v1354 = vld [vmem:[%s1352 + $0x4] sm:$0xf]
        %v1357 = vunpack.c.l.b16 %v1353
        %v1358 = vunpack.c.l.b16 %v1354
        %v1359 = vpack.c.b16 %v1358, %v1357
        %v1361 = vcombine.high %v1351, %v1351
        %v1363 = vunpack.c.l.s4 1983009808
        %v1364 = vunpack.c.0.s8 %v1363
        %v1365 = vlaneseq
        %v1366 = vshrl.u32 %v1365, 7
        %v1367 = vsub.s32 %v1364, %v1366
        %v1368 = vrot.slane %v1351, %v1367
        %v1370 = vunpack.c.l.s4 1983009808
        %v1371 = vunpack.c.0.s8 %v1370
        %v1372 = vlaneseq
        %v1373 = vshrl.u32 %v1372, 7
        %v1374 = vsub.s32 %v1371, %v1373
        %v1375 = vrot.slane %v1361, %v1374
        %v1376 = vcombine.high %v1368, %v1368
        %1377 = vrot.lane.b32.xlu0 %v1368, 90
        %v1378 = vpop.permute.xlu0 %1377
        %1379 = vrot.lane.b32.xlu0 %v1376, 90
        %v1380 = vpop.permute.xlu0 %1379
        %1381 = vrot.lane.b32.xlu0 %v1375, 90
        %v1382 = vpop.permute.xlu0 %1381
        %vm1383 = vcmask 736256
        %v1384 = vsel %vm1383, %v1378, %v1380
        %v1385 = vsel %vm1383, %v1380, %v1382
        %v1387 = vsel %vm330, %v1359, 0
        %v1390 = vsel %vm334, %v1384, 0
        %v1393 = vsel %vm334, %v1385, 0
        %v1396 = vsel %vm334, %v1382, 0
        %1398 = vmatprep.subr.bf16.mxu0 %v1393
        %1399 = vmatpush1.bf16.msra.mxu0 %v1390
        %1400 = vmatprep.subr.bf16.mxu0 0
        %1401 = vmatpush1.bf16.msra.mxu0 0
        %1402 = vmatprep.subr.bf16.mxu0 0
        %1403 = vmatpush1.bf16.msra.mxu0 0
        %1404 = vmatprep.subr.bf16.mxu0 0
        %1405 = vmatpush1.bf16.msra.mxu0 0
        %1406 = vmatprep.subr.bf16.mxu0 0
        %1407 = vmatpush1.bf16.msra.mxu0 0
        %1408 = vmatprep.subr.bf16.mxu0 0
        %1409 = vmatpush1.bf16.msra.mxu0 0
        %1410 = vmatprep.subr.bf16.mxu0 0
        %1411 = vmatpush1.bf16.msra.mxu0 0
        %1412 = vmatprep.subr.bf16.mxu0 0
        %1413 = vmatpush1.bf16.msra.mxu0 0
        %1414 = vmatprep.subr.bf16.mxu0 0
        %1415 = vmatpush1.bf16.msra.mxu0 0
        %1416 = vmatprep.subr.bf16.mxu0 0
        %1417 = vmatpush1.bf16.msra.mxu0 0
        %1418 = vmatprep.subr.bf16.mxu0 0
        %1419 = vmatpush1.bf16.msra.mxu0 0
        %1420 = vmatprep.subr.bf16.mxu0 0
        %1421 = vmatpush1.bf16.msra.mxu0 0
        %1422 = vmatprep.subr.bf16.mxu0 0
        %1423 = vmatpush1.bf16.msra.mxu0 0
        %1424 = vmatprep.subr.bf16.mxu0 0
        %1425 = vmatpush1.bf16.msra.mxu0 0
        %1426 = vmatprep.subr.bf16.mxu0 0
        %1427 = vmatpush1.bf16.msra.mxu0 0
        %1428 = vmatprep.subr.bf16.mxu0 0
        %1429 = vmatpush1.bf16.msra.mxu0 0
        %1430 = vmatprep.mubr.bf16.mxu0 0
        %1431 = vmatmul.mubr.bf16.gmra.mrb[0].mxu0 %v1387
        %v1432 = vpop.f32.mrb[0].mxu0
        %v1433 = vadd.f32 0.0, %v1432
        %v1434 = vpop.f32.mrb[0].mxu0
        %v1435 = vadd.f32 0.0, %v1434
        %v1436 = vpop.f32.mrb[0].mxu0
        %v1437 = vadd.f32 0.0, %v1436
        %v1438 = vpop.f32.mrb[0].mxu0
        %v1439 = vadd.f32 0.0, %v1438
        %1440 = vdwg.mxu0
        %1441 = vmatprep.subr.bf16.mxu0 0
        %1442 = vmatpush1.bf16.msra.mxu0 %v1396
        %1443 = vmatprep.subr.bf16.mxu0 0
        %1444 = vmatpush1.bf16.msra.mxu0 0
        %1445 = vmatprep.subr.bf16.mxu0 0
        %1446 = vmatpush1.bf16.msra.mxu0 0
        %1447 = vmatprep.subr.bf16.mxu0 0
        %1448 = vmatpush1.bf16.msra.mxu0 0
        %1449 = vmatprep.subr.bf16.mxu0 0
        %1450 = vmatpush1.bf16.msra.mxu0 0
        %1451 = vmatprep.subr.bf16.mxu0 0
        %1452 = vmatpush1.bf16.msra.mxu0 0
        %1453 = vmatprep.subr.bf16.mxu0 0
        %1454 = vmatpush1.bf16.msra.mxu0 0
        %1455 = vmatprep.subr.bf16.mxu0 0
        %1456 = vmatpush1.bf16.msra.mxu0 0
        %1457 = vmatprep.subr.bf16.mxu0 0
        %1458 = vmatpush1.bf16.msra.mxu0 0
        %1459 = vmatprep.subr.bf16.mxu0 0
        %1460 = vmatpush1.bf16.msra.mxu0 0
        %1461 = vmatprep.subr.bf16.mxu0 0
        %1462 = vmatpush1.bf16.msra.mxu0 0
        %1463 = vmatprep.subr.bf16.mxu0 0
        %1464 = vmatpush1.bf16.msra.mxu0 0
        %1465 = vmatprep.subr.bf16.mxu0 0
        %1466 = vmatpush1.bf16.msra.mxu0 0
        %1467 = vmatprep.subr.bf16.mxu0 0
        %1468 = vmatpush1.bf16.msra.mxu0 0
        %1469 = vmatprep.subr.bf16.mxu0 0
        %1470 = vmatpush1.bf16.msra.mxu0 0
        %1471 = vmatprep.subr.bf16.mxu0 0
        %1472 = vmatpush1.bf16.msra.mxu0 0
        %1473 = vmatprep.mubr.bf16.mxu0 0
        %1474 = vmatmul.mubr.bf16.gmra.mrb[0].mxu0 %v1387
        %v1475 = vpop.f32.mrb[0].mxu0
        %v1476 = vadd.f32 0.0, %v1475
        %v1477 = vpop.f32.mrb[0].mxu0
        %v1478 = vpop.f32.mrb[0].mxu0
        %v1479 = vadd.f32 0.0, %v1478
        %v1480 = vpop.f32.mrb[0].mxu0
        %1481 = vdwg.mxu0
        %v1482 = vadd.f32 %v1345, %v1433
        %v1483 = vadd.f32 %v1346, %v1435
        %v1484 = vadd.f32 %v1347, %v1476
        %v1485 = vadd.f32 %v1348, %v1437
        %v1486 = vadd.f32 %v1349, %v1439
        %v1487 = vadd.f32 %v1350, %v1479
        %v1488 = vld [vmem:[%s2] sm:$0xff]
        %v1489 = vld [vmem:[%s2 + $0x8] sm:$0xff]
        %1491 = vset.pattern.permute.xlu0 0
        %1492 = vperm.xlu0 %1491, %v1488
        %v1493 = vpop.permute.xlu0 %1492
        %1496 = vset.pattern.permute.xlu0 0
        %1497 = vperm.xlu0 %1496, %v1489
        %v1498 = vpop.permute.xlu0 %1497
        %v1500 = vadd.f32 %v1482, %v1493
        %v1501 = vadd.f32 %v1483, %v1493
        %v1502 = vadd.f32 %v1484, %v1493
        %v1503 = vadd.f32 %v1485, %v1498
        %v1504 = vadd.f32 %v1486, %v1498
        %v1505 = vadd.f32 %v1487, %v1498
        %v1506 = vmax.f32 %v1500, 0.0
        %v1507 = vmax.f32 %v1501, 0.0
        %v1508 = vmax.f32 %v1502, 0.0
        %v1509 = vmax.f32 %v1503, 0.0
        %v1510 = vmax.f32 %v1504, 0.0
        %v1511 = vmax.f32 %v1505, 0.0
        %v1512 = vpack.c.bf16 %v1509, %v1506
        %v1513 = vpack.c.bf16 %v1510, %v1507
        %v1514 = vpack.c.bf16 %v1511, %v1508
        %v1515 = vld [vmem:[%s3] sm:$0xf]
        %v1516 = vld [vmem:[%s3 + $0x4] sm:$0xf]
        %v1517 = vld [vmem:[%s3 + $0x8] sm:$0xf]
        %v1518 = vld [vmem:[%s3 + $0xc] sm:$0xf]
        %v1519 = vld [vmem:[%s4] sm:$0xff]
        %v1520 = vld [vmem:[%s4 + $0x8] sm:$0xff]
        %v1521 = vld [vmem:[%s4 + $0x10] sm:$0xff]
        %v1522 = vld [vmem:[%s4 + $0x18] sm:$0xff]
        %1524 = vset.pattern.permute.xlu0 0
        %1525 = vperm.xlu0 %1524, %v1519
        %v1526 = vpop.permute.xlu0 %1525
        %1529 = vset.pattern.permute.xlu0 0
        %1530 = vperm.xlu0 %1529, %v1520
        %v1531 = vpop.permute.xlu0 %1530
        %1534 = vset.pattern.permute.xlu0 0
        %1535 = vperm.xlu0 %1534, %v1521
        %v1536 = vpop.permute.xlu0 %1535
        %1539 = vset.pattern.permute.xlu0 0
        %1540 = vperm.xlu0 %1539, %v1522
        %v1541 = vpop.permute.xlu0 %1540
        %v1547 = vunpack.c.l.b16 %v1515
        %v1548 = vunpack.c.l.b16 %v1516
        %v1549 = vunpack.c.l.b16 %v1517
        %v1550 = vunpack.c.l.b16 %v1518
        %v1551 = vpack.c.b16 %v1548, %v1547
        %v1552 = vpack.c.b16 %v1550, %v1549
        %vm1553 = vcmask 130048
        %v1555 = vsel %vm1553, %v1551, 0
        %v1558 = vsel %vm1553, %v1552, 0
        %1560 = vmatprep.subr.bf16.mxu0 %v1513
        %1561 = vmatpush1.bf16.msra.mxu0 %v1512
        %1562 = vmatprep.subr.bf16.mxu0 0
        %1563 = vmatpush1.bf16.msra.mxu0 0
        %1564 = vmatprep.subr.bf16.mxu0 0
        %1565 = vmatpush1.bf16.msra.mxu0 0
        %1566 = vmatprep.subr.bf16.mxu0 0
        %1567 = vmatpush1.bf16.msra.mxu0 0
        %1568 = vmatprep.subr.bf16.mxu0 0
        %1569 = vmatpush1.bf16.msra.mxu0 0
        %1570 = vmatprep.subr.bf16.mxu0 0
        %1571 = vmatpush1.bf16.msra.mxu0 0
        %1572 = vmatprep.subr.bf16.mxu0 0
        %1573 = vmatpush1.bf16.msra.mxu0 0
        %1574 = vmatprep.subr.bf16.mxu0 0
        %1575 = vmatpush1.bf16.msra.mxu0 0
        %1576 = vmatprep.subr.bf16.mxu0 0
        %1577 = vmatpush1.bf16.msra.mxu0 0
        %1578 = vmatprep.subr.bf16.mxu0 0
        %1579 = vmatpush1.bf16.msra.mxu0 0
        %1580 = vmatprep.subr.bf16.mxu0 0
        %1581 = vmatpush1.bf16.msra.mxu0 0
        %1582 = vmatprep.subr.bf16.mxu0 0
        %1583 = vmatpush1.bf16.msra.mxu0 0
        %1584 = vmatprep.subr.bf16.mxu0 0
        %1585 = vmatpush1.bf16.msra.mxu0 0
        %1586 = vmatprep.subr.bf16.mxu0 0
        %1587 = vmatpush1.bf16.msra.mxu0 0
        %1588 = vmatprep.subr.bf16.mxu0 0
        %1589 = vmatpush1.bf16.msra.mxu0 0
        %1590 = vmatprep.subr.bf16.mxu0 0
        %1591 = vmatpush1.bf16.msra.mxu0 0
        %1592 = vmatprep.mubr.bf16.mxu0 0
        %1593 = vmatmul.mubr.bf16.gmra.mrb[0].mxu0 %v1555
        %v1594 = vpop.f32.mrb[0].mxu0
        %v1595 = vadd.f32 %v1526, %v1594
        %v1596 = vpop.f32.mrb[0].mxu0
        %v1597 = vadd.f32 %v1526, %v1596
        %v1598 = vpop.f32.mrb[0].mxu0
        %v1599 = vadd.f32 %v1531, %v1598
        %v1600 = vpop.f32.mrb[0].mxu0
        %v1601 = vadd.f32 %v1531, %v1600
        %1602 = vmatprep.mubr.bf16.mxu0 0
        %1603 = vmatmul.mubr.bf16.gmra.mrb[0].mxu0 %v1558
        %v1604 = vpop.f32.mrb[0].mxu0
        %v1605 = vadd.f32 %v1536, %v1604
        %v1606 = vpop.f32.mrb[0].mxu0
        %v1607 = vadd.f32 %v1536, %v1606
        %v1608 = vpop.f32.mrb[0].mxu0
        %v1609 = vadd.f32 %v1541, %v1608
        %v1610 = vpop.f32.mrb[0].mxu0
        %v1611 = vadd.f32 %v1541, %v1610
        %1612 = vdwg.mxu0
        %1613 = vmatprep.subr.bf16.mxu0 0
        %1614 = vmatpush1.bf16.msra.mxu0 %v1514
        %1615 = vmatprep.subr.bf16.mxu0 0
        %1616 = vmatpush1.bf16.msra.mxu0 0
        %1617 = vmatprep.subr.bf16.mxu0 0
        %1618 = vmatpush1.bf16.msra.mxu0 0
        %1619 = vmatprep.subr.bf16.mxu0 0
        %1620 = vmatpush1.bf16.msra.mxu0 0
        %1621 = vmatprep.subr.bf16.mxu0 0
        %1622 = vmatpush1.bf16.msra.mxu0 0
        %1623 = vmatprep.subr.bf16.mxu0 0
        %1624 = vmatpush1.bf16.msra.mxu0 0
        %1625 = vmatprep.subr.bf16.mxu0 0
        %1626 = vmatpush1.bf16.msra.mxu0 0
        %1627 = vmatprep.subr.bf16.mxu0 0
        %1628 = vmatpush1.bf16.msra.mxu0 0
        %1629 = vmatprep.subr.bf16.mxu0 0
        %1630 = vmatpush1.bf16.msra.mxu0 0
        %1631 = vmatprep.subr.bf16.mxu0 0
        %1632 = vmatpush1.bf16.msra.mxu0 0
        %1633 = vmatprep.subr.bf16.mxu0 0
        %1634 = vmatpush1.bf16.msra.mxu0 0
        %1635 = vmatprep.subr.bf16.mxu0 0
        %1636 = vmatpush1.bf16.msra.mxu0 0
        %1637 = vmatprep.subr.bf16.mxu0 0
        %1638 = vmatpush1.bf16.msra.mxu0 0
        %1639 = vmatprep.subr.bf16.mxu0 0
        %1640 = vmatpush1.bf16.msra.mxu0 0
        %1641 = vmatprep.subr.bf16.mxu0 0
        %1642 = vmatpush1.bf16.msra.mxu0 0
        %1643 = vmatprep.subr.bf16.mxu0 0
        %1644 = vmatpush1.bf16.msra.mxu0 0
        %1645 = vmatprep.mubr.bf16.mxu0 0
        %1646 = vmatmul.mubr.bf16.gmra.mrb[0].mxu0 %v1555
        %v1647 = vpop.f32.mrb[0].mxu0
        %v1648 = vadd.f32 %v1526, %v1647
        %v1649 = vpop.f32.mrb[0].mxu0
        %v1650 = vpop.f32.mrb[0].mxu0
        %v1651 = vadd.f32 %v1531, %v1650
        %v1652 = vpop.f32.mrb[0].mxu0
        %1653 = vmatprep.mubr.bf16.mxu0 0
        %1654 = vmatmul.mubr.bf16.gmra.mrb[0].mxu0 %v1558
        %v1655 = vpop.f32.mrb[0].mxu0
        %v1656 = vadd.f32 %v1536, %v1655
        %v1657 = vpop.f32.mrb[0].mxu0
        %v1658 = vpop.f32.mrb[0].mxu0
        %v1659 = vadd.f32 %v1541, %v1658
        %v1660 = vpop.f32.mrb[0].mxu0
        %1661 = vdwg.mxu0
        %v1662 = vmax.f32 %v1595, 0.0
        %v1663 = vmax.f32 %v1597, 0.0
        %v1664 = vmax.f32 %v1648, 0.0
        %v1665 = vmax.f32 %v1599, 0.0
        %v1666 = vmax.f32 %v1601, 0.0
        %v1667 = vmax.f32 %v1651, 0.0
        %v1668 = vmax.f32 %v1605, 0.0
        %v1669 = vmax.f32 %v1607, 0.0
        %v1670 = vmax.f32 %v1656, 0.0
        %v1671 = vmax.f32 %v1609, 0.0
        %v1672 = vmax.f32 %v1611, 0.0
        %v1673 = vmax.f32 %v1659, 0.0
        %v1674 = vpack.c.bf16 %v1665, %v1662
        %v1675 = vpack.c.bf16 %v1666, %v1663
        %v1676 = vpack.c.bf16 %v1667, %v1664
        %v1677 = vpack.c.bf16 %v1671, %v1668
        %v1678 = vpack.c.bf16 %v1672, %v1669
        %v1679 = vpack.c.bf16 %v1673, %v1670
        %v1680 = vld [vmem:[%s5] sm:$0xf]
        %v1681 = vld [vmem:[%s6] sm:$0xff]
        %1683 = vset.pattern.permute.xlu0 0
        %1684 = vperm.xlu0 %1683, %v1681
        %v1685 = vpop.permute.xlu0 %1684
        %vm1687 = vcmask 261120
        %v1689 = vsel %vm1687, %v1680, 0
        %1691 = vmatprep.subr.bf16.mxu0 %v1675
        %1692 = vmatpush1.bf16.msra.mxu0 %v1674
        %1693 = vmatprep.subr.bf16.mxu0 %v1678
        %1694 = vmatpush1.bf16.msra.mxu0 %v1677
        %1695 = vmatprep.subr.bf16.mxu0 0
        %1696 = vmatpush1.bf16.msra.mxu0 0
        %1697 = vmatprep.subr.bf16.mxu0 0
        %1698 = vmatpush1.bf16.msra.mxu0 0
        %1699 = vmatprep.subr.bf16.mxu0 0
        %1700 = vmatpush1.bf16.msra.mxu0 0
        %1701 = vmatprep.subr.bf16.mxu0 0
        %1702 = vmatpush1.bf16.msra.mxu0 0
        %1703 = vmatprep.subr.bf16.mxu0 0
        %1704 = vmatpush1.bf16.msra.mxu0 0
        %1705 = vmatprep.subr.bf16.mxu0 0
        %1706 = vmatpush1.bf16.msra.mxu0 0
        %1707 = vmatprep.subr.bf16.mxu0 0
        %1708 = vmatpush1.bf16.msra.mxu0 0
        %1709 = vmatprep.subr.bf16.mxu0 0
        %1710 = vmatpush1.bf16.msra.mxu0 0
        %1711 = vmatprep.subr.bf16.mxu0 0
        %1712 = vmatpush1.bf16.msra.mxu0 0
        %1713 = vmatprep.subr.bf16.mxu0 0
        %1714 = vmatpush1.bf16.msra.mxu0 0
        %1715 = vmatprep.subr.bf16.mxu0 0
        %1716 = vmatpush1.bf16.msra.mxu0 0
        %1717 = vmatprep.subr.bf16.mxu0 0
        %1718 = vmatpush1.bf16.msra.mxu0 0
        %1719 = vmatprep.subr.bf16.mxu0 0
        %1720 = vmatpush1.bf16.msra.mxu0 0
        %1721 = vmatprep.subr.bf16.mxu0 0
        %1722 = vmatpush1.bf16.msra.mxu0 0
        %1723 = vmatprep.mubr.bf16.mxu0 0
        %1724 = vmatmul.mubr.bf16.gmra.mrb[0].mxu0 %v1689
        %v1725 = vpop.f32.mrb[0].mxu0
        %v1726 = vadd.f32 %v1685, %v1725
        %v1727 = vpop.f32.mrb[0].mxu0
        %v1728 = vadd.f32 %v1685, %v1727
        %v1729 = vpop.f32.mrb[0].mxu0
        %v1730 = vpop.f32.mrb[0].mxu0
        %1731 = vdwg.mxu0
        %1732 = vmatprep.subr.bf16.mxu0 0
        %1733 = vmatpush1.bf16.msra.mxu0 %v1676
        %1734 = vmatprep.subr.bf16.mxu0 0
        %1735 = vmatpush1.bf16.msra.mxu0 %v1679
        %1736 = vmatprep.subr.bf16.mxu0 0
        %1737 = vmatpush1.bf16.msra.mxu0 0
        %1738 = vmatprep.subr.bf16.mxu0 0
        %1739 = vmatpush1.bf16.msra.mxu0 0
        %1740 = vmatprep.subr.bf16.mxu0 0
        %1741 = vmatpush1.bf16.msra.mxu0 0
        %1742 = vmatprep.subr.bf16.mxu0 0
        %1743 = vmatpush1.bf16.msra.mxu0 0
        %1744 = vmatprep.subr.bf16.mxu0 0
        %1745 = vmatpush1.bf16.msra.mxu0 0
        %1746 = vmatprep.subr.bf16.mxu0 0
        %1747 = vmatpush1.bf16.msra.mxu0 0
        %1748 = vmatprep.subr.bf16.mxu0 0
        %1749 = vmatpush1.bf16.msra.mxu0 0
        %1750 = vmatprep.subr.bf16.mxu0 0
        %1751 = vmatpush1.bf16.msra.mxu0 0
        %1752 = vmatprep.subr.bf16.mxu0 0
        %1753 = vmatpush1.bf16.msra.mxu0 0
        %1754 = vmatprep.subr.bf16.mxu0 0
        %1755 = vmatpush1.bf16.msra.mxu0 0
        %1756 = vmatprep.subr.bf16.mxu0 0
        %1757 = vmatpush1.bf16.msra.mxu0 0
        %1758 = vmatprep.subr.bf16.mxu0 0
        %1759 = vmatpush1.bf16.msra.mxu0 0
        %1760 = vmatprep.subr.bf16.mxu0 0
        %1761 = vmatpush1.bf16.msra.mxu0 0
        %1762 = vmatprep.subr.bf16.mxu0 0
        %1763 = vmatpush1.bf16.msra.mxu0 0
        %1764 = vmatprep.mubr.bf16.mxu0 0
        %1765 = vmatmul.mubr.bf16.gmra.mrb[0].mxu0 %v1689
        %v1766 = vpop.f32.mrb[0].mxu0
        %v1767 = vadd.f32 %v1685, %v1766
        %v1768 = vpop.f32.mrb[0].mxu0
        %v1769 = vpop.f32.mrb[0].mxu0
        %v1770 = vpop.f32.mrb[0].mxu0
        %1771 = vdwg.mxu0
        %1772 = vst [vmem:[%s285] sm:$0xff] %v1726
        %1773 = vst [vmem:[%s285 + $0x8] sm:$0xff] %v1728
        %1774 = vst.msk [vmem:[%s285 + $0x10] sm:$0xff] %vm1687, %v1767
        %s1775 = sand.u32 %s195, 1
        %s1776 = scalar_lea.sflag [#allocation3], %s1775
        %s1777 = sand.u32 %s195, 1
        %s1778 = smul.addr %s1777, 24
        %s1779 = scalar_lea.vmem [#allocation2], %s1778
        // Predicated region
        $region49: #{tpu_custom_call.1} parent=47 // pred_check
          %p1780 = pneg %p205
        $region50: #{tpu_custom_call.1} parent=47 // pred_check_branch
          %1782 = sbr.rel (%p1780) target = $region52
        $region51: #{tpu_custom_call.1} parent=47 // pred_region
          %s1783 = smul.u32 3, %s26
          %s1785 = ssub.s32 384, 384
          %1786 = vsyncadd %s1776, %s1785
          %s1787 = smul.addr %s25, 3
          %s1788 = sadd.s32 %s1783, %s1787
          %s1789 = smul.addr %s1788, 128
          %s1790 = scalar_lea.hbm %s7, %s1789
          %s1792 = sshll.u32 %s1779, 4
          %s1793 = int_to_ptr.vmem [resolvable:$true] %s1792
          %1795 = dma.vmem_to_hbm [thread:$0]  %s1793, 384, %s1790, %s1776
        $region52: #{tpu_custom_call.1} parent=47 // pred_fallthru
          _
      $region48: #{tpu_custom_call.1} parent=5 // pred_fallthru
        _
      %p1796 = scmp.le.s32.totalorder 2, %s16
      // Predicated region
      $region53: #{tpu_custom_call.1} parent=5 // pred_check
        %p1797 = pneg %p1796
      $region54: #{tpu_custom_call.1} parent=5 // pred_check_branch
        %1799 = sbr.rel (%p1797) target = $region56
      $region55: #{tpu_custom_call.1} parent=5 // pred_region
        %s1800 = ssub.s32 %s16, 2
        // Predicated region
        $region57: #{tpu_custom_call.1} parent=55 // pred_check
          %p1801 = pneg %p211
        $region58: #{tpu_custom_call.1} parent=55 // pred_check_branch
          %1803 = sbr.rel (%p1801) target = $region60
        $region59: #{tpu_custom_call.1} parent=55 // pred_region
          %s1804 = sand.u32 %s196, 1
          %s1805 = scalar_lea.sflag [#allocation3], %s1804
          %s1806 = sand.u32 %s196, 1
          %s1807 = smul.addr %s1806, 24
          %s1808 = scalar_lea.vmem [#allocation2], %s1807
          %1809 = dma.done %s1805, 384
        $region60: #{tpu_custom_call.1} parent=55 // pred_fallthru
          _
      $region56: #{tpu_custom_call.1} parent=5 // pred_fallthru
        _
    $region6: #{tpu_custom_call.1} parent=1 // loop_footer
      %s20 = sadd.s32 1, %s16
    $region7: #{tpu_custom_call.1} parent=1 // loop_footer_branch
      %15 = sbr.rel target = $region3
    $region8: #{tpu_custom_call.1} parent=1 // loop_exit
      _
    %1810 = vsyncpa [#allocation3], 1
    %s1811 = scalar_lea.sflag [#allocation3], 1
    %1812 = vsyncpa %s1811, 1

// kernel: tpu_custom_call.1
$region0: #{tpu_custom_call.1}
  #allocation0 [shape = 'u32[]', space=smem, size = 0x4, offset = 0x4, fixed_abs, tag = 'smem constant byte address 0x4 - core index']
  #allocation1 [shape = 'u32[144,128]{1,0:T(1,128)}', space=vmem, size = 0x12000, scoped, tag = 'internal scratch']
  %s0 = inlined_call_operand.vmem [shape: bf16[2,4,384], index: 0, kind: input, shape index: {}]
  %s1 = inlined_call_operand.vmem [shape: bf16[9,16,4], index: 1, kind: input, shape index: {}]
  %s2 = inlined_call_operand.vmem [shape: f32[16,1], index: 2, kind: input, shape index: {}]
  %s3 = inlined_call_operand.vmem [shape: bf16[32,16], index: 3, kind: input, shape index: {}]
  %s4 = inlined_call_operand.vmem [shape: f32[32,1], index: 4, kind: input, shape index: {}]
  %s5 = inlined_call_operand.vmem [shape: bf16[8,32], index: 5, kind: input, shape index: {}]
  %s6 = inlined_call_operand.vmem [shape: f32[8,1], index: 6, kind: input, shape index: {}]
  %s7 = inlined_call_operand.hbm [shape: f32[2,8,288], index: 7, kind: output, shape index: {}]
  %s8 = sld [smem:[#allocation0]]
  $region61: #{tpu_custom_call.1} parent=0
    _
  %s10 = ssub.s32 1, %s8
  %s11 = scalar_select 0, %s10, %s8
  $region1: #{tpu_custom_call.1} parent=0
    #allocation2 [shape = 'u8[24576]{0}', space=vmem, size = 0x6000, scoped, tag = 'output window, operand 0']
    #allocation3 [shape = 's32[2]{0}', space=sflag, size = 0x8, scoped, tag = 'scoped memory for tpu_custom_call.1']
    %12 = vsyncpa [#allocation3], 0
    %s13 = scalar_lea.sflag [#allocation3], 1
    %14 = vsyncpa %s13, 0
    loop: start=0, step=1, limit=4
    $region2: #{tpu_custom_call.1} parent=1 // loop_pre_header
      _
    $region3: #{tpu_custom_call.1} parent=1 // loop_header
      %s16 = sphi 0, %s20
      %p17 = scmp.ge.s32.totalorder %s16, 4
      %s23 = sphi 0, %s35
      %s24 = sphi 0, %s31
      %s25 = sphi 0, %s23
      %s26 = sphi 0, %s24
      %s27 = sphi 0, %s25
      %s28 = sphi 0, %s26
      %s38 = sphi 0, %s40
      %s41 = sphi 0, %s38
      %s42 = sphi 0, %s41
      %s58 = sphi 0, %s42
      %s62 = sphi 0, %s62
      %s64 = sphi 0, %s62
      %s65 = sphi 0, %s64
      %s79 = sphi 0, %s65
      %s83 = sphi 0, %s83
      %s85 = sphi 0, %s83
      %s86 = sphi 0, %s85
      %s100 = sphi 0, %s86
      %s104 = sphi 0, %s104
      %s106 = sphi 0, %s104
      %s107 = sphi 0, %s106
      %s121 = sphi 0, %s107
      %s125 = sphi 0, %s125
      %s127 = sphi 0, %s125
      %s128 = sphi 0, %s127
      %s142 = sphi 0, %s128
      %s146 = sphi 0, %s146
      %s148 = sphi 0, %s146
      %s149 = sphi 0, %s148
      %s163 = sphi 0, %s149
      %s167 = sphi 0, %s167
      %s169 = sphi 0, %s167
      %s170 = sphi 0, %s169
      %s184 = sphi 0, %s170
      %s192 = sphi 0, %s194
      %s195 = sphi 0, %s192
      %s196 = sphi 0, %s195
      %s212 = sphi 0, %s196
    $region4: #{tpu_custom_call.1} parent=1 // loop_header_branch
      %19 = sbr.rel (%p17) target = $region8
    $region5: #{tpu_custom_call.1} parent=1 // loop_body
      %s21 = ssub.s32 %s16, 1
      %s22 = ssub.s32 %s16, 2
      %s29 = sadd.s32 1, %s24
      %p30 = scmp.ge.s32.totalorder %s29, 1
      %s31 = scalar_select %p30, 0, %s29
      %s32 = sadd.s32 1, %s23
      %s33 = scalar_select %p30, %s32, %s23
      %p34 = scmp.ge.s32.totalorder %s33, 2
      %s35 = scalar_select %p34, 0, %s33
      %s36 = ssub.s32 %s23, %s35
      %p37 = scmp.eq.s32.totalorder %s36, 0
      %s39 = sadd.s32 %s38, 1
      %s40 = scalar_select %p37, %s38, %s39
      %p43 = pneg %p37
      %p44 = scmp.eq.s32.totalorder %s16, 1
      %p45 = por %p43, %p44
      %p46 = scmp.ne.s32.totalorder %s38, %s41
      %p47 = scmp.eq.s32.totalorder %s16, 0
      %p48 = por %p46, %p47
      %p49 = scmp.ne.s32.totalorder %s38, %s41
      %p50 = scmp.eq.s32.totalorder %s21, 1
      %p51 = por %p49, %p50
      %p52 = scmp.ne.s32.totalorder %s41, %s42
      %p53 = scmp.eq.s32.totalorder %s21, 0
      %p54 = por %p52, %p53
      %p55 = scmp.ne.s32.totalorder %s41, %s42
      %p56 = scmp.eq.s32.totalorder %s22, 1
      %p57 = por %p55, %p56
      %p59 = scmp.ne.s32.totalorder %s42, %s58
      %p60 = scmp.eq.s32.totalorder %s22, 0
      %p61 = por %p59, %p60
      %s63 = sadd.s32 %s62, 1
      %p66 = scmp.eq.s32.totalorder %s16, 1
      %p67 = scmp.ne.s32.totalorder %s62, %s64
      %p68 = scmp.eq.s32.totalorder %s16, 0
      %p69 = por %p67, %p68
      %p70 = scmp.ne.s32.totalorder %s62, %s64
      %p71 = scmp.eq.s32.totalorder %s21, 1
      %p72 = por %p70, %p71
      %p73 = scmp.ne.s32.totalorder %s64, %s65
      %p74 = scmp.eq.s32.totalorder %s21, 0
      %p75 = por %p73, %p74
      %p76 = scmp.ne.s32.totalorder %s64, %s65
      %p77 = scmp.eq.s32.totalorder %s22, 1
      %p78 = por %p76, %p77
      %p80 = scmp.ne.s32.totalorder %s65, %s79
      %p81 = scmp.eq.s32.totalorder %s22, 0
      %p82 = por %p80, %p81
      %s84 = sadd.s32 %s83, 1
      %p87 = scmp.eq.s32.totalorder %s16, 1
      %p88 = scmp.ne.s32.totalorder %s83, %s85
      %p89 = scmp.eq.s32.totalorder %s16, 0
      %p90 = por %p88, %p89
      %p91 = scmp.ne.s32.totalorder %s83, %s85
      %p92 = scmp.eq.s32.totalorder %s21, 1
      %p93 = por %p91, %p92
      %p94 = scmp.ne.s32.totalorder %s85, %s86
      %p95 = scmp.eq.s32.totalorder %s21, 0
      %p96 = por %p94, %p95
      %p97 = scmp.ne.s32.totalorder %s85, %s86
      %p98 = scmp.eq.s32.totalorder %s22, 1
      %p99 = por %p97, %p98
      %p101 = scmp.ne.s32.totalorder %s86, %s100
      %p102 = scmp.eq.s32.totalorder %s22, 0
      %p103 = por %p101, %p102
      %s105 = sadd.s32 %s104, 1
      %p108 = scmp.eq.s32.totalorder %s16, 1
      %p109 = scmp.ne.s32.totalorder %s104, %s106
      %p110 = scmp.eq.s32.totalorder %s16, 0
      %p111 = por %p109, %p110
      %p112 = scmp.ne.s32.totalorder %s104, %s106
      %p113 = scmp.eq.s32.totalorder %s21, 1
      %p114 = por %p112, %p113
      %p115 = scmp.ne.s32.totalorder %s106, %s107
      %p116 = scmp.eq.s32.totalorder %s21, 0
      %p117 = por %p115, %p116
      %p118 = scmp.ne.s32.totalorder %s106, %s107
      %p119 = scmp.eq.s32.totalorder %s22, 1
      %p120 = por %p118, %p119
      %p122 = scmp.ne.s32.totalorder %s107, %s121
      %p123 = scmp.eq.s32.totalorder %s22, 0
      %p124 = por %p122, %p123
      %s126 = sadd.s32 %s125, 1
      %p129 = scmp.eq.s32.totalorder %s16, 1
      %p130 = scmp.ne.s32.totalorder %s125, %s127
      %p131 = scmp.eq.s32.totalorder %s16, 0
      %p132 = por %p130, %p131
      %p133 = scmp.ne.s32.totalorder %s125, %s127
      %p134 = scmp.eq.s32.totalorder %s21, 1
      %p135 = por %p133, %p134
      %p136 = scmp.ne.s32.totalorder %s127, %s128
      %p137 = scmp.eq.s32.totalorder %s21, 0
      %p138 = por %p136, %p137
      %p139 = scmp.ne.s32.totalorder %s127, %s128
      %p140 = scmp.eq.s32.totalorder %s22, 1
      %p141 = por %p139, %p140
      %p143 = scmp.ne.s32.totalorder %s128, %s142
      %p144 = scmp.eq.s32.totalorder %s22, 0
      %p145 = por %p143, %p144
      %s147 = sadd.s32 %s146, 1
      %p150 = scmp.eq.s32.totalorder %s16, 1
      %p151 = scmp.ne.s32.totalorder %s146, %s148
      %p152 = scmp.eq.s32.totalorder %s16, 0
      %p153 = por %p151, %p152
      %p154 = scmp.ne.s32.totalorder %s146, %s148
      %p155 = scmp.eq.s32.totalorder %s21, 1
      %p156 = por %p154, %p155
      %p157 = scmp.ne.s32.totalorder %s148, %s149
      %p158 = scmp.eq.s32.totalorder %s21, 0
      %p159 = por %p157, %p158
      %p160 = scmp.ne.s32.totalorder %s148, %s149
      %p161 = scmp.eq.s32.totalorder %s22, 1
      %p162 = por %p160, %p161
      %p164 = scmp.ne.s32.totalorder %s149, %s163
      %p165 = scmp.eq.s32.totalorder %s22, 0
      %p166 = por %p164, %p165
      %s168 = sadd.s32 %s167, 1
      %p171 = scmp.eq.s32.totalorder %s16, 1
      %p172 = scmp.ne.s32.totalorder %s167, %s169
      %p173 = scmp.eq.s32.totalorder %s16, 0
      %p174 = por %p172, %p173
      %p175 = scmp.ne.s32.totalorder %s167, %s169
      %p176 = scmp.eq.s32.totalorder %s21, 1
      %p177 = por %p175, %p176
      %p178 = scmp.ne.s32.totalorder %s169, %s170
      %p179 = scmp.eq.s32.totalorder %s21, 0
      %p180 = por %p178, %p179
      %p181 = scmp.ne.s32.totalorder %s169, %s170
      %p182 = scmp.eq.s32.totalorder %s22, 1
      %p183 = por %p181, %p182
      %p185 = scmp.ne.s32.totalorder %s170, %s184
      %p186 = scmp.eq.s32.totalorder %s22, 0
      %p187 = por %p185, %p186
      %s188 = ssub.s32 %s23, %s35
      %s189 = ssub.s32 %s24, %s31
      %s190 = sor.u32 %s188, %s189
      %p191 = scmp.eq.s32.totalorder %s190, 0
      %s193 = sadd.s32 %s192, 1
      %s194 = scalar_select %p191, %s192, %s193
      %p197 = pneg %p191
      %p198 = scmp.eq.s32.totalorder %s16, 1
      %p199 = por %p197, %p198
      %p200 = scmp.ne.s32.totalorder %s192, %s195
      %p201 = scmp.eq.s32.totalorder %s16, 0
      %p202 = por %p200, %p201
      %p203 = scmp.ne.s32.totalorder %s192, %s195
      %p204 = scmp.eq.s32.totalorder %s21, 1
      %p205 = por %p203, %p204
      %p206 = scmp.ne.s32.totalorder %s195, %s196
      %p207 = scmp.eq.s32.totalorder %s21, 0
      %p208 = por %p206, %p207
      %p209 = scmp.ne.s32.totalorder %s195, %s196
      %p210 = scmp.eq.s32.totalorder %s22, 1
      %p211 = por %p209, %p210
      %p213 = scmp.ne.s32.totalorder %s196, %s212
      %p214 = scmp.eq.s32.totalorder %s22, 0
      %p215 = por %p213, %p214
      %p216 = scmp.le.s32.totalorder 1, %s16
      %p217 = scmp.lt.s32.totalorder %s16, 3
      %p218 = pnand %p216, %p217
      %p219 = pneg %p218
      // Predicated region
      $region9: #{tpu_custom_call.1} parent=5 // pred_check
        _
      $region10: #{tpu_custom_call.1} parent=5 // pred_check_branch
        %221 = sbr.rel (%p218) target = $region12
      $region11: #{tpu_custom_call.1} parent=5 // pred_region
        %s222 = ssub.s32 %s16, 1
        // Predicated region
        $region13: #{tpu_custom_call.1} parent=11 // pred_check
          %p223 = pneg %p75
        $region14: #{tpu_custom_call.1} parent=11 // pred_check_branch
          %225 = sbr.rel (%p223) target = $region16
        $region15: #{tpu_custom_call.1} parent=11 // pred_region
          _
        $region16: #{tpu_custom_call.1} parent=11 // pred_fallthru
          _
        // Predicated region
        $region17: #{tpu_custom_call.1} parent=11 // pred_check
          %p226 = pneg %p96
        $region18: #{tpu_custom_call.1} parent=11 // pred_check_branch
          %228 = sbr.rel (%p226) target = $region20
        $region19: #{tpu_custom_call.1} parent=11 // pred_region
          _
        $region20: #{tpu_custom_call.1} parent=11 // pred_fallthru
          _
        // Predicated region
        $region21: #{tpu_custom_call.1} parent=11 // pred_check
          %p229 = pneg %p117
        $region22: #{tpu_custom_call.1} parent=11 // pred_check_branch
          %231 = sbr.rel (%p229) target = $region24
        $region23: #{tpu_custom_call.1} parent=11 // pred_region
          _
        $region24: #{tpu_custom_call.1} parent=11 // pred_fallthru
          _
        // Predicated region
        $region25: #{tpu_custom_call.1} parent=11 // pred_check
          %p232 = pneg %p138
        $region26: #{tpu_custom_call.1} parent=11 // pred_check_branch
          %234 = sbr.rel (%p232) target = $region28
        $region27: #{tpu_custom_call.1} parent=11 // pred_region
          _
        $region28: #{tpu_custom_call.1} parent=11 // pred_fallthru
          _
        // Predicated region
        $region29: #{tpu_custom_call.1} parent=11 // pred_check
          %p235 = pneg %p159
        $region30: #{tpu_custom_call.1} parent=11 // pred_check_branch
          %237 = sbr.rel (%p235) target = $region32
        $region31: #{tpu_custom_call.1} parent=11 // pred_region
          _
        $region32: #{tpu_custom_call.1} parent=11 // pred_fallthru
          _
        // Predicated region
        $region33: #{tpu_custom_call.1} parent=11 // pred_check
          %p238 = pneg %p180
        $region34: #{tpu_custom_call.1} parent=11 // pred_check_branch
          %240 = sbr.rel (%p238) target = $region36
        $region35: #{tpu_custom_call.1} parent=11 // pred_region
          _
        $region36: #{tpu_custom_call.1} parent=11 // pred_fallthru
          _
      $region12: #{tpu_custom_call.1} parent=5 // pred_fallthru
        _
      %p241 = scmp.lt.s32.totalorder %s16, 2
      // Predicated region
      $region37: #{tpu_custom_call.1} parent=5 // pred_check
        %p242 = pneg %p241
      $region38: #{tpu_custom_call.1} parent=5 // pred_check_branch
        %244 = sbr.rel (%p242) target = $region40
      $region39: #{tpu_custom_call.1} parent=5 // pred_region
        // Predicated region
        $region41: #{tpu_custom_call.1} parent=39 // pred_check
          %p245 = pneg %p48
        $region42: #{tpu_custom_call.1} parent=39 // pred_check_branch
          %247 = sbr.rel (%p245) target = $region44
        $region43: #{tpu_custom_call.1} parent=39 // pred_region
          %p248 = scmp.lt.s32.totalorder %s23, 1
          %s249 = scalar_select %p248, %s23, 1
          %s250 = smul.addr %s249, 3
          %s251 = smul.addr %s250, 2
          %s252 = scalar_lea.vmem %s0, %s251
        $region44: #{tpu_custom_call.1} parent=39 // pred_fallthru
          _
      $region40: #{tpu_custom_call.1} parent=5 // pred_fallthru
        _
      %p253 = scmp.le.s32.totalorder 1, %s16
      %p254 = scmp.lt.s32.totalorder %s16, 3
      %p255 = pnand %p253, %p254
      %p256 = pneg %p255
      // Predicated region
      $region45: #{tpu_custom_call.1} parent=5 // pred_check
        _
      $region46: #{tpu_custom_call.1} parent=5 // pred_check_branch
        %258 = sbr.rel (%p255) target = $region48
      $region47: #{tpu_custom_call.1} parent=5 // pred_region
        %s259 = ssub.s32 %s16, 1
        %p260 = scmp.lt.s32.totalorder %s25, 1
        %s261 = scalar_select %p260, %s25, 1
        %s262 = smul.addr %s261, 3
        %s263 = smul.addr %s262, 2
        %s264 = scalar_lea.vmem %s0, %s263
        %p265 = pneg %p54
        %p266 = pneg %p51
        %p267 = pneg %p75
        %p268 = pneg %p72
        %p269 = pneg %p96
        %p270 = pneg %p93
        %p271 = pneg %p117
        %p272 = pneg %p114
        %p273 = pneg %p138
        %p274 = pneg %p135
        %p275 = pneg %p159
        %p276 = pneg %p156
        %p277 = pneg %p180
        %p278 = pneg %p177
        %p279 = pneg %p208
        %p280 = pneg %p205
        %s281 = sand.u32 %s195, 1
        %s282 = scalar_lea.sflag [#allocation3], %s281
        %s283 = sand.u32 %s195, 1
        %s284 = smul.addr %s283, 24
        %s285 = scalar_lea.vmem [#allocation2], %s284
        %p286 = scmp.lt.s32.totalorder %s25, 1
        %s287 = scalar_select %p286, %s25, 1
        %s288 = smul.addr %s287, 3
        %s289 = smul.addr %s288, 2
        %s290 = scalar_lea.vmem %s0, %s289
        %s291 = smul.u32 3, %s26
        %v293 = vld [vmem:[%s290] sm:$0x3f]
        %v294 = vld [vmem:[%s1] sm:$0xf]
        %v295 = vld [vmem:[%s1 + $0x4] sm:$0xf]
        %s296 = scalar_lea.vmem %s1, 8
        %v297 = vld [vmem:[%s296] sm:$0xf]
        %v298 = vld [vmem:[%s296 + $0x4] sm:$0xf]
        %v301 = vunpack.c.l.b16 %v297
        %v302 = vunpack.c.l.b16 %v298
        %v303 = vpack.c.b16 %v302, %v301
        %v305 = vcombine.high %v293, %v293
        %v307 = vunpack.c.l.s4 1983009808
        %v308 = vunpack.c.0.s8 %v307
        %v309 = vlaneseq
        %v310 = vshrl.u32 %v309, 7
        %v311 = vsub.s32 %v308, %v310
        %v312 = vrot.slane %v293, %v311
        %v314 = vunpack.c.l.s4 1983009808
        %v315 = vunpack.c.0.s8 %v314
        %v316 = vlaneseq
        %v317 = vshrl.u32 %v316, 7
        %v318 = vsub.s32 %v315, %v317
        %v319 = vrot.slane %v305, %v318
        %v320 = vcombine.high %v312, %v312
        %321 = vrot.lane.b32.xlu0 %v312, 127
        %v322 = vpop.permute.xlu0 %321
        %323 = vrot.lane.b32.xlu0 %v320, 127
        %v324 = vpop.permute.xlu0 %323
        %325 = vrot.lane.b32.xlu0 %v319, 127
        %v326 = vpop.permute.xlu0 %325
        %vm327 = vcmask 1039360
        %v328 = vsel %vm327, %v322, %v324
        %v329 = vsel %vm327, %v324, %v326
        %vm330 = vcmask 31744
        %v332 = vsel %vm330, %v303, 0
        %vm334 = vcmask 1041408
        %v336 = vsel %vm334, %v328, 0
        %v339 = vsel %vm334, %v329, 0
        %v342 = vsel %vm334, %v326, 0
        %344 = vmatprep.subr.bf16.mxu0 %v339
        %345 = vmatpush1.bf16.msra.mxu0 %v336
        %346 = vmatprep.subr.bf16.mxu0 0
        %347 = vmatpush1.bf16.msra.mxu0 0
        %348 = vmatprep.subr.bf16.mxu0 0
        %349 = vmatpush1.bf16.msra.mxu0 0
        %350 = vmatprep.subr.bf16.mxu0 0
        %351 = vmatpush1.bf16.msra.mxu0 0
        %352 = vmatprep.subr.bf16.mxu0 0
        %353 = vmatpush1.bf16.msra.mxu0 0
        %354 = vmatprep.subr.bf16.mxu0 0
        %355 = vmatpush1.bf16.msra.mxu0 0
        %356 = vmatprep.subr.bf16.mxu0 0
        %357 = vmatpush1.bf16.msra.mxu0 0
        %358 = vmatprep.subr.bf16.mxu0 0
        %359 = vmatpush1.bf16.msra.mxu0 0
        %360 = vmatprep.subr.bf16.mxu0 0
        %361 = vmatpush1.bf16.msra.mxu0 0
        %362 = vmatprep.subr.bf16.mxu0 0
        %363 = vmatpush1.bf16.msra.mxu0 0
        %364 = vmatprep.subr.bf16.mxu0 0
        %365 = vmatpush1.bf16.msra.mxu0 0
        %366 = vmatprep.subr.bf16.mxu0 0
        %367 = vmatpush1.bf16.msra.mxu0 0
        %368 = vmatprep.subr.bf16.mxu0 0
        %369 = vmatpush1.bf16.msra.mxu0 0
        %370 = vmatprep.subr.bf16.mxu0 0
        %371 = vmatpush1.bf16.msra.mxu0 0
        %372 = vmatprep.subr.bf16.mxu0 0
        %373 = vmatpush1.bf16.msra.mxu0 0
        %374 = vmatprep.subr.bf16.mxu0 0
        %375 = vmatpush1.bf16.msra.mxu0 0
        %376 = vmatprep.mubr.bf16.mxu0 0
        %377 = vmatmul.mubr.bf16.gmra.mrb[0].mxu0 %v332
        %v378 = vpop.f32.mrb[0].mxu0
        %v379 = vadd.f32 0.0, %v378
        %v380 = vpop.f32.mrb[0].mxu0
        %v381 = vadd.f32 0.0, %v380
        %v382 = vpop.f32.mrb[0].mxu0
        %v383 = vadd.f32 0.0, %v382
        %v384 = vpop.f32.mrb[0].mxu0
        %v385 = vadd.f32 0.0, %v384
        %386 = vdwg.mxu0
        %387 = vmatprep.subr.bf16.mxu0 0
        %388 = vmatpush1.bf16.msra.mxu0 %v342
        %389 = vmatprep.subr.bf16.mxu0 0
        %390 = vmatpush1.bf16.msra.mxu0 0
        %391 = vmatprep.subr.bf16.mxu0 0
        %392 = vmatpush1.bf16.msra.mxu0 0
        %393 = vmatprep.subr.bf16.mxu0 0
        %394 = vmatpush1.bf16.msra.mxu0 0
        %395 = vmatprep.subr.bf16.mxu0 0
        %396 = vmatpush1.bf16.msra.mxu0 0
        %397 = vmatprep.subr.bf16.mxu0 0
        %398 = vmatpush1.bf16.msra.mxu0 0
        %399 = vmatprep.subr.bf16.mxu0 0
        %400 = vmatpush1.bf16.msra.mxu0 0
        %401 = vmatprep.subr.bf16.mxu0 0
        %402 = vmatpush1.bf16.msra.mxu0 0
        %403 = vmatprep.subr.bf16.mxu0 0
        %404 = vmatpush1.bf16.msra.mxu0 0
        %405 = vmatprep.subr.bf16.mxu0 0
        %406 = vmatpush1.bf16.msra.mxu0 0
        %407 = vmatprep.subr.bf16.mxu0 0
        %408 = vmatpush1.bf16.msra.mxu0 0
        %409 = vmatprep.subr.bf16.mxu0 0
        %410 = vmatpush1.bf16.msra.mxu0 0
        %411 = vmatprep.subr.bf16.mxu0 0
        %412 = vmatpush1.bf16.msra.mxu0 0
        %413 = vmatprep.subr.bf16.mxu0 0
        %414 = vmatpush1.bf16.msra.mxu0 0
        %415 = vmatprep.subr.bf16.mxu0 0
        %416 = vmatpush1.bf16.msra.mxu0 0
        %417 = vmatprep.subr.bf16.mxu0 0
        %418 = vmatpush1.bf16.msra.mxu0 0
        %419 = vmatprep.mubr.bf16.mxu0 0
        %420 = vmatmul.mubr.bf16.gmra.mrb[0].mxu0 %v332
        %v421 = vpop.f32.mrb[0].mxu0
        %v422 = vadd.f32 0.0, %v421
        %v423 = vpop.f32.mrb[0].mxu0
        %v424 = vpop.f32.mrb[0].mxu0
        %v425 = vadd.f32 0.0, %v424
        %v426 = vpop.f32.mrb[0].mxu0
        %427 = vdwg.mxu0
        %v430 = vunpack.c.l.b16 %v294
        %v431 = vunpack.c.l.b16 %v295
        %v432 = vpack.c.b16 %v431, %v430
        %v434 = vsel %vm330, %v432, 0
        %v437 = vsel %vm334, %v312, 0
        %v440 = vsel %vm334, %v320, 0
        %v443 = vsel %vm334, %v319, 0
        %445 = vmatprep.subr.bf16.mxu0 %v440
        %446 = vmatpush1.bf16.msra.mxu0 %v437
        %447 = vmatprep.subr.bf16.mxu0 0
        %448 = vmatpush1.bf16.msra.mxu0 0
        %449 = vmatprep.subr.bf16.mxu0 0
        %450 = vmatpush1.bf16.msra.mxu0 0
        %451 = vmatprep.subr.bf16.mxu0 0
        %452 = vmatpush1.bf16.msra.mxu0 0
        %453 = vmatprep.subr.bf16.mxu0 0
        %454 = vmatpush1.bf16.msra.mxu0 0
        %455 = vmatprep.subr.bf16.mxu0 0
        %456 = vmatpush1.bf16.msra.mxu0 0
        %457 = vmatprep.subr.bf16.mxu0 0
        %458 = vmatpush1.bf16.msra.mxu0 0
        %459 = vmatprep.subr.bf16.mxu0 0
        %460 = vmatpush1.bf16.msra.mxu0 0
        %461 = vmatprep.subr.bf16.mxu0 0
        %462 = vmatpush1.bf16.msra.mxu0 0
        %463 = vmatprep.subr.bf16.mxu0 0
        %464 = vmatpush1.bf16.msra.mxu0 0
        %465 = vmatprep.subr.bf16.mxu0 0
        %466 = vmatpush1.bf16.msra.mxu0 0
        %467 = vmatprep.subr.bf16.mxu0 0
        %468 = vmatpush1.bf16.msra.mxu0 0
        %469 = vmatprep.subr.bf16.mxu0 0
        %470 = vmatpush1.bf16.msra.mxu0 0
        %471 = vmatprep.subr.bf16.mxu0 0
        %472 = vmatpush1.bf16.msra.mxu0 0
        %473 = vmatprep.subr.bf16.mxu0 0
        %474 = vmatpush1.bf16.msra.mxu0 0
        %475 = vmatprep.subr.bf16.mxu0 0
        %476 = vmatpush1.bf16.msra.mxu0 0
        %477 = vmatprep.mubr.bf16.mxu0 0
        %478 = vmatmul.mubr.bf16.gmra.mrb[0].mxu0 %v434
        %v479 = vpop.f32.mrb[0].mxu0
        %v480 = vadd.f32 %v379, %v479
        %v481 = vpop.f32.mrb[0].mxu0
        %v482 = vadd.f32 %v381, %v481
        %v483 = vpop.f32.mrb[0].mxu0
        %v484 = vadd.f32 %v383, %v483
        %v485 = vpop.f32.mrb[0].mxu0
        %v486 = vadd.f32 %v385, %v485
        %487 = vdwg.mxu0
        %488 = vmatprep.subr.bf16.mxu0 0
        %489 = vmatpush1.bf16.msra.mxu0 %v443
        %490 = vmatprep.subr.bf16.mxu0 0
        %491 = vmatpush1.bf16.msra.mxu0 0
        %492 = vmatprep.subr.bf16.mxu0 0
        %493 = vmatpush1.bf16.msra.mxu0 0
        %494 = vmatprep.subr.bf16.mxu0 0
        %495 = vmatpush1.bf16.msra.mxu0 0
        %496 = vmatprep.subr.bf16.mxu0 0
        %497 = vmatpush1.bf16.msra.mxu0 0
        %498 = vmatprep.subr.bf16.mxu0 0
        %499 = vmatpush1.bf16.msra.mxu0 0
        %500 = vmatprep.subr.bf16.mxu0 0
        %501 = vmatpush1.bf16.msra.mxu0 0
        %502 = vmatprep.subr.bf16.mxu0 0
        %503 = vmatpush1.bf16.msra.mxu0 0
        %504 = vmatprep.subr.bf16.mxu0 0
        %505 = vmatpush1.bf16.msra.mxu0 0
        %506 = vmatprep.subr.bf16.mxu0 0
        %507 = vmatpush1.bf16.msra.mxu0 0
        %508 = vmatprep.subr.bf16.mxu0 0
        %509 = vmatpush1.bf16.msra.mxu0 0
        %510 = vmatprep.subr.bf16.mxu0 0
        %511 = vmatpush1.bf16.msra.mxu0 0
        %512 = vmatprep.subr.bf16.mxu0 0
        %513 = vmatpush1.bf16.msra.mxu0 0
        %514 = vmatprep.subr.bf16.mxu0 0
        %515 = vmatpush1.bf16.msra.mxu0 0
        %516 = vmatprep.subr.bf16.mxu0 0
        %517 = vmatpush1.bf16.msra.mxu0 0
        %518 = vmatprep.subr.bf16.mxu0 0
        %519 = vmatpush1.bf16.msra.mxu0 0
        %520 = vmatprep.mubr.bf16.mxu0 0
        %521 = vmatmul.mubr.bf16.gmra.mrb[0].mxu0 %v434
        %v522 = vpop.f32.mrb[0].mxu0
        %v523 = vadd.f32 %v422, %v522
        %v524 = vpop.f32.mrb[0].mxu0
        %v525 = vpop.f32.mrb[0].mxu0
        %v526 = vadd.f32 %v425, %v525
        %v527 = vpop.f32.mrb[0].mxu0
        %528 = vdwg.mxu0
        %v529 = vld [vmem:[%s290] sm:$0x3f]
        %s530 = scalar_lea.vmem %s1, 16
        %v531 = vld [vmem:[%s530] sm:$0xf]
        %v532 = vld [vmem:[%s530 + $0x4] sm:$0xf]
        %v535 = vunpack.c.l.b16 %v531
        %v536 = vunpack.c.l.b16 %v532
        %v537 = vpack.c.b16 %v536, %v535
        %v539 = vcombine.high %v529, %v529
        %v541 = vunpack.c.l.s4 1983009808
        %v542 = vunpack.c.0.s8 %v541
        %v543 = vlaneseq
        %v544 = vshrl.u32 %v543, 7
        %v545 = vsub.s32 %v542, %v544
        %v546 = vrot.slane %v529, %v545
        %v548 = vunpack.c.l.s4 1983009808
        %v549 = vunpack.c.0.s8 %v548
        %v550 = vlaneseq
        %v551 = vshrl.u32 %v550, 7
        %v552 = vsub.s32 %v549, %v551
        %v553 = vrot.slane %v539, %v552
        %v554 = vcombine.high %v546, %v546
        %555 = vrot.lane.b32.xlu0 %v546, 126
        %v556 = vpop.permute.xlu0 %555
        %557 = vrot.lane.b32.xlu0 %v554, 126
        %v558 = vpop.permute.xlu0 %557
        %559 = vrot.lane.b32.xlu0 %v553, 126
        %v560 = vpop.permute.xlu0 %559
        %vm561 = vcmask 1031168
        %v562 = vsel %vm561, %v556, %v558
        %v563 = vsel %vm561, %v558, %v560
        %v565 = vsel %vm330, %v537, 0
        %v568 = vsel %vm334, %v562, 0
        %v571 = vsel %vm334, %v563, 0
        %v574 = vsel %vm334, %v560, 0
        %576 = vmatprep.subr.bf16.mxu0 %v571
        %577 = vmatpush1.bf16.msra.mxu0 %v568
        %578 = vmatprep.subr.bf16.mxu0 0
        %579 = vmatpush1.bf16.msra.mxu0 0
        %580 = vmatprep.subr.bf16.mxu0 0
        %581 = vmatpush1.bf16.msra.mxu0 0
        %582 = vmatprep.subr.bf16.mxu0 0
        %583 = vmatpush1.bf16.msra.mxu0 0
        %584 = vmatprep.subr.bf16.mxu0 0
        %585 = vmatpush1.bf16.msra.mxu0 0
        %586 = vmatprep.subr.bf16.mxu0 0
        %587 = vmatpush1.bf16.msra.mxu0 0
        %588 = vmatprep.subr.bf16.mxu0 0
        %589 = vmatpush1.bf16.msra.mxu0 0
        %590 = vmatprep.subr.bf16.mxu0 0
        %591 = vmatpush1.bf16.msra.mxu0 0
        %592 = vmatprep.subr.bf16.mxu0 0
        %593 = vmatpush1.bf16.msra.mxu0 0
        %594 = vmatprep.subr.bf16.mxu0 0
        %595 = vmatpush1.bf16.msra.mxu0 0
        %596 = vmatprep.subr.bf16.mxu0 0
        %597 = vmatpush1.bf16.msra.mxu0 0
        %598 = vmatprep.subr.bf16.mxu0 0
        %599 = vmatpush1.bf16.msra.mxu0 0
        %600 = vmatprep.subr.bf16.mxu0 0
        %601 = vmatpush1.bf16.msra.mxu0 0
        %602 = vmatprep.subr.bf16.mxu0 0
        %603 = vmatpush1.bf16.msra.mxu0 0
        %604 = vmatprep.subr.bf16.mxu0 0
        %605 = vmatpush1.bf16.msra.mxu0 0
        %606 = vmatprep.subr.bf16.mxu0 0
        %607 = vmatpush1.bf16.msra.mxu0 0
        %608 = vmatprep.mubr.bf16.mxu0 0
        %609 = vmatmul.mubr.bf16.gmra.mrb[0].mxu0 %v565
        %v610 = vpop.f32.mrb[0].mxu0
        %v611 = vadd.f32 0.0, %v610
        %v612 = vpop.f32.mrb[0].mxu0
        %v613 = vadd.f32 0.0, %v612
        %v614 = vpop.f32.mrb[0].mxu0
        %v615 = vadd.f32 0.0, %v614
        %v616 = vpop.f32.mrb[0].mxu0
        %v617 = vadd.f32 0.0, %v616
        %618 = vdwg.mxu0
        %619 = vmatprep.subr.bf16.mxu0 0
        %620 = vmatpush1.bf16.msra.mxu0 %v574
        %621 = vmatprep.subr.bf16.mxu0 0
        %622 = vmatpush1.bf16.msra.mxu0 0
        %623 = vmatprep.subr.bf16.mxu0 0
        %624 = vmatpush1.bf16.msra.mxu0 0
        %625 = vmatprep.subr.bf16.mxu0 0
        %626 = vmatpush1.bf16.msra.mxu0 0
        %627 = vmatprep.subr.bf16.mxu0 0
        %628 = vmatpush1.bf16.msra.mxu0 0
        %629 = vmatprep.subr.bf16.mxu0 0
        %630 = vmatpush1.bf16.msra.mxu0 0
        %631 = vmatprep.subr.bf16.mxu0 0
        %632 = vmatpush1.bf16.msra.mxu0 0
        %633 = vmatprep.subr.bf16.mxu0 0
        %634 = vmatpush1.bf16.msra.mxu0 0
        %635 = vmatprep.subr.bf16.mxu0 0
        %636 = vmatpush1.bf16.msra.mxu0 0
        %637 = vmatprep.subr.bf16.mxu0 0
        %638 = vmatpush1.bf16.msra.mxu0 0
        %639 = vmatprep.subr.bf16.mxu0 0
        %640 = vmatpush1.bf16.msra.mxu0 0
        %641 = vmatprep.subr.bf16.mxu0 0
        %642 = vmatpush1.bf16.msra.mxu0 0
        %643 = vmatprep.subr.bf16.mxu0 0
        %644 = vmatpush1.bf16.msra.mxu0 0
        %645 = vmatprep.subr.bf16.mxu0 0
        %646 = vmatpush1.bf16.msra.mxu0 0
        %647 = vmatprep.subr.bf16.mxu0 0
        %648 = vmatpush1.bf16.msra.mxu0 0
        %649 = vmatprep.subr.bf16.mxu0 0
        %650 = vmatpush1.bf16.msra.mxu0 0
        %651 = vmatprep.mubr.bf16.mxu0 0
        %652 = vmatmul.mubr.bf16.gmra.mrb[0].mxu0 %v565
        %v653 = vpop.f32.mrb[0].mxu0
        %v654 = vadd.f32 0.0, %v653
        %v655 = vpop.f32.mrb[0].mxu0
        %v656 = vpop.f32.mrb[0].mxu0
        %v657 = vadd.f32 0.0, %v656
        %v658 = vpop.f32.mrb[0].mxu0
        %659 = vdwg.mxu0
        %v660 = vadd.f32 %v480, %v611
        %v661 = vadd.f32 %v482, %v613
        %v662 = vadd.f32 %v523, %v654
        %v663 = vadd.f32 %v484, %v615
        %v664 = vadd.f32 %v486, %v617
        %v665 = vadd.f32 %v526, %v657
        %v666 = vld [vmem:[%s290] sm:$0x3f]
        %s667 = scalar_lea.vmem %s1, 24
        %v668 = vld [vmem:[%s667] sm:$0xf]
        %v669 = vld [vmem:[%s667 + $0x4] sm:$0xf]
        %v672 = vunpack.c.l.b16 %v668
        %v673 = vunpack.c.l.b16 %v669
        %v674 = vpack.c.b16 %v673, %v672
        %v676 = vcombine.high %v666, %v666
        %v678 = vunpack.c.l.s4 1983009808
        %v679 = vunpack.c.0.s8 %v678
        %v680 = vlaneseq
        %v681 = vshrl.u32 %v680, 7
        %v682 = vsub.s32 %v679, %v681
        %v683 = vrot.slane %v666, %v682
        %v685 = vunpack.c.l.s4 1983009808
        %v686 = vunpack.c.0.s8 %v685
        %v687 = vlaneseq
        %v688 = vshrl.u32 %v687, 7
        %v689 = vsub.s32 %v686, %v688
        %v690 = vrot.slane %v676, %v689
        %v691 = vcombine.high %v683, %v683
        %692 = vrot.lane.b32.xlu0 %v683, 110
        %v693 = vpop.permute.xlu0 %692
        %694 = vrot.lane.b32.xlu0 %v691, 110
        %v695 = vpop.permute.xlu0 %694
        %696 = vrot.lane.b32.xlu0 %v690, 110
        %v697 = vpop.permute.xlu0 %696
        %vm698 = vcmask 900096
        %v699 = vsel %vm698, %v693, %v695
        %v700 = vsel %vm698, %v695, %v697
        %v702 = vsel %vm330, %v674, 0
        %v705 = vsel %vm334, %v699, 0
        %v708 = vsel %vm334, %v700, 0
        %v711 = vsel %vm334, %v697, 0
        %713 = vmatprep.subr.bf16.mxu0 %v708
        %714 = vmatpush1.bf16.msra.mxu0 %v705
        %715 = vmatprep.subr.bf16.mxu0 0
        %716 = vmatpush1.bf16.msra.mxu0 0
        %717 = vmatprep.subr.bf16.mxu0 0
        %718 = vmatpush1.bf16.msra.mxu0 0
        %719 = vmatprep.subr.bf16.mxu0 0
        %720 = vmatpush1.bf16.msra.mxu0 0
        %721 = vmatprep.subr.bf16.mxu0 0
        %722 = vmatpush1.bf16.msra.mxu0 0
        %723 = vmatprep.subr.bf16.mxu0 0
        %724 = vmatpush1.bf16.msra.mxu0 0
        %725 = vmatprep.subr.bf16.mxu0 0
        %726 = vmatpush1.bf16.msra.mxu0 0
        %727 = vmatprep.subr.bf16.mxu0 0
        %728 = vmatpush1.bf16.msra.mxu0 0
        %729 = vmatprep.subr.bf16.mxu0 0
        %730 = vmatpush1.bf16.msra.mxu0 0
        %731 = vmatprep.subr.bf16.mxu0 0
        %732 = vmatpush1.bf16.msra.mxu0 0
        %733 = vmatprep.subr.bf16.mxu0 0
        %734 = vmatpush1.bf16.msra.mxu0 0
        %735 = vmatprep.subr.bf16.mxu0 0
        %736 = vmatpush1.bf16.msra.mxu0 0
        %737 = vmatprep.subr.bf16.mxu0 0
        %738 = vmatpush1.bf16.msra.mxu0 0
        %739 = vmatprep.subr.bf16.mxu0 0
        %740 = vmatpush1.bf16.msra.mxu0 0
        %741 = vmatprep.subr.bf16.mxu0 0
        %742 = vmatpush1.bf16.msra.mxu0 0
        %743 = vmatprep.subr.bf16.mxu0 0
        %744 = vmatpush1.bf16.msra.mxu0 0
        %745 = vmatprep.mubr.bf16.mxu0 0
        %746 = vmatmul.mubr.bf16.gmra.mrb[0].mxu0 %v702
        %v747 = vpop.f32.mrb[0].mxu0
        %v748 = vadd.f32 0.0, %v747
        %v749 = vpop.f32.mrb[0].mxu0
        %v750 = vadd.f32 0.0, %v749
        %v751 = vpop.f32.mrb[0].mxu0
        %v752 = vadd.f32 0.0, %v751
        %v753 = vpop.f32.mrb[0].mxu0
        %v754 = vadd.f32 0.0, %v753
        %755 = vdwg.mxu0
        %756 = vmatprep.subr.bf16.mxu0 0
        %757 = vmatpush1.bf16.msra.mxu0 %v711
        %758 = vmatprep.subr.bf16.mxu0 0
        %759 = vmatpush1.bf16.msra.mxu0 0
        %760 = vmatprep.subr.bf16.mxu0 0
        %761 = vmatpush1.bf16.msra.mxu0 0
        %762 = vmatprep.subr.bf16.mxu0 0
        %763 = vmatpush1.bf16.msra.mxu0 0
        %764 = vmatprep.subr.bf16.mxu0 0
        %765 = vmatpush1.bf16.msra.mxu0 0
        %766 = vmatprep.subr.bf16.mxu0 0
        %767 = vmatpush1.bf16.msra.mxu0 0
        %768 = vmatprep.subr.bf16.mxu0 0
        %769 = vmatpush1.bf16.msra.mxu0 0
        %770 = vmatprep.subr.bf16.mxu0 0
        %771 = vmatpush1.bf16.msra.mxu0 0
        %772 = vmatprep.subr.bf16.mxu0 0
        %773 = vmatpush1.bf16.msra.mxu0 0
        %774 = vmatprep.subr.bf16.mxu0 0
        %775 = vmatpush1.bf16.msra.mxu0 0
        %776 = vmatprep.subr.bf16.mxu0 0
        %777 = vmatpush1.bf16.msra.mxu0 0
        %778 = vmatprep.subr.bf16.mxu0 0
        %779 = vmatpush1.bf16.msra.mxu0 0
        %780 = vmatprep.subr.bf16.mxu0 0
        %781 = vmatpush1.bf16.msra.mxu0 0
        %782 = vmatprep.subr.bf16.mxu0 0
        %783 = vmatpush1.bf16.msra.mxu0 0
        %784 = vmatprep.subr.bf16.mxu0 0
        %785 = vmatpush1.bf16.msra.mxu0 0
        %786 = vmatprep.subr.bf16.mxu0 0
        %787 = vmatpush1.bf16.msra.mxu0 0
        %788 = vmatprep.mubr.bf16.mxu0 0
        %789 = vmatmul.mubr.bf16.gmra.mrb[0].mxu0 %v702
        %v790 = vpop.f32.mrb[0].mxu0
        %v791 = vadd.f32 0.0, %v790
        %v792 = vpop.f32.mrb[0].mxu0
        %v793 = vpop.f32.mrb[0].mxu0
        %v794 = vadd.f32 0.0, %v793
        %v795 = vpop.f32.mrb[0].mxu0
        %796 = vdwg.mxu0
        %v797 = vadd.f32 %v660, %v748
        %v798 = vadd.f32 %v661, %v750
        %v799 = vadd.f32 %v662, %v791
        %v800 = vadd.f32 %v663, %v752
        %v801 = vadd.f32 %v664, %v754
        %v802 = vadd.f32 %v665, %v794
        %v803 = vld [vmem:[%s290] sm:$0x3f]
        %s804 = scalar_lea.vmem %s1, 32
        %v805 = vld [vmem:[%s804] sm:$0xf]
        %v806 = vld [vmem:[%s804 + $0x4] sm:$0xf]
        %v809 = vunpack.c.l.b16 %v805
        %v810 = vunpack.c.l.b16 %v806
        %v811 = vpack.c.b16 %v810, %v809
        %v813 = vcombine.high %v803, %v803
        %v815 = vunpack.c.l.s4 1983009808
        %v816 = vunpack.c.0.s8 %v815
        %v817 = vlaneseq
        %v818 = vshrl.u32 %v817, 7
        %v819 = vsub.s32 %v816, %v818
        %v820 = vrot.slane %v803, %v819
        %v822 = vunpack.c.l.s4 1983009808
        %v823 = vunpack.c.0.s8 %v822
        %v824 = vlaneseq
        %v825 = vshrl.u32 %v824, 7
        %v826 = vsub.s32 %v823, %v825
        %v827 = vrot.slane %v813, %v826
        %v828 = vcombine.high %v820, %v820
        %829 = vrot.lane.b32.xlu0 %v820, 109
        %v830 = vpop.permute.xlu0 %829
        %831 = vrot.lane.b32.xlu0 %v828, 109
        %v832 = vpop.permute.xlu0 %831
        %833 = vrot.lane.b32.xlu0 %v827, 109
        %v834 = vpop.permute.xlu0 %833
        %vm835 = vcmask 891904
        %v836 = vsel %vm835, %v830, %v832
        %v837 = vsel %vm835, %v832, %v834
        %v839 = vsel %vm330, %v811, 0
        %v842 = vsel %vm334, %v836, 0
        %v845 = vsel %vm334, %v837, 0
        %v848 = vsel %vm334, %v834, 0
        %850 = vmatprep.subr.bf16.mxu0 %v845
        %851 = vmatpush1.bf16.msra.mxu0 %v842
        %852 = vmatprep.subr.bf16.mxu0 0
        %853 = vmatpush1.bf16.msra.mxu0 0
        %854 = vmatprep.subr.bf16.mxu0 0
        %855 = vmatpush1.bf16.msra.mxu0 0
        %856 = vmatprep.subr.bf16.mxu0 0
        %857 = vmatpush1.bf16.msra.mxu0 0
        %858 = vmatprep.subr.bf16.mxu0 0
        %859 = vmatpush1.bf16.msra.mxu0 0
        %860 = vmatprep.subr.bf16.mxu0 0
        %861 = vmatpush1.bf16.msra.mxu0 0
        %862 = vmatprep.subr.bf16.mxu0 0
        %863 = vmatpush1.bf16.msra.mxu0 0
        %864 = vmatprep.subr.bf16.mxu0 0
        %865 = vmatpush1.bf16.msra.mxu0 0
        %866 = vmatprep.subr.bf16.mxu0 0
        %867 = vmatpush1.bf16.msra.mxu0 0
        %868 = vmatprep.subr.bf16.mxu0 0
        %869 = vmatpush1.bf16.msra.mxu0 0
        %870 = vmatprep.subr.bf16.mxu0 0
        %871 = vmatpush1.bf16.msra.mxu0 0
        %872 = vmatprep.subr.bf16.mxu0 0
        %873 = vmatpush1.bf16.msra.mxu0 0
        %874 = vmatprep.subr.bf16.mxu0 0
        %875 = vmatpush1.bf16.msra.mxu0 0
        %876 = vmatprep.subr.bf16.mxu0 0
        %877 = vmatpush1.bf16.msra.mxu0 0
        %878 = vmatprep.subr.bf16.mxu0 0
        %879 = vmatpush1.bf16.msra.mxu0 0
        %880 = vmatprep.subr.bf16.mxu0 0
        %881 = vmatpush1.bf16.msra.mxu0 0
        %882 = vmatprep.mubr.bf16.mxu0 0
        %883 = vmatmul.mubr.bf16.gmra.mrb[0].mxu0 %v839
        %v884 = vpop.f32.mrb[0].mxu0
        %v885 = vadd.f32 0.0, %v884
        %v886 = vpop.f32.mrb[0].mxu0
        %v887 = vadd.f32 0.0, %v886
        %v888 = vpop.f32.mrb[0].mxu0
        %v889 = vadd.f32 0.0, %v888
        %v890 = vpop.f32.mrb[0].mxu0
        %v891 = vadd.f32 0.0, %v890
        %892 = vdwg.mxu0
        %893 = vmatprep.subr.bf16.mxu0 0
        %894 = vmatpush1.bf16.msra.mxu0 %v848
        %895 = vmatprep.subr.bf16.mxu0 0
        %896 = vmatpush1.bf16.msra.mxu0 0
        %897 = vmatprep.subr.bf16.mxu0 0
        %898 = vmatpush1.bf16.msra.mxu0 0
        %899 = vmatprep.subr.bf16.mxu0 0
        %900 = vmatpush1.bf16.msra.mxu0 0
        %901 = vmatprep.subr.bf16.mxu0 0
        %902 = vmatpush1.bf16.msra.mxu0 0
        %903 = vmatprep.subr.bf16.mxu0 0
        %904 = vmatpush1.bf16.msra.mxu0 0
        %905 = vmatprep.subr.bf16.mxu0 0
        %906 = vmatpush1.bf16.msra.mxu0 0
        %907 = vmatprep.subr.bf16.mxu0 0
        %908 = vmatpush1.bf16.msra.mxu0 0
        %909 = vmatprep.subr.bf16.mxu0 0
        %910 = vmatpush1.bf16.msra.mxu0 0
        %911 = vmatprep.subr.bf16.mxu0 0
        %912 = vmatpush1.bf16.msra.mxu0 0
        %913 = vmatprep.subr.bf16.mxu0 0
        %914 = vmatpush1.bf16.msra.mxu0 0
        %915 = vmatprep.subr.bf16.mxu0 0
        %916 = vmatpush1.bf16.msra.mxu0 0
        %917 = vmatprep.subr.bf16.mxu0 0
        %918 = vmatpush1.bf16.msra.mxu0 0
        %919 = vmatprep.subr.bf16.mxu0 0
        %920 = vmatpush1.bf16.msra.mxu0 0
        %921 = vmatprep.subr.bf16.mxu0 0
        %922 = vmatpush1.bf16.msra.mxu0 0
        %923 = vmatprep.subr.bf16.mxu0 0
        %924 = vmatpush1.bf16.msra.mxu0 0
        %925 = vmatprep.mubr.bf16.mxu0 0
        %926 = vmatmul.mubr.bf16.gmra.mrb[0].mxu0 %v839
        %v927 = vpop.f32.mrb[0].mxu0
        %v928 = vadd.f32 0.0, %v927
        %v929 = vpop.f32.mrb[0].mxu0
        %v930 = vpop.f32.mrb[0].mxu0
        %v931 = vadd.f32 0.0, %v930
        %v932 = vpop.f32.mrb[0].mxu0
        %933 = vdwg.mxu0
        %v934 = vadd.f32 %v797, %v885
        %v935 = vadd.f32 %v798, %v887
        %v936 = vadd.f32 %v799, %v928
        %v937 = vadd.f32 %v800, %v889
        %v938 = vadd.f32 %v801, %v891
        %v939 = vadd.f32 %v802, %v931
        %v940 = vld [vmem:[%s290] sm:$0x3f]
        %s941 = scalar_lea.vmem %s1, 40
        %v942 = vld [vmem:[%s941] sm:$0xf]
        %v943 = vld [vmem:[%s941 + $0x4] sm:$0xf]
        %v946 = vunpack.c.l.b16 %v942
        %v947 = vunpack.c.l.b16 %v943
        %v948 = vpack.c.b16 %v947, %v946
        %v950 = vcombine.high %v940, %v940
        %v952 = vunpack.c.l.s4 1983009808
        %v953 = vunpack.c.0.s8 %v952
        %v954 = vlaneseq
        %v955 = vshrl.u32 %v954, 7
        %v956 = vsub.s32 %v953, %v955
        %v957 = vrot.slane %v940, %v956
        %v959 = vunpack.c.l.s4 1983009808
        %v960 = vunpack.c.0.s8 %v959
        %v961 = vlaneseq
        %v962 = vshrl.u32 %v961, 7
        %v963 = vsub.s32 %v960, %v962
        %v964 = vrot.slane %v950, %v963
        %v965 = vcombine.high %v957, %v957
        %966 = vrot.lane.b32.xlu0 %v957, 108
        %v967 = vpop.permute.xlu0 %966
        %968 = vrot.lane.b32.xlu0 %v965, 108
        %v969 = vpop.permute.xlu0 %968
        %970 = vrot.lane.b32.xlu0 %v964, 108
        %v971 = vpop.permute.xlu0 %970
        %vm972 = vcmask 883712
        %v973 = vsel %vm972, %v967, %v969
        %v974 = vsel %vm972, %v969, %v971
        %v976 = vsel %vm330, %v948, 0
        %v979 = vsel %vm334, %v973, 0
        %v982 = vsel %vm334, %v974, 0
        %v985 = vsel %vm334, %v971, 0
        %987 = vmatprep.subr.bf16.mxu0 %v982
        %988 = vmatpush1.bf16.msra.mxu0 %v979
        %989 = vmatprep.subr.bf16.mxu0 0
        %990 = vmatpush1.bf16.msra.mxu0 0
        %991 = vmatprep.subr.bf16.mxu0 0
        %992 = vmatpush1.bf16.msra.mxu0 0
        %993 = vmatprep.subr.bf16.mxu0 0
        %994 = vmatpush1.bf16.msra.mxu0 0
        %995 = vmatprep.subr.bf16.mxu0 0
        %996 = vmatpush1.bf16.msra.mxu0 0
        %997 = vmatprep.subr.bf16.mxu0 0
        %998 = vmatpush1.bf16.msra.mxu0 0
        %999 = vmatprep.subr.bf16.mxu0 0
        %1000 = vmatpush1.bf16.msra.mxu0 0
        %1001 = vmatprep.subr.bf16.mxu0 0
        %1002 = vmatpush1.bf16.msra.mxu0 0
        %1003 = vmatprep.subr.bf16.mxu0 0
        %1004 = vmatpush1.bf16.msra.mxu0 0
        %1005 = vmatprep.subr.bf16.mxu0 0
        %1006 = vmatpush1.bf16.msra.mxu0 0
        %1007 = vmatprep.subr.bf16.mxu0 0
        %1008 = vmatpush1.bf16.msra.mxu0 0
        %1009 = vmatprep.subr.bf16.mxu0 0
        %1010 = vmatpush1.bf16.msra.mxu0 0
        %1011 = vmatprep.subr.bf16.mxu0 0
        %1012 = vmatpush1.bf16.msra.mxu0 0
        %1013 = vmatprep.subr.bf16.mxu0 0
        %1014 = vmatpush1.bf16.msra.mxu0 0
        %1015 = vmatprep.subr.bf16.mxu0 0
        %1016 = vmatpush1.bf16.msra.mxu0 0
        %1017 = vmatprep.subr.bf16.mxu0 0
        %1018 = vmatpush1.bf16.msra.mxu0 0
        %1019 = vmatprep.mubr.bf16.mxu0 0
        %1020 = vmatmul.mubr.bf16.gmra.mrb[0].mxu0 %v976
        %v1021 = vpop.f32.mrb[0].mxu0
        %v1022 = vadd.f32 0.0, %v1021
        %v1023 = vpop.f32.mrb[0].mxu0
        %v1024 = vadd.f32 0.0, %v1023
        %v1025 = vpop.f32.mrb[0].mxu0
        %v1026 = vadd.f32 0.0, %v1025
        %v1027 = vpop.f32.mrb[0].mxu0
        %v1028 = vadd.f32 0.0, %v1027
        %1029 = vdwg.mxu0
        %1030 = vmatprep.subr.bf16.mxu0 0
        %1031 = vmatpush1.bf16.msra.mxu0 %v985
        %1032 = vmatprep.subr.bf16.mxu0 0
        %1033 = vmatpush1.bf16.msra.mxu0 0
        %1034 = vmatprep.subr.bf16.mxu0 0
        %1035 = vmatpush1.bf16.msra.mxu0 0
        %1036 = vmatprep.subr.bf16.mxu0 0
        %1037 = vmatpush1.bf16.msra.mxu0 0
        %1038 = vmatprep.subr.bf16.mxu0 0
        %1039 = vmatpush1.bf16.msra.mxu0 0
        %1040 = vmatprep.subr.bf16.mxu0 0
        %1041 = vmatpush1.bf16.msra.mxu0 0
        %1042 = vmatprep.subr.bf16.mxu0 0
        %1043 = vmatpush1.bf16.msra.mxu0 0
        %1044 = vmatprep.subr.bf16.mxu0 0
        %1045 = vmatpush1.bf16.msra.mxu0 0
        %1046 = vmatprep.subr.bf16.mxu0 0
        %1047 = vmatpush1.bf16.msra.mxu0 0
        %1048 = vmatprep.subr.bf16.mxu0 0
        %1049 = vmatpush1.bf16.msra.mxu0 0
        %1050 = vmatprep.subr.bf16.mxu0 0
        %1051 = vmatpush1.bf16.msra.mxu0 0
        %1052 = vmatprep.subr.bf16.mxu0 0
        %1053 = vmatpush1.bf16.msra.mxu0 0
        %1054 = vmatprep.subr.bf16.mxu0 0
        %1055 = vmatpush1.bf16.msra.mxu0 0
        %1056 = vmatprep.subr.bf16.mxu0 0
        %1057 = vmatpush1.bf16.msra.mxu0 0
        %1058 = vmatprep.subr.bf16.mxu0 0
        %1059 = vmatpush1.bf16.msra.mxu0 0
        %1060 = vmatprep.subr.bf16.mxu0 0
        %1061 = vmatpush1.bf16.msra.mxu0 0
        %1062 = vmatprep.mubr.bf16.mxu0 0
        %1063 = vmatmul.mubr.bf16.gmra.mrb[0].mxu0 %v976
        %v1064 = vpop.f32.mrb[0].mxu0
        %v1065 = vadd.f32 0.0, %v1064
        %v1066 = vpop.f32.mrb[0].mxu0
        %v1067 = vpop.f32.mrb[0].mxu0
        %v1068 = vadd.f32 0.0, %v1067
        %v1069 = vpop.f32.mrb[0].mxu0
        %1070 = vdwg.mxu0
        %v1071 = vadd.f32 %v934, %v1022
        %v1072 = vadd.f32 %v935, %v1024
        %v1073 = vadd.f32 %v936, %v1065
        %v1074 = vadd.f32 %v937, %v1026
        %v1075 = vadd.f32 %v938, %v1028
        %v1076 = vadd.f32 %v939, %v1068
        %v1077 = vld [vmem:[%s290] sm:$0x3f]
        %s1078 = scalar_lea.vmem %s1, 48
        %v1079 = vld [vmem:[%s1078] sm:$0xf]
        %v1080 = vld [vmem:[%s1078 + $0x4] sm:$0xf]
        %v1083 = vunpack.c.l.b16 %v1079
        %v1084 = vunpack.c.l.b16 %v1080
        %v1085 = vpack.c.b16 %v1084, %v1083
        %v1087 = vcombine.high %v1077, %v1077
        %v1089 = vunpack.c.l.s4 1983009808
        %v1090 = vunpack.c.0.s8 %v1089
        %v1091 = vlaneseq
        %v1092 = vshrl.u32 %v1091, 7
        %v1093 = vsub.s32 %v1090, %v1092
        %v1094 = vrot.slane %v1077, %v1093
        %v1096 = vunpack.c.l.s4 1983009808
        %v1097 = vunpack.c.0.s8 %v1096
        %v1098 = vlaneseq
        %v1099 = vshrl.u32 %v1098, 7
        %v1100 = vsub.s32 %v1097, %v1099
        %v1101 = vrot.slane %v1087, %v1100
        %v1102 = vcombine.high %v1094, %v1094
        %1103 = vrot.lane.b32.xlu0 %v1094, 92
        %v1104 = vpop.permute.xlu0 %1103
        %1105 = vrot.lane.b32.xlu0 %v1102, 92
        %v1106 = vpop.permute.xlu0 %1105
        %1107 = vrot.lane.b32.xlu0 %v1101, 92
        %v1108 = vpop.permute.xlu0 %1107
        %vm1109 = vcmask 752640
        %v1110 = vsel %vm1109, %v1104, %v1106
        %v1111 = vsel %vm1109, %v1106, %v1108
        %v1113 = vsel %vm330, %v1085, 0
        %v1116 = vsel %vm334, %v1110, 0
        %v1119 = vsel %vm334, %v1111, 0
        %v1122 = vsel %vm334, %v1108, 0
        %1124 = vmatprep.subr.bf16.mxu0 %v1119
        %1125 = vmatpush1.bf16.msra.mxu0 %v1116
        %1126 = vmatprep.subr.bf16.mxu0 0
        %1127 = vmatpush1.bf16.msra.mxu0 0
        %1128 = vmatprep.subr.bf16.mxu0 0
        %1129 = vmatpush1.bf16.msra.mxu0 0
        %1130 = vmatprep.subr.bf16.mxu0 0
        %1131 = vmatpush1.bf16.msra.mxu0 0
        %1132 = vmatprep.subr.bf16.mxu0 0
        %1133 = vmatpush1.bf16.msra.mxu0 0
        %1134 = vmatprep.subr.bf16.mxu0 0
        %1135 = vmatpush1.bf16.msra.mxu0 0
        %1136 = vmatprep.subr.bf16.mxu0 0
        %1137 = vmatpush1.bf16.msra.mxu0 0
        %1138 = vmatprep.subr.bf16.mxu0 0
        %1139 = vmatpush1.bf16.msra.mxu0 0
        %1140 = vmatprep.subr.bf16.mxu0 0
        %1141 = vmatpush1.bf16.msra.mxu0 0
        %1142 = vmatprep.subr.bf16.mxu0 0
        %1143 = vmatpush1.bf16.msra.mxu0 0
        %1144 = vmatprep.subr.bf16.mxu0 0
        %1145 = vmatpush1.bf16.msra.mxu0 0
        %1146 = vmatprep.subr.bf16.mxu0 0
        %1147 = vmatpush1.bf16.msra.mxu0 0
        %1148 = vmatprep.subr.bf16.mxu0 0
        %1149 = vmatpush1.bf16.msra.mxu0 0
        %1150 = vmatprep.subr.bf16.mxu0 0
        %1151 = vmatpush1.bf16.msra.mxu0 0
        %1152 = vmatprep.subr.bf16.mxu0 0
        %1153 = vmatpush1.bf16.msra.mxu0 0
        %1154 = vmatprep.subr.bf16.mxu0 0
        %1155 = vmatpush1.bf16.msra.mxu0 0
        %1156 = vmatprep.mubr.bf16.mxu0 0
        %1157 = vmatmul.mubr.bf16.gmra.mrb[0].mxu0 %v1113
        %v1158 = vpop.f32.mrb[0].mxu0
        %v1159 = vadd.f32 0.0, %v1158
        %v1160 = vpop.f32.mrb[0].mxu0
        %v1161 = vadd.f32 0.0, %v1160
        %v1162 = vpop.f32.mrb[0].mxu0
        %v1163 = vadd.f32 0.0, %v1162
        %v1164 = vpop.f32.mrb[0].mxu0
        %v1165 = vadd.f32 0.0, %v1164
        %1166 = vdwg.mxu0
        %1167 = vmatprep.subr.bf16.mxu0 0
        %1168 = vmatpush1.bf16.msra.mxu0 %v1122
        %1169 = vmatprep.subr.bf16.mxu0 0
        %1170 = vmatpush1.bf16.msra.mxu0 0
        %1171 = vmatprep.subr.bf16.mxu0 0
        %1172 = vmatpush1.bf16.msra.mxu0 0
        %1173 = vmatprep.subr.bf16.mxu0 0
        %1174 = vmatpush1.bf16.msra.mxu0 0
        %1175 = vmatprep.subr.bf16.mxu0 0
        %1176 = vmatpush1.bf16.msra.mxu0 0
        %1177 = vmatprep.subr.bf16.mxu0 0
        %1178 = vmatpush1.bf16.msra.mxu0 0
        %1179 = vmatprep.subr.bf16.mxu0 0
        %1180 = vmatpush1.bf16.msra.mxu0 0
        %1181 = vmatprep.subr.bf16.mxu0 0
        %1182 = vmatpush1.bf16.msra.mxu0 0
        %1183 = vmatprep.subr.bf16.mxu0 0
        %1184 = vmatpush1.bf16.msra.mxu0 0
        %1185 = vmatprep.subr.bf16.mxu0 0
        %1186 = vmatpush1.bf16.msra.mxu0 0
        %1187 = vmatprep.subr.bf16.mxu0 0
        %1188 = vmatpush1.bf16.msra.mxu0 0
        %1189 = vmatprep.subr.bf16.mxu0 0
        %1190 = vmatpush1.bf16.msra.mxu0 0
        %1191 = vmatprep.subr.bf16.mxu0 0
        %1192 = vmatpush1.bf16.msra.mxu0 0
        %1193 = vmatprep.subr.bf16.mxu0 0
        %1194 = vmatpush1.bf16.msra.mxu0 0
        %1195 = vmatprep.subr.bf16.mxu0 0
        %1196 = vmatpush1.bf16.msra.mxu0 0
        %1197 = vmatprep.subr.bf16.mxu0 0
        %1198 = vmatpush1.bf16.msra.mxu0 0
        %1199 = vmatprep.mubr.bf16.mxu0 0
        %1200 = vmatmul.mubr.bf16.gmra.mrb[0].mxu0 %v1113
        %v1201 = vpop.f32.mrb[0].mxu0
        %v1202 = vadd.f32 0.0, %v1201
        %v1203 = vpop.f32.mrb[0].mxu0
        %v1204 = vpop.f32.mrb[0].mxu0
        %v1205 = vadd.f32 0.0, %v1204
        %v1206 = vpop.f32.mrb[0].mxu0
        %1207 = vdwg.mxu0
        %v1208 = vadd.f32 %v1071, %v1159
        %v1209 = vadd.f32 %v1072, %v1161
        %v1210 = vadd.f32 %v1073, %v1202
        %v1211 = vadd.f32 %v1074, %v1163
        %v1212 = vadd.f32 %v1075, %v1165
        %v1213 = vadd.f32 %v1076, %v1205
        %v1214 = vld [vmem:[%s290] sm:$0x3f]
        %s1215 = scalar_lea.vmem %s1, 56
        %v1216 = vld [vmem:[%s1215] sm:$0xf]
        %v1217 = vld [vmem:[%s1215 + $0x4] sm:$0xf]
        %v1220 = vunpack.c.l.b16 %v1216
        %v1221 = vunpack.c.l.b16 %v1217
        %v1222 = vpack.c.b16 %v1221, %v1220
        %v1224 = vcombine.high %v1214, %v1214
        %v1226 = vunpack.c.l.s4 1983009808
        %v1227 = vunpack.c.0.s8 %v1226
        %v1228 = vlaneseq
        %v1229 = vshrl.u32 %v1228, 7
        %v1230 = vsub.s32 %v1227, %v1229
        %v1231 = vrot.slane %v1214, %v1230
        %v1233 = vunpack.c.l.s4 1983009808
        %v1234 = vunpack.c.0.s8 %v1233
        %v1235 = vlaneseq
        %v1236 = vshrl.u32 %v1235, 7
        %v1237 = vsub.s32 %v1234, %v1236
        %v1238 = vrot.slane %v1224, %v1237
        %v1239 = vcombine.high %v1231, %v1231
        %1240 = vrot.lane.b32.xlu0 %v1231, 91
        %v1241 = vpop.permute.xlu0 %1240
        %1242 = vrot.lane.b32.xlu0 %v1239, 91
        %v1243 = vpop.permute.xlu0 %1242
        %1244 = vrot.lane.b32.xlu0 %v1238, 91
        %v1245 = vpop.permute.xlu0 %1244
        %vm1246 = vcmask 744448
        %v1247 = vsel %vm1246, %v1241, %v1243
        %v1248 = vsel %vm1246, %v1243, %v1245
        %v1250 = vsel %vm330, %v1222, 0
        %v1253 = vsel %vm334, %v1247, 0
        %v1256 = vsel %vm334, %v1248, 0
        %v1259 = vsel %vm334, %v1245, 0
        %1261 = vmatprep.subr.bf16.mxu0 %v1256
        %1262 = vmatpush1.bf16.msra.mxu0 %v1253
        %1263 = vmatprep.subr.bf16.mxu0 0
        %1264 = vmatpush1.bf16.msra.mxu0 0
        %1265 = vmatprep.subr.bf16.mxu0 0
        %1266 = vmatpush1.bf16.msra.mxu0 0
        %1267 = vmatprep.subr.bf16.mxu0 0
        %1268 = vmatpush1.bf16.msra.mxu0 0
        %1269 = vmatprep.subr.bf16.mxu0 0
        %1270 = vmatpush1.bf16.msra.mxu0 0
        %1271 = vmatprep.subr.bf16.mxu0 0
        %1272 = vmatpush1.bf16.msra.mxu0 0
        %1273 = vmatprep.subr.bf16.mxu0 0
        %1274 = vmatpush1.bf16.msra.mxu0 0
        %1275 = vmatprep.subr.bf16.mxu0 0
        %1276 = vmatpush1.bf16.msra.mxu0 0
        %1277 = vmatprep.subr.bf16.mxu0 0
        %1278 = vmatpush1.bf16.msra.mxu0 0
        %1279 = vmatprep.subr.bf16.mxu0 0
        %1280 = vmatpush1.bf16.msra.mxu0 0
        %1281 = vmatprep.subr.bf16.mxu0 0
        %1282 = vmatpush1.bf16.msra.mxu0 0
        %1283 = vmatprep.subr.bf16.mxu0 0
        %1284 = vmatpush1.bf16.msra.mxu0 0
        %1285 = vmatprep.subr.bf16.mxu0 0
        %1286 = vmatpush1.bf16.msra.mxu0 0
        %1287 = vmatprep.subr.bf16.mxu0 0
        %1288 = vmatpush1.bf16.msra.mxu0 0
        %1289 = vmatprep.subr.bf16.mxu0 0
        %1290 = vmatpush1.bf16.msra.mxu0 0
        %1291 = vmatprep.subr.bf16.mxu0 0
        %1292 = vmatpush1.bf16.msra.mxu0 0
        %1293 = vmatprep.mubr.bf16.mxu0 0
        %1294 = vmatmul.mubr.bf16.gmra.mrb[0].mxu0 %v1250
        %v1295 = vpop.f32.mrb[0].mxu0
        %v1296 = vadd.f32 0.0, %v1295
        %v1297 = vpop.f32.mrb[0].mxu0
        %v1298 = vadd.f32 0.0, %v1297
        %v1299 = vpop.f32.mrb[0].mxu0
        %v1300 = vadd.f32 0.0, %v1299
        %v1301 = vpop.f32.mrb[0].mxu0
        %v1302 = vadd.f32 0.0, %v1301
        %1303 = vdwg.mxu0
        %1304 = vmatprep.subr.bf16.mxu0 0
        %1305 = vmatpush1.bf16.msra.mxu0 %v1259
        %1306 = vmatprep.subr.bf16.mxu0 0
        %1307 = vmatpush1.bf16.msra.mxu0 0
        %1308 = vmatprep.subr.bf16.mxu0 0
        %1309 = vmatpush1.bf16.msra.mxu0 0
        %1310 = vmatprep.subr.bf16.mxu0 0
        %1311 = vmatpush1.bf16.msra.mxu0 0
        %1312 = vmatprep.subr.bf16.mxu0 0
        %1313 = vmatpush1.bf16.msra.mxu0 0
        %1314 = vmatprep.subr.bf16.mxu0 0
        %1315 = vmatpush1.bf16.msra.mxu0 0
        %1316 = vmatprep.subr.bf16.mxu0 0
        %1317 = vmatpush1.bf16.msra.mxu0 0
        %1318 = vmatprep.subr.bf16.mxu0 0
        %1319 = vmatpush1.bf16.msra.mxu0 0
        %1320 = vmatprep.subr.bf16.mxu0 0
        %1321 = vmatpush1.bf16.msra.mxu0 0
        %1322 = vmatprep.subr.bf16.mxu0 0
        %1323 = vmatpush1.bf16.msra.mxu0 0
        %1324 = vmatprep.subr.bf16.mxu0 0
        %1325 = vmatpush1.bf16.msra.mxu0 0
        %1326 = vmatprep.subr.bf16.mxu0 0
        %1327 = vmatpush1.bf16.msra.mxu0 0
        %1328 = vmatprep.subr.bf16.mxu0 0
        %1329 = vmatpush1.bf16.msra.mxu0 0
        %1330 = vmatprep.subr.bf16.mxu0 0
        %1331 = vmatpush1.bf16.msra.mxu0 0
        %1332 = vmatprep.subr.bf16.mxu0 0
        %1333 = vmatpush1.bf16.msra.mxu0 0
        %1334 = vmatprep.subr.bf16.mxu0 0
        %1335 = vmatpush1.bf16.msra.mxu0 0
        %1336 = vmatprep.mubr.bf16.mxu0 0
        %1337 = vmatmul.mubr.bf16.gmra.mrb[0].mxu0 %v1250
        %v1338 = vpop.f32.mrb[0].mxu0
        %v1339 = vadd.f32 0.0, %v1338
        %v1340 = vpop.f32.mrb[0].mxu0
        %v1341 = vpop.f32.mrb[0].mxu0
        %v1342 = vadd.f32 0.0, %v1341
        %v1343 = vpop.f32.mrb[0].mxu0
        %1344 = vdwg.mxu0
        %v1345 = vadd.f32 %v1208, %v1296
        %v1346 = vadd.f32 %v1209, %v1298
        %v1347 = vadd.f32 %v1210, %v1339
        %v1348 = vadd.f32 %v1211, %v1300
        %v1349 = vadd.f32 %v1212, %v1302
        %v1350 = vadd.f32 %v1213, %v1342
        %v1351 = vld [vmem:[%s290] sm:$0x3f]
        %s1352 = scalar_lea.vmem %s1, 64
        %v1353 = vld [vmem:[%s1352] sm:$0xf]
        %v1354 = vld [vmem:[%s1352 + $0x4] sm:$0xf]
        %v1357 = vunpack.c.l.b16 %v1353
        %v1358 = vunpack.c.l.b16 %v1354
        %v1359 = vpack.c.b16 %v1358, %v1357
        %v1361 = vcombine.high %v1351, %v1351
        %v1363 = vunpack.c.l.s4 1983009808
        %v1364 = vunpack.c.0.s8 %v1363
        %v1365 = vlaneseq
        %v1366 = vshrl.u32 %v1365, 7
        %v1367 = vsub.s32 %v1364, %v1366
        %v1368 = vrot.slane %v1351, %v1367
        %v1370 = vunpack.c.l.s4 1983009808
        %v1371 = vunpack.c.0.s8 %v1370
        %v1372 = vlaneseq
        %v1373 = vshrl.u32 %v1372, 7
        %v1374 = vsub.s32 %v1371, %v1373
        %v1375 = vrot.slane %v1361, %v1374
        %v1376 = vcombine.high %v1368, %v1368
        %1377 = vrot.lane.b32.xlu0 %v1368, 90
        %v1378 = vpop.permute.xlu0 %1377
        %1379 = vrot.lane.b32.xlu0 %v1376, 90
        %v1380 = vpop.permute.xlu0 %1379
        %1381 = vrot.lane.b32.xlu0 %v1375, 90
        %v1382 = vpop.permute.xlu0 %1381
        %vm1383 = vcmask 736256
        %v1384 = vsel %vm1383, %v1378, %v1380
        %v1385 = vsel %vm1383, %v1380, %v1382
        %v1387 = vsel %vm330, %v1359, 0
        %v1390 = vsel %vm334, %v1384, 0
        %v1393 = vsel %vm334, %v1385, 0
        %v1396 = vsel %vm334, %v1382, 0
        %1398 = vmatprep.subr.bf16.mxu0 %v1393
        %1399 = vmatpush1.bf16.msra.mxu0 %v1390
        %1400 = vmatprep.subr.bf16.mxu0 0
        %1401 = vmatpush1.bf16.msra.mxu0 0
        %1402 = vmatprep.subr.bf16.mxu0 0
        %1403 = vmatpush1.bf16.msra.mxu0 0
        %1404 = vmatprep.subr.bf16.mxu0 0
        %1405 = vmatpush1.bf16.msra.mxu0 0
        %1406 = vmatprep.subr.bf16.mxu0 0
        %1407 = vmatpush1.bf16.msra.mxu0 0
        %1408 = vmatprep.subr.bf16.mxu0 0
        %1409 = vmatpush1.bf16.msra.mxu0 0
        %1410 = vmatprep.subr.bf16.mxu0 0
        %1411 = vmatpush1.bf16.msra.mxu0 0
        %1412 = vmatprep.subr.bf16.mxu0 0
        %1413 = vmatpush1.bf16.msra.mxu0 0
        %1414 = vmatprep.subr.bf16.mxu0 0
        %1415 = vmatpush1.bf16.msra.mxu0 0
        %1416 = vmatprep.subr.bf16.mxu0 0
        %1417 = vmatpush1.bf16.msra.mxu0 0
        %1418 = vmatprep.subr.bf16.mxu0 0
        %1419 = vmatpush1.bf16.msra.mxu0 0
        %1420 = vmatprep.subr.bf16.mxu0 0
        %1421 = vmatpush1.bf16.msra.mxu0 0
        %1422 = vmatprep.subr.bf16.mxu0 0
        %1423 = vmatpush1.bf16.msra.mxu0 0
        %1424 = vmatprep.subr.bf16.mxu0 0
        %1425 = vmatpush1.bf16.msra.mxu0 0
        %1426 = vmatprep.subr.bf16.mxu0 0
        %1427 = vmatpush1.bf16.msra.mxu0 0
        %1428 = vmatprep.subr.bf16.mxu0 0
        %1429 = vmatpush1.bf16.msra.mxu0 0
        %1430 = vmatprep.mubr.bf16.mxu0 0
        %1431 = vmatmul.mubr.bf16.gmra.mrb[0].mxu0 %v1387
        %v1432 = vpop.f32.mrb[0].mxu0
        %v1433 = vadd.f32 0.0, %v1432
        %v1434 = vpop.f32.mrb[0].mxu0
        %v1435 = vadd.f32 0.0, %v1434
        %v1436 = vpop.f32.mrb[0].mxu0
        %v1437 = vadd.f32 0.0, %v1436
        %v1438 = vpop.f32.mrb[0].mxu0
        %v1439 = vadd.f32 0.0, %v1438
        %1440 = vdwg.mxu0
        %1441 = vmatprep.subr.bf16.mxu0 0
        %1442 = vmatpush1.bf16.msra.mxu0 %v1396
        %1443 = vmatprep.subr.bf16.mxu0 0
        %1444 = vmatpush1.bf16.msra.mxu0 0
        %1445 = vmatprep.subr.bf16.mxu0 0
        %1446 = vmatpush1.bf16.msra.mxu0 0
        %1447 = vmatprep.subr.bf16.mxu0 0
        %1448 = vmatpush1.bf16.msra.mxu0 0
        %1449 = vmatprep.subr.bf16.mxu0 0
        %1450 = vmatpush1.bf16.msra.mxu0 0
        %1451 = vmatprep.subr.bf16.mxu0 0
        %1452 = vmatpush1.bf16.msra.mxu0 0
        %1453 = vmatprep.subr.bf16.mxu0 0
        %1454 = vmatpush1.bf16.msra.mxu0 0
        %1455 = vmatprep.subr.bf16.mxu0 0
        %1456 = vmatpush1.bf16.msra.mxu0 0
        %1457 = vmatprep.subr.bf16.mxu0 0
        %1458 = vmatpush1.bf16.msra.mxu0 0
        %1459 = vmatprep.subr.bf16.mxu0 0
        %1460 = vmatpush1.bf16.msra.mxu0 0
        %1461 = vmatprep.subr.bf16.mxu0 0
        %1462 = vmatpush1.bf16.msra.mxu0 0
        %1463 = vmatprep.subr.bf16.mxu0 0
        %1464 = vmatpush1.bf16.msra.mxu0 0
        %1465 = vmatprep.subr.bf16.mxu0 0
        %1466 = vmatpush1.bf16.msra.mxu0 0
        %1467 = vmatprep.subr.bf16.mxu0 0
        %1468 = vmatpush1.bf16.msra.mxu0 0
        %1469 = vmatprep.subr.bf16.mxu0 0
        %1470 = vmatpush1.bf16.msra.mxu0 0
        %1471 = vmatprep.subr.bf16.mxu0 0
        %1472 = vmatpush1.bf16.msra.mxu0 0
        %1473 = vmatprep.mubr.bf16.mxu0 0
        %1474 = vmatmul.mubr.bf16.gmra.mrb[0].mxu0 %v1387
        %v1475 = vpop.f32.mrb[0].mxu0
        %v1476 = vadd.f32 0.0, %v1475
        %v1477 = vpop.f32.mrb[0].mxu0
        %v1478 = vpop.f32.mrb[0].mxu0
        %v1479 = vadd.f32 0.0, %v1478
        %v1480 = vpop.f32.mrb[0].mxu0
        %1481 = vdwg.mxu0
        %v1482 = vadd.f32 %v1345, %v1433
        %v1483 = vadd.f32 %v1346, %v1435
        %v1484 = vadd.f32 %v1347, %v1476
        %v1485 = vadd.f32 %v1348, %v1437
        %v1486 = vadd.f32 %v1349, %v1439
        %v1487 = vadd.f32 %v1350, %v1479
        %v1488 = vld [vmem:[%s2] sm:$0xff]
        %v1489 = vld [vmem:[%s2 + $0x8] sm:$0xff]
        %1491 = vset.pattern.permute.xlu0 0
        %1492 = vperm.xlu0 %1491, %v1488
        %v1493 = vpop.permute.xlu0 %1492
        %1496 = vset.pattern.permute.xlu0 0
        %1497 = vperm.xlu0 %1496, %v1489
        %v1498 = vpop.permute.xlu0 %1497
        %v1500 = vadd.f32 %v1482, %v1493
        %v1501 = vadd.f32 %v1483, %v1493
        %v1502 = vadd.f32 %v1484, %v1493
        %v1503 = vadd.f32 %v1485, %v1498
        %v1504 = vadd.f32 %v1486, %v1498
        %v1505 = vadd.f32 %v1487, %v1498
        %v1506 = vmax.f32 %v1500, 0.0
        %v1507 = vmax.f32 %v1501, 0.0
        %v1508 = vmax.f32 %v1502, 0.0
        %v1509 = vmax.f32 %v1503, 0.0
        %v1510 = vmax.f32 %v1504, 0.0
        %v1511 = vmax.f32 %v1505, 0.0
        %v1512 = vpack.c.bf16 %v1509, %v1506
        %v1513 = vpack.c.bf16 %v1510, %v1507
        %v1514 = vpack.c.bf16 %v1511, %v1508
        %v1515 = vld [vmem:[%s3] sm:$0xf]
        %v1516 = vld [vmem:[%s3 + $0x4] sm:$0xf]
        %v1517 = vld [vmem:[%s3 + $0x8] sm:$0xf]
        %v1518 = vld [vmem:[%s3 + $0xc] sm:$0xf]
        %v1519 = vld [vmem:[%s4] sm:$0xff]
        %v1520 = vld [vmem:[%s4 + $0x8] sm:$0xff]
        %v1521 = vld [vmem:[%s4 + $0x10] sm:$0xff]
        %v1522 = vld [vmem:[%s4 + $0x18] sm:$0xff]
        %1524 = vset.pattern.permute.xlu0 0
        %1525 = vperm.xlu0 %1524, %v1519
        %v1526 = vpop.permute.xlu0 %1525
        %1529 = vset.pattern.permute.xlu0 0
        %1530 = vperm.xlu0 %1529, %v1520
        %v1531 = vpop.permute.xlu0 %1530
        %1534 = vset.pattern.permute.xlu0 0
        %1535 = vperm.xlu0 %1534, %v1521
        %v1536 = vpop.permute.xlu0 %1535
        %1539 = vset.pattern.permute.xlu0 0
        %1540 = vperm.xlu0 %1539, %v1522
        %v1541 = vpop.permute.xlu0 %1540
        %v1547 = vunpack.c.l.b16 %v1515
        %v1548 = vunpack.c.l.b16 %v1516
        %v1549 = vunpack.c.l.b16 %v1517
        %v1550 = vunpack.c.l.b16 %v1518
        %v1551 = vpack.c.b16 %v1548, %v1547
        %v1552 = vpack.c.b16 %v1550, %v1549
        %vm1553 = vcmask 130048
        %v1555 = vsel %vm1553, %v1551, 0
        %v1558 = vsel %vm1553, %v1552, 0
        %1560 = vmatprep.subr.bf16.mxu0 %v1513
        %1561 = vmatpush1.bf16.msra.mxu0 %v1512
        %1562 = vmatprep.subr.bf16.mxu0 0
        %1563 = vmatpush1.bf16.msra.mxu0 0
        %1564 = vmatprep.subr.bf16.mxu0 0
        %1565 = vmatpush1.bf16.msra.mxu0 0
        %1566 = vmatprep.subr.bf16.mxu0 0
        %1567 = vmatpush1.bf16.msra.mxu0 0
        %1568 = vmatprep.subr.bf16.mxu0 0
        %1569 = vmatpush1.bf16.msra.mxu0 0
        %1570 = vmatprep.subr.bf16.mxu0 0
        %1571 = vmatpush1.bf16.msra.mxu0 0
        %1572 = vmatprep.subr.bf16.mxu0 0
        %1573 = vmatpush1.bf16.msra.mxu0 0
        %1574 = vmatprep.subr.bf16.mxu0 0
        %1575 = vmatpush1.bf16.msra.mxu0 0
        %1576 = vmatprep.subr.bf16.mxu0 0
        %1577 = vmatpush1.bf16.msra.mxu0 0
        %1578 = vmatprep.subr.bf16.mxu0 0
        %1579 = vmatpush1.bf16.msra.mxu0 0
        %1580 = vmatprep.subr.bf16.mxu0 0
        %1581 = vmatpush1.bf16.msra.mxu0 0
        %1582 = vmatprep.subr.bf16.mxu0 0
        %1583 = vmatpush1.bf16.msra.mxu0 0
        %1584 = vmatprep.subr.bf16.mxu0 0
        %1585 = vmatpush1.bf16.msra.mxu0 0
        %1586 = vmatprep.subr.bf16.mxu0 0
        %1587 = vmatpush1.bf16.msra.mxu0 0
        %1588 = vmatprep.subr.bf16.mxu0 0
        %1589 = vmatpush1.bf16.msra.mxu0 0
        %1590 = vmatprep.subr.bf16.mxu0 0
        %1591 = vmatpush1.bf16.msra.mxu0 0
        %1592 = vmatprep.mubr.bf16.mxu0 0
        %1593 = vmatmul.mubr.bf16.gmra.mrb[0].mxu0 %v1555
        %v1594 = vpop.f32.mrb[0].mxu0
        %v1595 = vadd.f32 %v1526, %v1594
        %v1596 = vpop.f32.mrb[0].mxu0
        %v1597 = vadd.f32 %v1526, %v1596
        %v1598 = vpop.f32.mrb[0].mxu0
        %v1599 = vadd.f32 %v1531, %v1598
        %v1600 = vpop.f32.mrb[0].mxu0
        %v1601 = vadd.f32 %v1531, %v1600
        %1602 = vmatprep.mubr.bf16.mxu0 0
        %1603 = vmatmul.mubr.bf16.gmra.mrb[0].mxu0 %v1558
        %v1604 = vpop.f32.mrb[0].mxu0
        %v1605 = vadd.f32 %v1536, %v1604
        %v1606 = vpop.f32.mrb[0].mxu0
        %v1607 = vadd.f32 %v1536, %v1606
        %v1608 = vpop.f32.mrb[0].mxu0
        %v1609 = vadd.f32 %v1541, %v1608
        %v1610 = vpop.f32.mrb[0].mxu0
        %v1611 = vadd.f32 %v1541, %v1610
        %1612 = vdwg.mxu0
        %1613 = vmatprep.subr.bf16.mxu0 0
        %1614 = vmatpush1.bf16.msra.mxu0 %v1514
        %1615 = vmatprep.subr.bf16.mxu0 0
        %1616 = vmatpush1.bf16.msra.mxu0 0
        %1617 = vmatprep.subr.bf16.mxu0 0
        %1618 = vmatpush1.bf16.msra.mxu0 0
        %1619 = vmatprep.subr.bf16.mxu0 0
        %1620 = vmatpush1.bf16.msra.mxu0 0
        %1621 = vmatprep.subr.bf16.mxu0 0
        %1622 = vmatpush1.bf16.msra.mxu0 0
        %1623 = vmatprep.subr.bf16.mxu0 0
        %1624 = vmatpush1.bf16.msra.mxu0 0
        %1625 = vmatprep.subr.bf16.mxu0 0
        %1626 = vmatpush1.bf16.msra.mxu0 0
        %1627 = vmatprep.subr.bf16.mxu0 0
        %1628 = vmatpush1.bf16.msra.mxu0 0
        %1629 = vmatprep.subr.bf16.mxu0 0
        %1630 = vmatpush1.bf16.msra.mxu0 0
        %1631 = vmatprep.subr.bf16.mxu0 0
        %1632 = vmatpush1.bf16.msra.mxu0 0
        %1633 = vmatprep.subr.bf16.mxu0 0
        %1634 = vmatpush1.bf16.msra.mxu0 0
        %1635 = vmatprep.subr.bf16.mxu0 0
        %1636 = vmatpush1.bf16.msra.mxu0 0
        %1637 = vmatprep.subr.bf16.mxu0 0
        %1638 = vmatpush1.bf16.msra.mxu0 0
        %1639 = vmatprep.subr.bf16.mxu0 0
        %1640 = vmatpush1.bf16.msra.mxu0 0
        %1641 = vmatprep.subr.bf16.mxu0 0
        %1642 = vmatpush1.bf16.msra.mxu0 0
        %1643 = vmatprep.subr.bf16.mxu0 0
        %1644 = vmatpush1.bf16.msra.mxu0 0
        %1645 = vmatprep.mubr.bf16.mxu0 0
        %1646 = vmatmul.mubr.bf16.gmra.mrb[0].mxu0 %v1555
        %v1647 = vpop.f32.mrb[0].mxu0
        %v1648 = vadd.f32 %v1526, %v1647
        %v1649 = vpop.f32.mrb[0].mxu0
        %v1650 = vpop.f32.mrb[0].mxu0
        %v1651 = vadd.f32 %v1531, %v1650
        %v1652 = vpop.f32.mrb[0].mxu0
        %1653 = vmatprep.mubr.bf16.mxu0 0
        %1654 = vmatmul.mubr.bf16.gmra.mrb[0].mxu0 %v1558
        %v1655 = vpop.f32.mrb[0].mxu0
        %v1656 = vadd.f32 %v1536, %v1655
        %v1657 = vpop.f32.mrb[0].mxu0
        %v1658 = vpop.f32.mrb[0].mxu0
        %v1659 = vadd.f32 %v1541, %v1658
        %v1660 = vpop.f32.mrb[0].mxu0
        %1661 = vdwg.mxu0
        %v1662 = vmax.f32 %v1595, 0.0
        %v1663 = vmax.f32 %v1597, 0.0
        %v1664 = vmax.f32 %v1648, 0.0
        %v1665 = vmax.f32 %v1599, 0.0
        %v1666 = vmax.f32 %v1601, 0.0
        %v1667 = vmax.f32 %v1651, 0.0
        %v1668 = vmax.f32 %v1605, 0.0
        %v1669 = vmax.f32 %v1607, 0.0
        %v1670 = vmax.f32 %v1656, 0.0
        %v1671 = vmax.f32 %v1609, 0.0
        %v1672 = vmax.f32 %v1611, 0.0
        %v1673 = vmax.f32 %v1659, 0.0
        %v1674 = vpack.c.bf16 %v1665, %v1662
        %v1675 = vpack.c.bf16 %v1666, %v1663
        %v1676 = vpack.c.bf16 %v1667, %v1664
        %v1677 = vpack.c.bf16 %v1671, %v1668
        %v1678 = vpack.c.bf16 %v1672, %v1669
        %v1679 = vpack.c.bf16 %v1673, %v1670
        %v1680 = vld [vmem:[%s5] sm:$0xf]
        %v1681 = vld [vmem:[%s6] sm:$0xff]
        %1683 = vset.pattern.permute.xlu0 0
        %1684 = vperm.xlu0 %1683, %v1681
        %v1685 = vpop.permute.xlu0 %1684
        %vm1687 = vcmask 261120
        %v1689 = vsel %vm1687, %v1680, 0
        %1691 = vmatprep.subr.bf16.mxu0 %v1675
        %1692 = vmatpush1.bf16.msra.mxu0 %v1674
        %1693 = vmatprep.subr.bf16.mxu0 %v1678
        %1694 = vmatpush1.bf16.msra.mxu0 %v1677
        %1695 = vmatprep.subr.bf16.mxu0 0
        %1696 = vmatpush1.bf16.msra.mxu0 0
        %1697 = vmatprep.subr.bf16.mxu0 0
        %1698 = vmatpush1.bf16.msra.mxu0 0
        %1699 = vmatprep.subr.bf16.mxu0 0
        %1700 = vmatpush1.bf16.msra.mxu0 0
        %1701 = vmatprep.subr.bf16.mxu0 0
        %1702 = vmatpush1.bf16.msra.mxu0 0
        %1703 = vmatprep.subr.bf16.mxu0 0
        %1704 = vmatpush1.bf16.msra.mxu0 0
        %1705 = vmatprep.subr.bf16.mxu0 0
        %1706 = vmatpush1.bf16.msra.mxu0 0
        %1707 = vmatprep.subr.bf16.mxu0 0
        %1708 = vmatpush1.bf16.msra.mxu0 0
        %1709 = vmatprep.subr.bf16.mxu0 0
        %1710 = vmatpush1.bf16.msra.mxu0 0
        %1711 = vmatprep.subr.bf16.mxu0 0
        %1712 = vmatpush1.bf16.msra.mxu0 0
        %1713 = vmatprep.subr.bf16.mxu0 0
        %1714 = vmatpush1.bf16.msra.mxu0 0
        %1715 = vmatprep.subr.bf16.mxu0 0
        %1716 = vmatpush1.bf16.msra.mxu0 0
        %1717 = vmatprep.subr.bf16.mxu0 0
        %1718 = vmatpush1.bf16.msra.mxu0 0
        %1719 = vmatprep.subr.bf16.mxu0 0
        %1720 = vmatpush1.bf16.msra.mxu0 0
        %1721 = vmatprep.subr.bf16.mxu0 0
        %1722 = vmatpush1.bf16.msra.mxu0 0
        %1723 = vmatprep.mubr.bf16.mxu0 0
        %1724 = vmatmul.mubr.bf16.gmra.mrb[0].mxu0 %v1689
        %v1725 = vpop.f32.mrb[0].mxu0
        %v1726 = vadd.f32 %v1685, %v1725
        %v1727 = vpop.f32.mrb[0].mxu0
        %v1728 = vadd.f32 %v1685, %v1727
        %v1729 = vpop.f32.mrb[0].mxu0
        %v1730 = vpop.f32.mrb[0].mxu0
        %1731 = vdwg.mxu0
        %1732 = vmatprep.subr.bf16.mxu0 0
        %1733 = vmatpush1.bf16.msra.mxu0 %v1676
        %1734 = vmatprep.subr.bf16.mxu0 0
        %1735 = vmatpush1.bf16.msra.mxu0 %v1679
        %1736 = vmatprep.subr.bf16.mxu0 0
        %1737 = vmatpush1.bf16.msra.mxu0 0
        %1738 = vmatprep.subr.bf16.mxu0 0
        %1739 = vmatpush1.bf16.msra.mxu0 0
        %1740 = vmatprep.subr.bf16.mxu0 0
        %1741 = vmatpush1.bf16.msra.mxu0 0
        %1742 = vmatprep.subr.bf16.mxu0 0
        %1743 = vmatpush1.bf16.msra.mxu0 0
        %1744 = vmatprep.subr.bf16.mxu0 0
        %1745 = vmatpush1.bf16.msra.mxu0 0
        %1746 = vmatprep.subr.bf16.mxu0 0
        %1747 = vmatpush1.bf16.msra.mxu0 0
        %1748 = vmatprep.subr.bf16.mxu0 0
        %1749 = vmatpush1.bf16.msra.mxu0 0
        %1750 = vmatprep.subr.bf16.mxu0 0
        %1751 = vmatpush1.bf16.msra.mxu0 0
        %1752 = vmatprep.subr.bf16.mxu0 0
        %1753 = vmatpush1.bf16.msra.mxu0 0
        %1754 = vmatprep.subr.bf16.mxu0 0
        %1755 = vmatpush1.bf16.msra.mxu0 0
        %1756 = vmatprep.subr.bf16.mxu0 0
        %1757 = vmatpush1.bf16.msra.mxu0 0
        %1758 = vmatprep.subr.bf16.mxu0 0
        %1759 = vmatpush1.bf16.msra.mxu0 0
        %1760 = vmatprep.subr.bf16.mxu0 0
        %1761 = vmatpush1.bf16.msra.mxu0 0
        %1762 = vmatprep.subr.bf16.mxu0 0
        %1763 = vmatpush1.bf16.msra.mxu0 0
        %1764 = vmatprep.mubr.bf16.mxu0 0
        %1765 = vmatmul.mubr.bf16.gmra.mrb[0].mxu0 %v1689
        %v1766 = vpop.f32.mrb[0].mxu0
        %v1767 = vadd.f32 %v1685, %v1766
        %v1768 = vpop.f32.mrb[0].mxu0
        %v1769 = vpop.f32.mrb[0].mxu0
        %v1770 = vpop.f32.mrb[0].mxu0
        %1771 = vdwg.mxu0
        %1772 = vst [vmem:[%s285] sm:$0xff] %v1726
        %1773 = vst [vmem:[%s285 + $0x8] sm:$0xff] %v1728
        %1774 = vst.msk [vmem:[%s285 + $0x10] sm:$0xff] %vm1687, %v1767
        %s1775 = sand.u32 %s195, 1
        %s1776 = scalar_lea.sflag [#allocation3], %s1775
        %s1777 = sand.u32 %s195, 1
        %s1778 = smul.addr %s1777, 24
        %s1779 = scalar_lea.vmem [#allocation2], %s1778
        // Predicated region
        $region49: #{tpu_custom_call.1} parent=47 // pred_check
          %p1780 = pneg %p205
        $region50: #{tpu_custom_call.1} parent=47 // pred_check_branch
          %1782 = sbr.rel (%p1780) target = $region52
        $region51: #{tpu_custom_call.1} parent=47 // pred_region
          %s1783 = smul.u32 3, %s26
          %s1785 = ssub.s32 384, 384
          %1786 = vsyncadd %s1776, %s1785
          %s1787 = smul.addr %s25, 3
          %s1788 = sadd.s32 %s1783, %s1787
          %s1789 = smul.addr %s1788, 128
          %s1790 = scalar_lea.hbm %s7, %s1789
          %s1792 = sshll.u32 %s1779, 4
          %s1793 = int_to_ptr.vmem [resolvable:$true] %s1792
          %1795 = dma.vmem_to_hbm [thread:$0]  %s1793, 384, %s1790, %s1776
        $region52: #{tpu_custom_call.1} parent=47 // pred_fallthru
          _
      $region48: #{tpu_custom_call.1} parent=5 // pred_fallthru
        _
      %p1796 = scmp.le.s32.totalorder 2, %s16
      // Predicated region
      $region53: #{tpu_custom_call.1} parent=5 // pred_check
        %p1797 = pneg %p1796
      $region54: #{tpu_custom_call.1} parent=5 // pred_check_branch
        %1799 = sbr.rel (%p1797) target = $region56
      $region55: #{tpu_custom_call.1} parent=5 // pred_region
        %s1800 = ssub.s32 %s16, 2
        // Predicated region
        $region57: #{tpu_custom_call.1} parent=55 // pred_check
          %p1801 = pneg %p211
        $region58: #{tpu_custom_call.1} parent=55 // pred_check_branch
          %1803 = sbr.rel (%p1801) target = $region60
        $region59: #{tpu_custom_call.1} parent=55 // pred_region
          %s1804 = sand.u32 %s196, 1
          %s1805 = scalar_lea.sflag [#allocation3], %s1804
          %s1806 = sand.u32 %s196, 1
          %s1807 = smul.addr %s1806, 24
          %s1808 = scalar_lea.vmem [#allocation2], %s1807
          %1809 = dma.done %s1805, 384
        $region60: #{tpu_custom_call.1} parent=55 // pred_fallthru
          _
      $region56: #{tpu_custom_call.1} parent=5 // pred_fallthru
        _
    $region6: #{tpu_custom_call.1} parent=1 // loop_footer
      %s20 = sadd.s32 1, %s16
    $region7: #{tpu_custom_call.1} parent=1 // loop_footer_branch
      %15 = sbr.rel target = $region3
    $region8: #{tpu_custom_call.1} parent=1 // loop_exit
      _
    %1810 = vsyncpa [#allocation3], 1
    %s1811 = scalar_lea.sflag [#allocation3], 1
    %1812 = vsyncpa %s1811, 1

</llo_original>
